<compile_context>
chip_gen: v7x
topology: tpu7x:2x2x1
jax: 0.10.0
libtpu: 0.0.40
codegen_flags: <defaults>
</compile_context>

<pallas_src>
import numpy as np
import jax
import jax.numpy as jnp
from jax.experimental import pallas as pl
from jax.experimental.pallas import tpu as pltpu


# --------------------------------------------------------------------------
# Kernel
# --------------------------------------------------------------------------
def fno_kernel(xT_ref, wp0_ref, liftc_ref, fT_ref, cT_ref,
               q_ref, wk_ref, bw_ref, wq_ref, bq_ref, out_ref):
    """Whole FNO forward on one TensorCore.

    Layout: space n on sublanes (N rows), batch*channel (b*C + c) on lanes.
    """
    N, B = xT_ref.shape                    # (128, 2)
    L, M, twoC, _ = q_ref.shape            # (L, modes, 2C, 2C)
    C = twoC // 2

    fT = fT_ref[...]                       # (2M, N)  bf16, rows = [cos ; -sin]
    cT = cT_ref[...]                       # (N, 2M)  bf16, cols = [Cr | Ci]

    # lifting p: v[n, b*C+c] = Wp[c,0]*x[b,n] + (Wp[c,1]*grid[n] + bp[c])
    v = jnp.concatenate(
        [xT_ref[:, b:b + 1] * wp0_ref[...] + liftc_ref[:, b * C:(b + 1) * C]
         for b in range(B)], axis=1)                              # (N, B*C) f32

    for l in range(L):
        vb = v.astype(jnp.bfloat16)

        # truncated rfft along space: one (2M, N) x (N, B*C) MXU matmul;
        # rows [0:M] = Re of the first M modes, rows [M:2M] = Im.
        z = jnp.dot(fT, vb, preferred_element_type=jnp.float32)   # (2M, B*C)
        re, im = z[:M, :], z[M:, :]

        # per-mode operands (M, B, 2C), lane order = [Re(i=0..C-1) | Im(i)]
        lhs = jnp.concatenate(
            [jnp.concatenate([re[:, b * C:(b + 1) * C],
                              im[:, b * C:(b + 1) * C]], axis=1)[:, None, :]
             for b in range(B)], axis=1).astype(jnp.bfloat16)     # (M, B, 2C)

        # complex channel mix: block-diagonal over modes -> batched matmul
        # (M, B, 2C) x (M, 2C, 2C), bf16 operands, f32 accumulation.
        o = jnp.einsum('mbc,mcd->mbd', lhs, q_ref[l],
                       preferred_element_type=jnp.float32)        # (M, B, 2C)

        # regroup to (2M, B*C): rows = part*M + k, lanes = b*C + o
        o2 = jnp.concatenate(
            [jnp.concatenate([o[:, b, :C], o[:, b, C:]], axis=0)
             for b in range(B)], axis=1)                          # (2M, B*C)

        # irfft synthesis of the truncated spectrum: (N, 2M) x (2M, B*C)
        x1 = jnp.dot(cT, o2.astype(jnp.bfloat16),
                     preferred_element_type=jnp.float32)          # (N, B*C)

        # pointwise linear w: kron(I_B, Ww^T) acting on the lane axis
        x2 = jnp.dot(vb, wk_ref[l],
                     preferred_element_type=jnp.float32) + bw_ref[l]

        v = x1 + x2
        if l < L - 1:
            v = jnp.maximum(v, 0.0)                               # ReLU

    # projection q: kron(I_B, Wq^T), tiny f32 matmul, (N, B*d_u) store
    out_ref[...] = jnp.dot(v, wq_ref[...],
                           preferred_element_type=jnp.float32) + bq_ref[...]


# --------------------------------------------------------------------------
# Host-side constant preparation (run ONCE per parameter set and cached)
# --------------------------------------------------------------------------
def _dft_matrices(N, M):
    """Real DFT matrices reproducing torch.fft.rfft (first M modes) and
    torch.fft.irfft(out_ft, n=N) with out_ft zero beyond the first M modes."""
    n = np.arange(N, dtype=np.float64)[:, None]
    k = np.arange(M, dtype=np.float64)[None, :]
    ang = 2.0 * np.pi * n * k / N                              # (N, M)
    fcos = np.cos(ang).astype(np.float32)
    fsin = np.sin(ang).astype(np.float32)

    coef = np.full((M,), 2.0, dtype=np.float64)
    coef[0] = 1.0
    if N % 2 == 0 and M == N // 2 + 1:
        coef[-1] = 1.0                                         # Nyquist counted once
    ang2 = (2.0 * np.pi
            * np.arange(M, dtype=np.float64)[:, None]
            * np.arange(N, dtype=np.float64)[None, :] / N)     # (M, N)
    cr = (coef[:, None] * np.cos(ang2) / N).astype(np.float32)
    ci = (-coef[:, None] * np.sin(ang2) / N).astype(np.float32)
    ci[0, :] = 0.0                                             # irfft ignores Im of DC bin
    if N % 2 == 0 and M == N // 2 + 1:
        ci[-1, :] = 0.0
    return fcos, fsin, cr, ci


def prepare_fno_constants(params, N, B):
    """Build every input-independent kernel operand with host numpy."""
    Wp, bp, WfR, WfI, Ww, bw, Wq, bq = [np.asarray(p, dtype=np.float32)
                                        for p in params]
    C = Wp.shape[0]
    d_u = Wq.shape[0]
    M = WfR.shape[-1]
    L = Ww.shape[0]

    fcos, fsin, cr, ci = _dft_matrices(N, M)
    fT = np.concatenate([fcos.T, -fsin.T], axis=0)             # (2M, N)
    cT = np.concatenate([cr, ci], axis=0).T                    # (N, 2M)

    # per-mode complex channel mix blocks: [[Wr, Wi], [-Wi, Wr]] per mode
    q_blocks = np.zeros((L, M, 2 * C, 2 * C), np.float32)
    for l in range(L):
        wr = np.transpose(WfR[l], (2, 0, 1))                   # (M, i, o)
        wi = np.transpose(WfI[l], (2, 0, 1))
        q_blocks[l, :, :C, :C] = wr
        q_blocks[l, :, :C, C:] = wi
        q_blocks[l, :, C:, :C] = -wi
        q_blocks[l, :, C:, C:] = wr

    eyeB = np.eye(B, dtype=np.float32)
    wk = np.stack([np.kron(eyeB, Ww[l].T) for l in range(L)], axis=0)   # (L,BC,BC)
    bw_rows = np.stack([np.tile(bw[l][:, 0], B)[None, :] for l in range(L)],
                       axis=0)                                          # (L,1,BC)
    wq_kron = np.kron(eyeB, Wq.T)                                       # (BC, B*d_u)
    bq_row = np.tile(bq[:, 0], B)[None, :]                              # (1, B*d_u)

    grid = np.linspace(0.0, 1.0, N).astype(np.float32)
    wp0_row = Wp[:, 0][None, :]                                         # (1, C)
    liftc = (grid[:, None] * np.tile(Wp[:, 1], B)[None, :]
             + np.tile(bp[:, 0], B)[None, :]).astype(np.float32)        # (N, B*C)

    return dict(
        wp0=jnp.asarray(wp0_row),
        liftc=jnp.asarray(liftc),
        fT=jnp.asarray(fT, dtype=jnp.bfloat16),
        cT=jnp.asarray(cT, dtype=jnp.bfloat16),
        q=jnp.asarray(q_blocks, dtype=jnp.bfloat16),
        wk=jnp.asarray(wk, dtype=jnp.bfloat16),
        bw=jnp.asarray(bw_rows),
        wq=jnp.asarray(wq_kron),
        bq=jnp.asarray(bq_row),
        dims=(B, N, C, d_u, M, L),
    )


# --------------------------------------------------------------------------
# Forward wrapper
# --------------------------------------------------------------------------
def fno_burger1d_pallas(x, consts):
    B, N, C, d_u, M, L = consts["dims"]
    assert x.shape == (B, N)
    xT = jnp.asarray(x, dtype=jnp.float32).T                     # (N, B)

    vmem = pl.BlockSpec(memory_space=pltpu.MemorySpace.VMEM)
    out = pl.pallas_call(
        fno_kernel,
        out_shape=jax.ShapeDtypeStruct((N, B * d_u), jnp.float32),
        in_specs=[vmem] * 10,
        out_specs=vmem,
        compiler_params=pltpu.CompilerParams(
            vmem_limit_bytes=16 * 1024 * 1024),
    )(xT, consts["wp0"], consts["liftc"], consts["fT"], consts["cT"],
      consts["q"], consts["wk"], consts["bw"], consts["wq"], consts["bq"])

    y = out.reshape(N, B, d_u).transpose(1, 0, 2)                # (B, N, d_u)
    if d_u == 1:
        y = y[:, :, 0]                                           # torch: squeeze(2)
    return y


# --------------------------------------------------------------------------
# Pure-JAX reference mirroring the torch forward (uses jnp.fft)
# --------------------------------------------------------------------------
def fno_burger1d_ref(x, params):
    Wp, bp, WfR, WfI, Ww, bw, Wq, bq = params
    B, N = x.shape
    d_u = Wq.shape[0]
    M = WfR.shape[-1]
    L = Ww.shape[0]

    gridx = jnp.broadcast_to(jnp.linspace(0.0, 1.0, N)[None, :, None], (B, N, 1))
    a = jnp.concatenate([x[:, :, None], gridx], axis=-1)         # (B, N, 2)
    v = a @ Wp.T + bp[:, 0][None, None, :]                       # (B, N, d_v)
    v = jnp.transpose(v, (0, 2, 1))                              # (B, d_v, N)
    for l in range(L):
        v_ft = jnp.fft.rfft(v, axis=-1)
        Wc = (WfR[l] + 1j * WfI[l]).astype(jnp.complex64)
        out_ft = jnp.zeros((B, v.shape[1], N // 2 + 1), dtype=jnp.complex64)
        out_ft = out_ft.at[:, :, :M].set(
            jnp.einsum('bix,iox->box', v_ft[:, :, :M], Wc))
        x1 = jnp.fft.irfft(out_ft, n=N, axis=-1)
        x2 = jnp.einsum('oi,bin->bon', Ww[l], v) + bw[l][None, :, :]
        v = x1 + x2
        if l < L - 1:
            v = jnp.maximum(v, 0.0)
    out = jnp.einsum('ui,bin->bun', Wq, v) + bq[None, :, :]      # (B, d_u, N)
    y = jnp.transpose(out, (0, 2, 1))
    if d_u == 1:
        y = y[:, :, 0]
    return y


if __name__ == "__main__":
    # module-consistent shapes: d_a is necessarily 2 (input value + grid coord)
    B, N = 2, 128
    d_a, d_v, d_u = 2, 32, 1
    L, modes1 = 2, 16

    key = jax.random.PRNGKey(0)
    ks = jax.random.split(key, 9)
    Wp = jax.random.normal(ks[0], (d_v, d_a), jnp.float32) * (2.0 / d_a) ** 0.5
    bp = jax.random.normal(ks[1], (d_v, 1), jnp.float32) * 0.1
    WfR = jax.random.normal(ks[2], (L, d_v, d_v, modes1), jnp.float32) * (2.0 / (d_v * modes1)) ** 0.5
    WfI = jax.random.normal(ks[3], (L, d_v, d_v, modes1), jnp.float32) * (2.0 / (d_v * modes1)) ** 0.5
    Ww = jax.random.normal(ks[4], (L, d_v, d_v), jnp.float32) * (1.0 / d_v) ** 0.5
    bw = jax.random.normal(ks[5], (L, d_v, 1), jnp.float32) * 0.1
    Wq = jax.random.normal(ks[6], (d_u, d_v), jnp.float32) * (1.0 / d_v) ** 0.5
    bq = jax.random.normal(ks[7], (d_u, 1), jnp.float32) * 0.1
    params = (Wp, bp, WfR, WfI, Ww, bw, Wq, bq)

    x = jax.random.normal(ks[8], (B, N), jnp.float32)

    # constants are built once per parameter set (host-side) and reused
    consts = prepare_fno_constants(params, N, B)

    y = jax.block_until_ready(fno_burger1d_pallas(x, consts))
    y_ref = jax.block_until_ready(fno_burger1d_ref(x, params))

    assert y.shape == (B, N), y.shape
    err = float(jnp.max(jnp.abs(y - y_ref)))
    scale = float(jnp.max(jnp.abs(y_ref))) + 1e-6
    assert err / scale < 5e-2, (err, scale)
    print("KERNEL_OK")
</pallas_src>

<mosaic_0001>
module attributes {stable_mosaic.version = 11 : i64} {
  func.func @fno_kernel(%arg0: memref<128x2xf32, #tpu.memory_space<vmem>>, %arg1: memref<1x32xf32, #tpu.memory_space<vmem>>, %arg2: memref<128x64xf32, #tpu.memory_space<vmem>>, %arg3: memref<32x128xbf16, #tpu.memory_space<vmem>>, %arg4: memref<128x32xbf16, #tpu.memory_space<vmem>>, %arg5: memref<2x16x64x64xbf16, #tpu.memory_space<vmem>>, %arg6: memref<2x64x64xbf16, #tpu.memory_space<vmem>>, %arg7: memref<2x1x64xf32, #tpu.memory_space<vmem>>, %arg8: memref<64x2xf32, #tpu.memory_space<vmem>>, %arg9: memref<1x2xf32, #tpu.memory_space<vmem>>, %arg10: memref<128x2xf32, #tpu.memory_space<vmem>>) attributes {dimension_semantics = [], scalar_prefetch = 0 : i64, scratch_operands = 0 : i64, tpu.core_type = #tpu.core_type<tc>} {
    %c0 = arith.constant 0 : index
    %c0_0 = arith.constant 0 : index
    %0 = vector.load %arg3[%c0, %c0_0] : memref<32x128xbf16, #tpu.memory_space<vmem>>, vector<32x128xbf16>
    %c0_1 = arith.constant 0 : index
    %c0_2 = arith.constant 0 : index
    %1 = vector.load %arg4[%c0_1, %c0_2] : memref<128x32xbf16, #tpu.memory_space<vmem>>, vector<128x32xbf16>
    %c0_3 = arith.constant 0 : index
    %c0_4 = arith.constant 0 : index
    %2 = vector.load %arg0[%c0_3, %c0_4] : memref<128x2xf32, #tpu.memory_space<vmem>>, vector<128x1xf32>
    %c0_5 = arith.constant 0 : index
    %c0_6 = arith.constant 0 : index
    %3 = vector.load %arg1[%c0_5, %c0_6] : memref<1x32xf32, #tpu.memory_space<vmem>>, vector<1x32xf32>
    %4 = vector.broadcast %2 : vector<128x1xf32> to vector<128x32xf32>
    %5 = vector.broadcast %3 : vector<1x32xf32> to vector<128x32xf32>
    %6 = arith.mulf %4, %5 : vector<128x32xf32>
    %c0_7 = arith.constant 0 : index
    %c0_8 = arith.constant 0 : index
    %7 = vector.load %arg2[%c0_7, %c0_8] : memref<128x64xf32, #tpu.memory_space<vmem>>, vector<128x32xf32>
    %8 = arith.addf %6, %7 : vector<128x32xf32>
    %c0_9 = arith.constant 0 : index
    %c1 = arith.constant 1 : index
    %9 = vector.load %arg0[%c0_9, %c1] : memref<128x2xf32, #tpu.memory_space<vmem>>, vector<128x1xf32>
    %c0_10 = arith.constant 0 : index
    %c0_11 = arith.constant 0 : index
    %10 = vector.load %arg1[%c0_10, %c0_11] : memref<1x32xf32, #tpu.memory_space<vmem>>, vector<1x32xf32>
    %11 = vector.broadcast %9 : vector<128x1xf32> to vector<128x32xf32>
    %12 = vector.broadcast %10 : vector<1x32xf32> to vector<128x32xf32>
    %13 = arith.mulf %11, %12 : vector<128x32xf32>
    %c0_12 = arith.constant 0 : index
    %c32 = arith.constant 32 : index
    %14 = vector.load %arg2[%c0_12, %c32] : memref<128x64xf32, #tpu.memory_space<vmem>>, vector<128x32xf32>
    %15 = arith.addf %13, %14 : vector<128x32xf32>
    %16 = tpu.concatenate %8, %15 in 1 : vector<128x32xf32>, vector<128x32xf32> -> vector<128x64xf32>
    %17 = arith.truncf %16 : vector<128x64xf32> to vector<128x64xbf16>
    %cst = arith.constant dense<0.000000e+00> : vector<32x64xf32>
    %18 = tpu.matmul %0, %17, %cst {dimension_numbers = #tpu.dot_dimension_numbers<[1], [0], [0], [1], [0, 0, 1, 1], [], []>} : vector<32x128xbf16>, vector<128x64xbf16>, vector<32x64xf32> -> vector<32x64xf32>
    %19 = vector.extract_strided_slice %18 {offsets = [0, 0], sizes = [16, 64], strides = [1, 1]} : vector<32x64xf32> to vector<16x64xf32>
    %20 = vector.extract_strided_slice %18 {offsets = [16, 0], sizes = [16, 64], strides = [1, 1]} : vector<32x64xf32> to vector<16x64xf32>
    %21 = vector.extract_strided_slice %19 {offsets = [0, 0], sizes = [16, 32], strides = [1, 1]} : vector<16x64xf32> to vector<16x32xf32>
    %22 = vector.extract_strided_slice %20 {offsets = [0, 0], sizes = [16, 32], strides = [1, 1]} : vector<16x64xf32> to vector<16x32xf32>
    %23 = tpu.concatenate %21, %22 in 1 : vector<16x32xf32>, vector<16x32xf32> -> vector<16x64xf32>
    %24 = vector.shape_cast %23 : vector<16x64xf32> to vector<16x1x64xf32>
    %25 = vector.extract_strided_slice %19 {offsets = [0, 32], sizes = [16, 32], strides = [1, 1]} : vector<16x64xf32> to vector<16x32xf32>
    %26 = vector.extract_strided_slice %20 {offsets = [0, 32], sizes = [16, 32], strides = [1, 1]} : vector<16x64xf32> to vector<16x32xf32>
    %27 = tpu.concatenate %25, %26 in 1 : vector<16x32xf32>, vector<16x32xf32> -> vector<16x64xf32>
    %28 = vector.shape_cast %27 : vector<16x64xf32> to vector<16x1x64xf32>
    %29 = tpu.concatenate %24, %28 in 1 : vector<16x1x64xf32>, vector<16x1x64xf32> -> vector<16x2x64xf32>
    %30 = arith.truncf %29 : vector<16x2x64xf32> to vector<16x2x64xbf16>
    %c0_13 = arith.constant 0 : index
    %c0_14 = arith.constant 0 : index
    %c0_15 = arith.constant 0 : index
    %c0_16 = arith.constant 0 : index
    %31 = vector.load %arg5[%c0_13, %c0_14, %c0_15, %c0_16] : memref<2x16x64x64xbf16, #tpu.memory_space<vmem>>, vector<1x16x64x64xbf16>
    %32 = vector.shape_cast %31 : vector<1x16x64x64xbf16> to vector<16x64x64xbf16>
    "tpu.trace_start"() <{level = 10 : i32, message = "mbc,mcd->mbd"}> : () -> ()
    %cst_17 = arith.constant dense<0.000000e+00> : vector<16x2x64xf32>
    %33 = tpu.matmul %30, %32, %cst_17 {dimension_numbers = #tpu.dot_dimension_numbers<[2], [1], [1], [2], [0, 0, 0, 1, 1, 2], [0], [0]>} : vector<16x2x64xbf16>, vector<16x64x64xbf16>, vector<16x2x64xf32> -> vector<16x2x64xf32>
    "tpu.trace_stop"() : () -> ()
    %34 = vector.extract_strided_slice %33 {offsets = [0, 0, 0], sizes = [16, 1, 32], strides = [1, 1, 1]} : vector<16x2x64xf32> to vector<16x1x32xf32>
    %35 = vector.shape_cast %34 : vector<16x1x32xf32> to vector<16x32xf32>
    %36 = vector.extract_strided_slice %33 {offsets = [0, 0, 32], sizes = [16, 1, 32], strides = [1, 1, 1]} : vector<16x2x64xf32> to vector<16x1x32xf32>
    %37 = vector.shape_cast %36 : vector<16x1x32xf32> to vector<16x32xf32>
    %38 = tpu.concatenate %35, %37 in 0 : vector<16x32xf32>, vector<16x32xf32> -> vector<32x32xf32>
    %39 = vector.extract_strided_slice %33 {offsets = [0, 1, 0], sizes = [16, 1, 32], strides = [1, 1, 1]} : vector<16x2x64xf32> to vector<16x1x32xf32>
    %40 = vector.shape_cast %39 : vector<16x1x32xf32> to vector<16x32xf32>
    %41 = vector.extract_strided_slice %33 {offsets = [0, 1, 32], sizes = [16, 1, 32], strides = [1, 1, 1]} : vector<16x2x64xf32> to vector<16x1x32xf32>
    %42 = vector.shape_cast %41 : vector<16x1x32xf32> to vector<16x32xf32>
    %43 = tpu.concatenate %40, %42 in 0 : vector<16x32xf32>, vector<16x32xf32> -> vector<32x32xf32>
    %44 = tpu.concatenate %38, %43 in 1 : vector<32x32xf32>, vector<32x32xf32> -> vector<32x64xf32>
    %45 = arith.truncf %44 : vector<32x64xf32> to vector<32x64xbf16>
    %cst_18 = arith.constant dense<0.000000e+00> : vector<128x64xf32>
    %46 = tpu.matmul %1, %45, %cst_18 {dimension_numbers = #tpu.dot_dimension_numbers<[1], [0], [0], [1], [0, 0, 1, 1], [], []>} : vector<128x32xbf16>, vector<32x64xbf16>, vector<128x64xf32> -> vector<128x64xf32>
    %c0_19 = arith.constant 0 : index
    %c0_20 = arith.constant 0 : index
    %c0_21 = arith.constant 0 : index
    %47 = vector.load %arg6[%c0_19, %c0_20, %c0_21] : memref<2x64x64xbf16, #tpu.memory_space<vmem>>, vector<1x64x64xbf16>
    %48 = vector.shape_cast %47 : vector<1x64x64xbf16> to vector<64x64xbf16>
    %cst_22 = arith.constant dense<0.000000e+00> : vector<128x64xf32>
    %49 = tpu.matmul %17, %48, %cst_22 {dimension_numbers = #tpu.dot_dimension_numbers<[1], [0], [0], [1], [0, 0, 1, 1], [], []>} : vector<128x64xbf16>, vector<64x64xbf16>, vector<128x64xf32> -> vector<128x64xf32>
    %c0_23 = arith.constant 0 : index
    %c0_24 = arith.constant 0 : index
    %c0_25 = arith.constant 0 : index
    %50 = vector.load %arg7[%c0_23, %c0_24, %c0_25] : memref<2x1x64xf32, #tpu.memory_space<vmem>>, vector<1x1x64xf32>
    %51 = vector.shape_cast %50 : vector<1x1x64xf32> to vector<1x64xf32>
    %52 = vector.broadcast %51 : vector<1x64xf32> to vector<128x64xf32>
    %53 = arith.addf %49, %52 : vector<128x64xf32>
    %54 = arith.addf %46, %53 : vector<128x64xf32>
    %cst_26 = arith.constant 0.000000e+00 : f32
    %55 = vector.broadcast %cst_26 : f32 to vector<128x64xf32>
    %56 = arith.maximumf %54, %55 : vector<128x64xf32>
    %57 = arith.truncf %56 : vector<128x64xf32> to vector<128x64xbf16>
    %cst_27 = arith.constant dense<0.000000e+00> : vector<32x64xf32>
    %58 = tpu.matmul %0, %57, %cst_27 {dimension_numbers = #tpu.dot_dimension_numbers<[1], [0], [0], [1], [0, 0, 1, 1], [], []>} : vector<32x128xbf16>, vector<128x64xbf16>, vector<32x64xf32> -> vector<32x64xf32>
    %59 = vector.extract_strided_slice %58 {offsets = [0, 0], sizes = [16, 64], strides = [1, 1]} : vector<32x64xf32> to vector<16x64xf32>
    %60 = vector.extract_strided_slice %58 {offsets = [16, 0], sizes = [16, 64], strides = [1, 1]} : vector<32x64xf32> to vector<16x64xf32>
    %61 = vector.extract_strided_slice %59 {offsets = [0, 0], sizes = [16, 32], strides = [1, 1]} : vector<16x64xf32> to vector<16x32xf32>
    %62 = vector.extract_strided_slice %60 {offsets = [0, 0], sizes = [16, 32], strides = [1, 1]} : vector<16x64xf32> to vector<16x32xf32>
    %63 = tpu.concatenate %61, %62 in 1 : vector<16x32xf32>, vector<16x32xf32> -> vector<16x64xf32>
    %64 = vector.shape_cast %63 : vector<16x64xf32> to vector<16x1x64xf32>
    %65 = vector.extract_strided_slice %59 {offsets = [0, 32], sizes = [16, 32], strides = [1, 1]} : vector<16x64xf32> to vector<16x32xf32>
    %66 = vector.extract_strided_slice %60 {offsets = [0, 32], sizes = [16, 32], strides = [1, 1]} : vector<16x64xf32> to vector<16x32xf32>
    %67 = tpu.concatenate %65, %66 in 1 : vector<16x32xf32>, vector<16x32xf32> -> vector<16x64xf32>
    %68 = vector.shape_cast %67 : vector<16x64xf32> to vector<16x1x64xf32>
    %69 = tpu.concatenate %64, %68 in 1 : vector<16x1x64xf32>, vector<16x1x64xf32> -> vector<16x2x64xf32>
    %70 = arith.truncf %69 : vector<16x2x64xf32> to vector<16x2x64xbf16>
    %c1_28 = arith.constant 1 : index
    %c0_29 = arith.constant 0 : index
    %c0_30 = arith.constant 0 : index
    %c0_31 = arith.constant 0 : index
    %71 = vector.load %arg5[%c1_28, %c0_29, %c0_30, %c0_31] : memref<2x16x64x64xbf16, #tpu.memory_space<vmem>>, vector<1x16x64x64xbf16>
    %72 = vector.shape_cast %71 : vector<1x16x64x64xbf16> to vector<16x64x64xbf16>
    "tpu.trace_start"() <{level = 10 : i32, message = "mbc,mcd->mbd"}> : () -> ()
    %cst_32 = arith.constant dense<0.000000e+00> : vector<16x2x64xf32>
    %73 = tpu.matmul %70, %72, %cst_32 {dimension_numbers = #tpu.dot_dimension_numbers<[2], [1], [1], [2], [0, 0, 0, 1, 1, 2], [0], [0]>} : vector<16x2x64xbf16>, vector<16x64x64xbf16>, vector<16x2x64xf32> -> vector<16x2x64xf32>
    "tpu.trace_stop"() : () -> ()
    %74 = vector.extract_strided_slice %73 {offsets = [0, 0, 0], sizes = [16, 1, 32], strides = [1, 1, 1]} : vector<16x2x64xf32> to vector<16x1x32xf32>
    %75 = vector.shape_cast %74 : vector<16x1x32xf32> to vector<16x32xf32>
    %76 = vector.extract_strided_slice %73 {offsets = [0, 0, 32], sizes = [16, 1, 32], strides = [1, 1, 1]} : vector<16x2x64xf32> to vector<16x1x32xf32>
    %77 = vector.shape_cast %76 : vector<16x1x32xf32> to vector<16x32xf32>
    %78 = tpu.concatenate %75, %77 in 0 : vector<16x32xf32>, vector<16x32xf32> -> vector<32x32xf32>
    %79 = vector.extract_strided_slice %73 {offsets = [0, 1, 0], sizes = [16, 1, 32], strides = [1, 1, 1]} : vector<16x2x64xf32> to vector<16x1x32xf32>
    %80 = vector.shape_cast %79 : vector<16x1x32xf32> to vector<16x32xf32>
    %81 = vector.extract_strided_slice %73 {offsets = [0, 1, 32], sizes = [16, 1, 32], strides = [1, 1, 1]} : vector<16x2x64xf32> to vector<16x1x32xf32>
    %82 = vector.shape_cast %81 : vector<16x1x32xf32> to vector<16x32xf32>
    %83 = tpu.concatenate %80, %82 in 0 : vector<16x32xf32>, vector<16x32xf32> -> vector<32x32xf32>
    %84 = tpu.concatenate %78, %83 in 1 : vector<32x32xf32>, vector<32x32xf32> -> vector<32x64xf32>
    %85 = arith.truncf %84 : vector<32x64xf32> to vector<32x64xbf16>
    %cst_33 = arith.constant dense<0.000000e+00> : vector<128x64xf32>
    %86 = tpu.matmul %1, %85, %cst_33 {dimension_numbers = #tpu.dot_dimension_numbers<[1], [0], [0], [1], [0, 0, 1, 1], [], []>} : vector<128x32xbf16>, vector<32x64xbf16>, vector<128x64xf32> -> vector<128x64xf32>
    %c1_34 = arith.constant 1 : index
    %c0_35 = arith.constant 0 : index
    %c0_36 = arith.constant 0 : index
    %87 = vector.load %arg6[%c1_34, %c0_35, %c0_36] : memref<2x64x64xbf16, #tpu.memory_space<vmem>>, vector<1x64x64xbf16>
    %88 = vector.shape_cast %87 : vector<1x64x64xbf16> to vector<64x64xbf16>
    %cst_37 = arith.constant dense<0.000000e+00> : vector<128x64xf32>
    %89 = tpu.matmul %57, %88, %cst_37 {dimension_numbers = #tpu.dot_dimension_numbers<[1], [0], [0], [1], [0, 0, 1, 1], [], []>} : vector<128x64xbf16>, vector<64x64xbf16>, vector<128x64xf32> -> vector<128x64xf32>
    %c1_38 = arith.constant 1 : index
    %c0_39 = arith.constant 0 : index
    %c0_40 = arith.constant 0 : index
    %90 = vector.load %arg7[%c1_38, %c0_39, %c0_40] : memref<2x1x64xf32, #tpu.memory_space<vmem>>, vector<1x1x64xf32>
    %91 = vector.shape_cast %90 : vector<1x1x64xf32> to vector<1x64xf32>
    %92 = vector.broadcast %91 : vector<1x64xf32> to vector<128x64xf32>
    %93 = arith.addf %89, %92 : vector<128x64xf32>
    %94 = arith.addf %86, %93 : vector<128x64xf32>
    %c0_41 = arith.constant 0 : index
    %c0_42 = arith.constant 0 : index
    %95 = vector.load %arg8[%c0_41, %c0_42] : memref<64x2xf32, #tpu.memory_space<vmem>>, vector<64x2xf32>
    %cst_43 = arith.constant dense<0.000000e+00> : vector<128x2xf32>
    %96 = tpu.matmul %94, %95, %cst_43 {dimension_numbers = #tpu.dot_dimension_numbers<[1], [0], [0], [1], [0, 0, 1, 1], [], []>} : vector<128x64xf32>, vector<64x2xf32>, vector<128x2xf32> -> vector<128x2xf32>
    %c0_44 = arith.constant 0 : index
    %c0_45 = arith.constant 0 : index
    %97 = vector.load %arg9[%c0_44, %c0_45] : memref<1x2xf32, #tpu.memory_space<vmem>>, vector<1x2xf32>
    %98 = vector.broadcast %97 : vector<1x2xf32> to vector<128x2xf32>
    %99 = arith.addf %96, %98 : vector<128x2xf32>
    %c0_46 = arith.constant 0 : index
    %c0_47 = arith.constant 0 : index
    %100 = vector.load %arg10[%c0_46, %c0_47] : memref<128x2xf32, #tpu.memory_space<vmem>>, vector<128x2xf32>
    tpu.vector_store %arg10[%c0_46, %c0_47], %99 {strides = array<i32>} : memref<128x2xf32, #tpu.memory_space<vmem>>, vector<128x2xf32>,
    return
  }
}

</mosaic_0001>

<llo_original>
// kernel: tpu_custom_call.1
$region0: #{tpu_custom_call.1}
  #allocation0 [shape = 'u32[]', space=smem, size = 0x4, offset = 0x4, fixed_abs, tag = 'smem constant byte address 0x4 - core index']
  #allocation1 [shape = 'u32[144,128]{1,0:T(1,128)}', space=vmem, size = 0x12000, scoped, tag = 'internal scratch']
  %s0 = inlined_call_operand.vmem [shape: f32[128,2], index: 0, kind: input, shape index: {}]
  %s1 = inlined_call_operand.vmem [shape: f32[1,32], index: 1, kind: input, shape index: {}]
  %s2 = inlined_call_operand.vmem [shape: f32[128,64], index: 2, kind: input, shape index: {}]
  %s3 = inlined_call_operand.vmem [shape: bf16[32,128], index: 3, kind: input, shape index: {}]
  %s4 = inlined_call_operand.vmem [shape: bf16[128,32], index: 4, kind: input, shape index: {}]
  %s5 = inlined_call_operand.hbm [shape: bf16[2,16,64,64], index: 5, kind: input, shape index: {}]
  %s6 = inlined_call_operand.vmem [shape: bf16[2,64,64], index: 6, kind: input, shape index: {}]
  %s7 = inlined_call_operand.vmem [shape: f32[2,1,64], index: 7, kind: input, shape index: {}]
  %s8 = inlined_call_operand.vmem [shape: f32[64,2], index: 8, kind: input, shape index: {}]
  %s9 = inlined_call_operand.vmem [shape: f32[1,2], index: 9, kind: input, shape index: {}]
  %s10 = inlined_call_operand.vmem [shape: f32[128,2], index: 10, kind: output, shape index: {}]
  %s11 = sld [smem:[#allocation0]]
  $region54: #{tpu_custom_call.1} parent=0
    _
  %s13 = ssub.s32 1, %s11
  %s14 = scalar_select 0, %s13, %s11
  $region1: #{tpu_custom_call.1} parent=0
    #allocation2 [shape = 'u8[524288]{0}', space=vmem, size = 0x80000, scoped, tag = 'input window, operand 5, single buffered']
    #allocation3 [shape = 's32[1]{0}', space=sflag, size = 0x4, scoped, tag = 'scoped memory for tpu_custom_call.1']
    %15 = vsyncpa [#allocation3], 0
    // Predicated region
    $region2: #{tpu_custom_call.1} parent=1 // pred_check
      _
    $region3: #{tpu_custom_call.1} parent=1 // pred_check_branch
      %17 = sbr.rel (0) target = $region5
    $region4: #{tpu_custom_call.1} parent=1 // pred_region
      _
    $region5: #{tpu_custom_call.1} parent=1 // pred_fallthru
      _
    // Predicated region
    $region6: #{tpu_custom_call.1} parent=1 // pred_check
      _
    $region7: #{tpu_custom_call.1} parent=1 // pred_check_branch
      %19 = sbr.rel (0) target = $region9
    $region8: #{tpu_custom_call.1} parent=1 // pred_region
      _
    $region9: #{tpu_custom_call.1} parent=1 // pred_fallthru
      _
    // Predicated region
    $region10: #{tpu_custom_call.1} parent=1 // pred_check
      _
    $region11: #{tpu_custom_call.1} parent=1 // pred_check_branch
      %21 = sbr.rel (0) target = $region13
    $region12: #{tpu_custom_call.1} parent=1 // pred_region
      _
    $region13: #{tpu_custom_call.1} parent=1 // pred_fallthru
      _
    // Predicated region
    $region14: #{tpu_custom_call.1} parent=1 // pred_check
      _
    $region15: #{tpu_custom_call.1} parent=1 // pred_check_branch
      %23 = sbr.rel (0) target = $region17
    $region16: #{tpu_custom_call.1} parent=1 // pred_region
      _
    $region17: #{tpu_custom_call.1} parent=1 // pred_fallthru
      _
    // Predicated region
    $region18: #{tpu_custom_call.1} parent=1 // pred_check
      _
    $region19: #{tpu_custom_call.1} parent=1 // pred_check_branch
      %25 = sbr.rel (0) target = $region21
    $region20: #{tpu_custom_call.1} parent=1 // pred_region
      _
    $region21: #{tpu_custom_call.1} parent=1 // pred_fallthru
      _
    // Predicated region
    $region22: #{tpu_custom_call.1} parent=1 // pred_check
      _
    $region23: #{tpu_custom_call.1} parent=1 // pred_check_branch
      %27 = sbr.rel (0) target = $region25
    $region24: #{tpu_custom_call.1} parent=1 // pred_region
      %s29 = ssub.s32 16384, 16384
      %30 = vsyncadd [#allocation3], %s29
      %s31 = sshll.u32 [#allocation2], 4
      %s32 = int_to_ptr.vmem [resolvable:$true] %s31
      %37 = dma.hbm_to_vmem [thread:$0]  %s5, 16384, %s32, [#allocation3], 64, 64, 4
    $region25: #{tpu_custom_call.1} parent=1 // pred_fallthru
      _
    // Predicated region
    $region26: #{tpu_custom_call.1} parent=1 // pred_check
      _
    $region27: #{tpu_custom_call.1} parent=1 // pred_check_branch
      %39 = sbr.rel (0) target = $region29
    $region28: #{tpu_custom_call.1} parent=1 // pred_region
      _
    $region29: #{tpu_custom_call.1} parent=1 // pred_fallthru
      _
    // Predicated region
    $region30: #{tpu_custom_call.1} parent=1 // pred_check
      _
    $region31: #{tpu_custom_call.1} parent=1 // pred_check_branch
      %41 = sbr.rel (0) target = $region33
    $region32: #{tpu_custom_call.1} parent=1 // pred_region
      _
    $region33: #{tpu_custom_call.1} parent=1 // pred_fallthru
      _
    // Predicated region
    $region34: #{tpu_custom_call.1} parent=1 // pred_check
      _
    $region35: #{tpu_custom_call.1} parent=1 // pred_check_branch
      %43 = sbr.rel (0) target = $region37
    $region36: #{tpu_custom_call.1} parent=1 // pred_region
      _
    $region37: #{tpu_custom_call.1} parent=1 // pred_fallthru
      _
    // Predicated region
    $region38: #{tpu_custom_call.1} parent=1 // pred_check
      _
    $region39: #{tpu_custom_call.1} parent=1 // pred_check_branch
      %45 = sbr.rel (0) target = $region41
    $region40: #{tpu_custom_call.1} parent=1 // pred_region
      _
    $region41: #{tpu_custom_call.1} parent=1 // pred_fallthru
      _
    // Predicated region
    $region42: #{tpu_custom_call.1} parent=1 // pred_check
      _
    $region43: #{tpu_custom_call.1} parent=1 // pred_check_branch
      %47 = sbr.rel (0) target = $region45
    $region44: #{tpu_custom_call.1} parent=1 // pred_region
      %48 = dma.done [#allocation3], 16384
    $region45: #{tpu_custom_call.1} parent=1 // pred_fallthru
      _
    %v50 = vld [vmem:[%s3] sm:$0xf]
    %v51 = vld [vmem:[%s3 + $0x4] sm:$0xf]
    %v52 = vld [vmem:[%s3 + $0x8] sm:$0xf]
    %v53 = vld [vmem:[%s3 + $0xc] sm:$0xf]
    %v54 = vld [vmem:[%s4] sm:$0xf]
    %v55 = vld [vmem:[%s4 + $0x4] sm:$0xf]
    %v56 = vld [vmem:[%s4 + $0x8] sm:$0xf]
    %v57 = vld [vmem:[%s4 + $0xc] sm:$0xf]
    %v58 = vld [vmem:[%s4 + $0x10] sm:$0xf]
    %v59 = vld [vmem:[%s4 + $0x14] sm:$0xf]
    %v60 = vld [vmem:[%s4 + $0x18] sm:$0xf]
    %v61 = vld [vmem:[%s4 + $0x1c] sm:$0xf]
    %v62 = vld [vmem:[%s4 + $0x20] sm:$0xf]
    %v63 = vld [vmem:[%s4 + $0x24] sm:$0xf]
    %v64 = vld [vmem:[%s4 + $0x28] sm:$0xf]
    %v65 = vld [vmem:[%s4 + $0x2c] sm:$0xf]
    %v66 = vld [vmem:[%s4 + $0x30] sm:$0xf]
    %v67 = vld [vmem:[%s4 + $0x34] sm:$0xf]
    %v68 = vld [vmem:[%s4 + $0x38] sm:$0xf]
    %v69 = vld [vmem:[%s4 + $0x3c] sm:$0xf]
    %v70 = vld [vmem:[%s0] sm:$0xff]
    %v71 = vld [vmem:[%s0 + $0x8] sm:$0xff]
    %v72 = vld [vmem:[%s0 + $0x10] sm:$0xff]
    %v73 = vld [vmem:[%s0 + $0x18] sm:$0xff]
    %v74 = vld [vmem:[%s0 + $0x20] sm:$0xff]
    %v75 = vld [vmem:[%s0 + $0x28] sm:$0xff]
    %v76 = vld [vmem:[%s0 + $0x30] sm:$0xff]
    %v77 = vld [vmem:[%s0 + $0x38] sm:$0xff]
    %v78 = vld [vmem:[%s0 + $0x40] sm:$0xff]
    %v79 = vld [vmem:[%s0 + $0x48] sm:$0xff]
    %v80 = vld [vmem:[%s0 + $0x50] sm:$0xff]
    %v81 = vld [vmem:[%s0 + $0x58] sm:$0xff]
    %v82 = vld [vmem:[%s0 + $0x60] sm:$0xff]
    %v83 = vld [vmem:[%s0 + $0x68] sm:$0xff]
    %v84 = vld [vmem:[%s0 + $0x70] sm:$0xff]
    %v85 = vld [vmem:[%s0 + $0x78] sm:$0xff]
    %v86 = vld [vmem:[%s1] sm:$0x1]
    %88 = vset.pattern.permute.xlu0 0
    %89 = vperm.xlu0 %88, %v70
    %v90 = vpop.permute.xlu0 %89
    %93 = vset.pattern.permute.xlu0 0
    %94 = vperm.xlu0 %93, %v71
    %v95 = vpop.permute.xlu0 %94
    %98 = vset.pattern.permute.xlu0 0
    %99 = vperm.xlu0 %98, %v72
    %v100 = vpop.permute.xlu0 %99
    %103 = vset.pattern.permute.xlu0 0
    %104 = vperm.xlu0 %103, %v73
    %v105 = vpop.permute.xlu0 %104
    %108 = vset.pattern.permute.xlu0 0
    %109 = vperm.xlu0 %108, %v74
    %v110 = vpop.permute.xlu0 %109
    %113 = vset.pattern.permute.xlu0 0
    %114 = vperm.xlu0 %113, %v75
    %v115 = vpop.permute.xlu0 %114
    %118 = vset.pattern.permute.xlu0 0
    %119 = vperm.xlu0 %118, %v76
    %v120 = vpop.permute.xlu0 %119
    %123 = vset.pattern.permute.xlu0 0
    %124 = vperm.xlu0 %123, %v77
    %v125 = vpop.permute.xlu0 %124
    %128 = vset.pattern.permute.xlu0 0
    %129 = vperm.xlu0 %128, %v78
    %v130 = vpop.permute.xlu0 %129
    %133 = vset.pattern.permute.xlu0 0
    %134 = vperm.xlu0 %133, %v79
    %v135 = vpop.permute.xlu0 %134
    %138 = vset.pattern.permute.xlu0 0
    %139 = vperm.xlu0 %138, %v80
    %v140 = vpop.permute.xlu0 %139
    %143 = vset.pattern.permute.xlu0 0
    %144 = vperm.xlu0 %143, %v81
    %v145 = vpop.permute.xlu0 %144
    %148 = vset.pattern.permute.xlu0 0
    %149 = vperm.xlu0 %148, %v82
    %v150 = vpop.permute.xlu0 %149
    %153 = vset.pattern.permute.xlu0 0
    %154 = vperm.xlu0 %153, %v83
    %v155 = vpop.permute.xlu0 %154
    %158 = vset.pattern.permute.xlu0 0
    %159 = vperm.xlu0 %158, %v84
    %v160 = vpop.permute.xlu0 %159
    %163 = vset.pattern.permute.xlu0 0
    %164 = vperm.xlu0 %163, %v85
    %v165 = vpop.permute.xlu0 %164
    %v168 = vlaneseq
    %v169 = vshrl.u32 %v168, 7
    %v170 = vsub.s32 0, %v169
    %v171 = vrot.slane %v86, %v170
    %v173 = vmul.f32 %v90, %v171
    %v174 = vmul.f32 %v95, %v171
    %v175 = vmul.f32 %v100, %v171
    %v176 = vmul.f32 %v105, %v171
    %v177 = vmul.f32 %v110, %v171
    %v178 = vmul.f32 %v115, %v171
    %v179 = vmul.f32 %v120, %v171
    %v180 = vmul.f32 %v125, %v171
    %v181 = vmul.f32 %v130, %v171
    %v182 = vmul.f32 %v135, %v171
    %v183 = vmul.f32 %v140, %v171
    %v184 = vmul.f32 %v145, %v171
    %v185 = vmul.f32 %v150, %v171
    %v186 = vmul.f32 %v155, %v171
    %v187 = vmul.f32 %v160, %v171
    %v188 = vmul.f32 %v165, %v171
    %v189 = vld [vmem:[%s2] sm:$0xff]
    %v190 = vld [vmem:[%s2 + $0x8] sm:$0xff]
    %v191 = vld [vmem:[%s2 + $0x10] sm:$0xff]
    %v192 = vld [vmem:[%s2 + $0x18] sm:$0xff]
    %v193 = vld [vmem:[%s2 + $0x20] sm:$0xff]
    %v194 = vld [vmem:[%s2 + $0x28] sm:$0xff]
    %v195 = vld [vmem:[%s2 + $0x30] sm:$0xff]
    %v196 = vld [vmem:[%s2 + $0x38] sm:$0xff]
    %v197 = vld [vmem:[%s2 + $0x40] sm:$0xff]
    %v198 = vld [vmem:[%s2 + $0x48] sm:$0xff]
    %v199 = vld [vmem:[%s2 + $0x50] sm:$0xff]
    %v200 = vld [vmem:[%s2 + $0x58] sm:$0xff]
    %v201 = vld [vmem:[%s2 + $0x60] sm:$0xff]
    %v202 = vld [vmem:[%s2 + $0x68] sm:$0xff]
    %v203 = vld [vmem:[%s2 + $0x70] sm:$0xff]
    %v204 = vld [vmem:[%s2 + $0x78] sm:$0xff]
    %v205 = vadd.f32 %v173, %v189
    %v206 = vadd.f32 %v174, %v190
    %v207 = vadd.f32 %v175, %v191
    %v208 = vadd.f32 %v176, %v192
    %v209 = vadd.f32 %v177, %v193
    %v210 = vadd.f32 %v178, %v194
    %v211 = vadd.f32 %v179, %v195
    %v212 = vadd.f32 %v180, %v196
    %v213 = vadd.f32 %v181, %v197
    %v214 = vadd.f32 %v182, %v198
    %v215 = vadd.f32 %v183, %v199
    %v216 = vadd.f32 %v184, %v200
    %v217 = vadd.f32 %v185, %v201
    %v218 = vadd.f32 %v186, %v202
    %v219 = vadd.f32 %v187, %v203
    %v220 = vadd.f32 %v188, %v204
    %221 = vset.pattern.permute.xlu0 1
    %222 = vperm.xlu0 %221, %v70
    %v223 = vpop.permute.xlu0 %222
    %225 = vset.pattern.permute.xlu0 1
    %226 = vperm.xlu0 %225, %v71
    %v227 = vpop.permute.xlu0 %226
    %229 = vset.pattern.permute.xlu0 1
    %230 = vperm.xlu0 %229, %v72
    %v231 = vpop.permute.xlu0 %230
    %233 = vset.pattern.permute.xlu0 1
    %234 = vperm.xlu0 %233, %v73
    %v235 = vpop.permute.xlu0 %234
    %237 = vset.pattern.permute.xlu0 1
    %238 = vperm.xlu0 %237, %v74
    %v239 = vpop.permute.xlu0 %238
    %241 = vset.pattern.permute.xlu0 1
    %242 = vperm.xlu0 %241, %v75
    %v243 = vpop.permute.xlu0 %242
    %245 = vset.pattern.permute.xlu0 1
    %246 = vperm.xlu0 %245, %v76
    %v247 = vpop.permute.xlu0 %246
    %249 = vset.pattern.permute.xlu0 1
    %250 = vperm.xlu0 %249, %v77
    %v251 = vpop.permute.xlu0 %250
    %253 = vset.pattern.permute.xlu0 1
    %254 = vperm.xlu0 %253, %v78
    %v255 = vpop.permute.xlu0 %254
    %257 = vset.pattern.permute.xlu0 1
    %258 = vperm.xlu0 %257, %v79
    %v259 = vpop.permute.xlu0 %258
    %261 = vset.pattern.permute.xlu0 1
    %262 = vperm.xlu0 %261, %v80
    %v263 = vpop.permute.xlu0 %262
    %265 = vset.pattern.permute.xlu0 1
    %266 = vperm.xlu0 %265, %v81
    %v267 = vpop.permute.xlu0 %266
    %269 = vset.pattern.permute.xlu0 1
    %270 = vperm.xlu0 %269, %v82
    %v271 = vpop.permute.xlu0 %270
    %273 = vset.pattern.permute.xlu0 1
    %274 = vperm.xlu0 %273, %v83
    %v275 = vpop.permute.xlu0 %274
    %277 = vset.pattern.permute.xlu0 1
    %278 = vperm.xlu0 %277, %v84
    %v279 = vpop.permute.xlu0 %278
    %281 = vset.pattern.permute.xlu0 1
    %282 = vperm.xlu0 %281, %v85
    %v283 = vpop.permute.xlu0 %282
    %v285 = vmul.f32 %v223, %v171
    %v286 = vmul.f32 %v227, %v171
    %v287 = vmul.f32 %v231, %v171
    %v288 = vmul.f32 %v235, %v171
    %v289 = vmul.f32 %v239, %v171
    %v290 = vmul.f32 %v243, %v171
    %v291 = vmul.f32 %v247, %v171
    %v292 = vmul.f32 %v251, %v171
    %v293 = vmul.f32 %v255, %v171
    %v294 = vmul.f32 %v259, %v171
    %v295 = vmul.f32 %v263, %v171
    %v296 = vmul.f32 %v267, %v171
    %v297 = vmul.f32 %v271, %v171
    %v298 = vmul.f32 %v275, %v171
    %v299 = vmul.f32 %v279, %v171
    %v300 = vmul.f32 %v283, %v171
    %317 = vrot.lane.b32.xlu0 %v189, 96
    %v318 = vpop.permute.xlu0 %317
    %319 = vrot.lane.b32.xlu0 %v190, 96
    %v320 = vpop.permute.xlu0 %319
    %321 = vrot.lane.b32.xlu0 %v191, 96
    %v322 = vpop.permute.xlu0 %321
    %323 = vrot.lane.b32.xlu0 %v192, 96
    %v324 = vpop.permute.xlu0 %323
    %325 = vrot.lane.b32.xlu0 %v193, 96
    %v326 = vpop.permute.xlu0 %325
    %327 = vrot.lane.b32.xlu0 %v194, 96
    %v328 = vpop.permute.xlu0 %327
    %329 = vrot.lane.b32.xlu0 %v195, 96
    %v330 = vpop.permute.xlu0 %329
    %331 = vrot.lane.b32.xlu0 %v196, 96
    %v332 = vpop.permute.xlu0 %331
    %333 = vrot.lane.b32.xlu0 %v197, 96
    %v334 = vpop.permute.xlu0 %333
    %335 = vrot.lane.b32.xlu0 %v198, 96
    %v336 = vpop.permute.xlu0 %335
    %337 = vrot.lane.b32.xlu0 %v199, 96
    %v338 = vpop.permute.xlu0 %337
    %339 = vrot.lane.b32.xlu0 %v200, 96
    %v340 = vpop.permute.xlu0 %339
    %341 = vrot.lane.b32.xlu0 %v201, 96
    %v342 = vpop.permute.xlu0 %341
    %343 = vrot.lane.b32.xlu0 %v202, 96
    %v344 = vpop.permute.xlu0 %343
    %345 = vrot.lane.b32.xlu0 %v203, 96
    %v346 = vpop.permute.xlu0 %345
    %347 = vrot.lane.b32.xlu0 %v204, 96
    %v348 = vpop.permute.xlu0 %347
    %v365 = vadd.f32 %v285, %v318
    %v366 = vadd.f32 %v286, %v320
    %v367 = vadd.f32 %v287, %v322
    %v368 = vadd.f32 %v288, %v324
    %v369 = vadd.f32 %v289, %v326
    %v370 = vadd.f32 %v290, %v328
    %v371 = vadd.f32 %v291, %v330
    %v372 = vadd.f32 %v292, %v332
    %v373 = vadd.f32 %v293, %v334
    %v374 = vadd.f32 %v294, %v336
    %v375 = vadd.f32 %v295, %v338
    %v376 = vadd.f32 %v296, %v340
    %v377 = vadd.f32 %v297, %v342
    %v378 = vadd.f32 %v298, %v344
    %v379 = vadd.f32 %v299, %v346
    %v380 = vadd.f32 %v300, %v348
    %397 = vrot.lane.b32.xlu0 %v365, 32
    %v398 = vpop.permute.xlu0 %397
    %399 = vrot.lane.b32.xlu0 %v366, 32
    %v400 = vpop.permute.xlu0 %399
    %401 = vrot.lane.b32.xlu0 %v367, 32
    %v402 = vpop.permute.xlu0 %401
    %403 = vrot.lane.b32.xlu0 %v368, 32
    %v404 = vpop.permute.xlu0 %403
    %405 = vrot.lane.b32.xlu0 %v369, 32
    %v406 = vpop.permute.xlu0 %405
    %407 = vrot.lane.b32.xlu0 %v370, 32
    %v408 = vpop.permute.xlu0 %407
    %409 = vrot.lane.b32.xlu0 %v371, 32
    %v410 = vpop.permute.xlu0 %409
    %411 = vrot.lane.b32.xlu0 %v372, 32
    %v412 = vpop.permute.xlu0 %411
    %413 = vrot.lane.b32.xlu0 %v373, 32
    %v414 = vpop.permute.xlu0 %413
    %415 = vrot.lane.b32.xlu0 %v374, 32
    %v416 = vpop.permute.xlu0 %415
    %417 = vrot.lane.b32.xlu0 %v375, 32
    %v418 = vpop.permute.xlu0 %417
    %419 = vrot.lane.b32.xlu0 %v376, 32
    %v420 = vpop.permute.xlu0 %419
    %421 = vrot.lane.b32.xlu0 %v377, 32
    %v422 = vpop.permute.xlu0 %421
    %423 = vrot.lane.b32.xlu0 %v378, 32
    %v424 = vpop.permute.xlu0 %423
    %425 = vrot.lane.b32.xlu0 %v379, 32
    %v426 = vpop.permute.xlu0 %425
    %427 = vrot.lane.b32.xlu0 %v380, 32
    %v428 = vpop.permute.xlu0 %427
    %vm445 = vcmask 261120
    %v446 = vsel %vm445, %v205, %v398
    %v447 = vsel %vm445, %v206, %v400
    %v448 = vsel %vm445, %v207, %v402
    %v449 = vsel %vm445, %v208, %v404
    %v450 = vsel %vm445, %v209, %v406
    %v451 = vsel %vm445, %v210, %v408
    %v452 = vsel %vm445, %v211, %v410
    %v453 = vsel %vm445, %v212, %v412
    %v454 = vsel %vm445, %v213, %v414
    %v455 = vsel %vm445, %v214, %v416
    %v456 = vsel %vm445, %v215, %v418
    %v457 = vsel %vm445, %v216, %v420
    %v458 = vsel %vm445, %v217, %v422
    %v459 = vsel %vm445, %v218, %v424
    %v460 = vsel %vm445, %v219, %v426
    %v461 = vsel %vm445, %v220, %v428
    %v462 = vpack.c.bf16 %v447, %v446
    %v463 = vpack.c.bf16 %v449, %v448
    %v464 = vpack.c.bf16 %v451, %v450
    %v465 = vpack.c.bf16 %v453, %v452
    %v466 = vpack.c.bf16 %v455, %v454
    %v467 = vpack.c.bf16 %v457, %v456
    %v468 = vpack.c.bf16 %v459, %v458
    %v469 = vpack.c.bf16 %v461, %v460
    %v474 = vunpack.c.l.b16 %v50
    %v475 = vunpack.c.l.b16 %v51
    %v476 = vunpack.c.l.b16 %v52
    %v477 = vunpack.c.l.b16 %v53
    %v478 = vpack.c.b16 %v475, %v474
    %v479 = vpack.c.b16 %v477, %v476
    %482 = vmatprep.subr.bf16.mxu0 0
    %483 = vmatpush1.bf16.msra.mxu0 %v462
    %484 = vmatprep.subr.bf16.mxu0 0
    %485 = vmatpush1.bf16.msra.mxu0 %v463
    %486 = vmatprep.subr.bf16.mxu0 0
    %487 = vmatpush1.bf16.msra.mxu0 %v464
    %488 = vmatprep.subr.bf16.mxu0 0
    %489 = vmatpush1.bf16.msra.mxu0 %v465
    %490 = vmatprep.subr.bf16.mxu0 0
    %491 = vmatpush1.bf16.msra.mxu0 %v466
    %492 = vmatprep.subr.bf16.mxu0 0
    %493 = vmatpush1.bf16.msra.mxu0 %v467
    %494 = vmatprep.subr.bf16.mxu0 0
    %495 = vmatpush1.bf16.msra.mxu0 %v468
    %496 = vmatprep.subr.bf16.mxu0 0
    %497 = vmatpush1.bf16.msra.mxu0 %v469
    %498 = vmatprep.subr.bf16.mxu0 0
    %499 = vmatpush1.bf16.msra.mxu0 0
    %500 = vmatprep.subr.bf16.mxu0 0
    %501 = vmatpush1.bf16.msra.mxu0 0
    %502 = vmatprep.subr.bf16.mxu0 0
    %503 = vmatpush1.bf16.msra.mxu0 0
    %504 = vmatprep.subr.bf16.mxu0 0
    %505 = vmatpush1.bf16.msra.mxu0 0
    %506 = vmatprep.subr.bf16.mxu0 0
    %507 = vmatpush1.bf16.msra.mxu0 0
    %508 = vmatprep.subr.bf16.mxu0 0
    %509 = vmatpush1.bf16.msra.mxu0 0
    %510 = vmatprep.subr.bf16.mxu0 0
    %511 = vmatpush1.bf16.msra.mxu0 0
    %512 = vmatprep.subr.bf16.mxu0 0
    %513 = vmatpush1.bf16.msra.mxu0 0
    %514 = vmatprep.mubr.bf16.mxu0 0
    %515 = vmatmul.mubr.bf16.gmra.mrb[0].mxu0 %v478
    %v516 = vpop.f32.mrb[0].mxu0
    %v517 = vadd.f32 0.0, %v516
    %v518 = vpop.f32.mrb[0].mxu0
    %v519 = vpop.f32.mrb[0].mxu0
    %v520 = vadd.f32 0.0, %v519
    %v521 = vpop.f32.mrb[0].mxu0
    %522 = vmatprep.mubr.bf16.mxu0 0
    %523 = vmatmul.mubr.bf16.gmra.mrb[0].mxu0 %v479
    %v524 = vpop.f32.mrb[0].mxu0
    %v525 = vadd.f32 0.0, %v524
    %v526 = vpop.f32.mrb[0].mxu0
    %v527 = vpop.f32.mrb[0].mxu0
    %v528 = vadd.f32 0.0, %v527
    %v529 = vpop.f32.mrb[0].mxu0
    %530 = vdwg.mxu0
    %533 = vrot.lane.b32.xlu0 %v525, 32
    %v534 = vpop.permute.xlu0 %533
    %535 = vrot.lane.b32.xlu0 %v528, 32
    %v536 = vpop.permute.xlu0 %535
    %v539 = vsel %vm445, %v517, %v534
    %v540 = vsel %vm445, %v520, %v536
    %v543 = vcombine.high %v539, %v539
    %v545 = vunpack.c.l.s4 1966171168
    %v546 = vunpack.c.0.s8 %v545
    %v547 = vlaneseq
    %v548 = vshrl.u32 %v547, 7
    %v549 = vsub.s32 %v546, %v548
    %v550 = vrot.slane %v539, %v549
    %v552 = vunpack.c.l.s4 1966171168
    %v553 = vunpack.c.0.s8 %v552
    %v554 = vlaneseq
    %v555 = vshrl.u32 %v554, 7
    %v556 = vsub.s32 %v553, %v555
    %v557 = vrot.slane %v543, %v556
    %v558 = vcombine.high %v550, %v550
    %v559 = vcombine.high %v557, %v557
    %v561 = vunpack.c.l.s4 1966171168
    %v562 = vunpack.c.0.s8 %v561
    %v563 = vlaneseq
    %v564 = vshrl.u32 %v563, 7
    %v565 = vsub.s32 %v562, %v564
    %v566 = vrot.slane %v550, %v565
    %v568 = vunpack.c.l.s4 1966171168
    %v569 = vunpack.c.0.s8 %v568
    %v570 = vlaneseq
    %v571 = vshrl.u32 %v570, 7
    %v572 = vsub.s32 %v569, %v571
    %v573 = vrot.slane %v557, %v572
    %v575 = vunpack.c.l.s4 1966171168
    %v576 = vunpack.c.0.s8 %v575
    %v577 = vlaneseq
    %v578 = vshrl.u32 %v577, 7
    %v579 = vsub.s32 %v576, %v578
    %v580 = vrot.slane %v558, %v579
    %v582 = vunpack.c.l.s4 1966171168
    %v583 = vunpack.c.0.s8 %v582
    %v584 = vlaneseq
    %v585 = vshrl.u32 %v584, 7
    %v586 = vsub.s32 %v583, %v585
    %v587 = vrot.slane %v559, %v586
    %v588 = vcombine.high %v566, %v566
    %v589 = vcombine.high %v573, %v573
    %v590 = vcombine.high %v580, %v580
    %v591 = vcombine.high %v587, %v587
    %v592 = vcombine.high %v540, %v540
    %v594 = vunpack.c.l.s4 1966171168
    %v595 = vunpack.c.0.s8 %v594
    %v596 = vlaneseq
    %v597 = vshrl.u32 %v596, 7
    %v598 = vsub.s32 %v595, %v597
    %v599 = vrot.slane %v540, %v598
    %v601 = vunpack.c.l.s4 1966171168
    %v602 = vunpack.c.0.s8 %v601
    %v603 = vlaneseq
    %v604 = vshrl.u32 %v603, 7
    %v605 = vsub.s32 %v602, %v604
    %v606 = vrot.slane %v592, %v605
    %v607 = vcombine.high %v599, %v599
    %v608 = vcombine.high %v606, %v606
    %v610 = vunpack.c.l.s4 1966171168
    %v611 = vunpack.c.0.s8 %v610
    %v612 = vlaneseq
    %v613 = vshrl.u32 %v612, 7
    %v614 = vsub.s32 %v611, %v613
    %v615 = vrot.slane %v599, %v614
    %v617 = vunpack.c.l.s4 1966171168
    %v618 = vunpack.c.0.s8 %v617
    %v619 = vlaneseq
    %v620 = vshrl.u32 %v619, 7
    %v621 = vsub.s32 %v618, %v620
    %v622 = vrot.slane %v606, %v621
    %v624 = vunpack.c.l.s4 1966171168
    %v625 = vunpack.c.0.s8 %v624
    %v626 = vlaneseq
    %v627 = vshrl.u32 %v626, 7
    %v628 = vsub.s32 %v625, %v627
    %v629 = vrot.slane %v607, %v628
    %v631 = vunpack.c.l.s4 1966171168
    %v632 = vunpack.c.0.s8 %v631
    %v633 = vlaneseq
    %v634 = vshrl.u32 %v633, 7
    %v635 = vsub.s32 %v632, %v634
    %v636 = vrot.slane %v608, %v635
    %v637 = vcombine.high %v615, %v615
    %v638 = vcombine.high %v622, %v622
    %v639 = vcombine.high %v629, %v629
    %v640 = vcombine.high %v636, %v636
    %659 = vrot.lane.b32.xlu0 %v517, 96
    %v660 = vpop.permute.xlu0 %659
    %661 = vrot.lane.b32.xlu0 %v520, 96
    %v662 = vpop.permute.xlu0 %661
    %v665 = vsel %vm445, %v660, %v525
    %v666 = vsel %vm445, %v662, %v528
    %v669 = vcombine.high %v665, %v665
    %v671 = vunpack.c.l.s4 1966171168
    %v672 = vunpack.c.0.s8 %v671
    %v673 = vlaneseq
    %v674 = vshrl.u32 %v673, 7
    %v675 = vsub.s32 %v672, %v674
    %v676 = vrot.slane %v665, %v675
    %v678 = vunpack.c.l.s4 1966171168
    %v679 = vunpack.c.0.s8 %v678
    %v680 = vlaneseq
    %v681 = vshrl.u32 %v680, 7
    %v682 = vsub.s32 %v679, %v681
    %v683 = vrot.slane %v669, %v682
    %v684 = vcombine.high %v676, %v676
    %v685 = vcombine.high %v683, %v683
    %v687 = vunpack.c.l.s4 1966171168
    %v688 = vunpack.c.0.s8 %v687
    %v689 = vlaneseq
    %v690 = vshrl.u32 %v689, 7
    %v691 = vsub.s32 %v688, %v690
    %v692 = vrot.slane %v676, %v691
    %v694 = vunpack.c.l.s4 1966171168
    %v695 = vunpack.c.0.s8 %v694
    %v696 = vlaneseq
    %v697 = vshrl.u32 %v696, 7
    %v698 = vsub.s32 %v695, %v697
    %v699 = vrot.slane %v683, %v698
    %v701 = vunpack.c.l.s4 1966171168
    %v702 = vunpack.c.0.s8 %v701
    %v703 = vlaneseq
    %v704 = vshrl.u32 %v703, 7
    %v705 = vsub.s32 %v702, %v704
    %v706 = vrot.slane %v684, %v705
    %v708 = vunpack.c.l.s4 1966171168
    %v709 = vunpack.c.0.s8 %v708
    %v710 = vlaneseq
    %v711 = vshrl.u32 %v710, 7
    %v712 = vsub.s32 %v709, %v711
    %v713 = vrot.slane %v685, %v712
    %v714 = vcombine.high %v692, %v692
    %v715 = vcombine.high %v699, %v699
    %v716 = vcombine.high %v706, %v706
    %v717 = vcombine.high %v713, %v713
    %v718 = vcombine.high %v666, %v666
    %v720 = vunpack.c.l.s4 1966171168
    %v721 = vunpack.c.0.s8 %v720
    %v722 = vlaneseq
    %v723 = vshrl.u32 %v722, 7
    %v724 = vsub.s32 %v721, %v723
    %v725 = vrot.slane %v666, %v724
    %v727 = vunpack.c.l.s4 1966171168
    %v728 = vunpack.c.0.s8 %v727
    %v729 = vlaneseq
    %v730 = vshrl.u32 %v729, 7
    %v731 = vsub.s32 %v728, %v730
    %v732 = vrot.slane %v718, %v731
    %v733 = vcombine.high %v725, %v725
    %v734 = vcombine.high %v732, %v732
    %v736 = vunpack.c.l.s4 1966171168
    %v737 = vunpack.c.0.s8 %v736
    %v738 = vlaneseq
    %v739 = vshrl.u32 %v738, 7
    %v740 = vsub.s32 %v737, %v739
    %v741 = vrot.slane %v725, %v740
    %v743 = vunpack.c.l.s4 1966171168
    %v744 = vunpack.c.0.s8 %v743
    %v745 = vlaneseq
    %v746 = vshrl.u32 %v745, 7
    %v747 = vsub.s32 %v744, %v746
    %v748 = vrot.slane %v732, %v747
    %v750 = vunpack.c.l.s4 1966171168
    %v751 = vunpack.c.0.s8 %v750
    %v752 = vlaneseq
    %v753 = vshrl.u32 %v752, 7
    %v754 = vsub.s32 %v751, %v753
    %v755 = vrot.slane %v733, %v754
    %v757 = vunpack.c.l.s4 1966171168
    %v758 = vunpack.c.0.s8 %v757
    %v759 = vlaneseq
    %v760 = vshrl.u32 %v759, 7
    %v761 = vsub.s32 %v758, %v760
    %v762 = vrot.slane %v734, %v761
    %v763 = vcombine.high %v741, %v741
    %v764 = vcombine.high %v748, %v748
    %v765 = vcombine.high %v755, %v755
    %v766 = vcombine.high %v762, %v762
    %v767 = vlaneseq
    %v768 = vshrl.u32 %v767, 7
    %v769 = vsub.s32 0, %v768
    %v770 = vrot.slane %v692, %v769
    %v771 = vlaneseq
    %v772 = vshrl.u32 %v771, 7
    %v773 = vsub.s32 0, %v772
    %v774 = vrot.slane %v706, %v773
    %v775 = vlaneseq
    %v776 = vshrl.u32 %v775, 7
    %v777 = vsub.s32 0, %v776
    %v778 = vrot.slane %v714, %v777
    %v779 = vlaneseq
    %v780 = vshrl.u32 %v779, 7
    %v781 = vsub.s32 0, %v780
    %v782 = vrot.slane %v716, %v781
    %v783 = vlaneseq
    %v784 = vshrl.u32 %v783, 7
    %v785 = vsub.s32 0, %v784
    %v786 = vrot.slane %v699, %v785
    %v787 = vlaneseq
    %v788 = vshrl.u32 %v787, 7
    %v789 = vsub.s32 0, %v788
    %v790 = vrot.slane %v713, %v789
    %v791 = vlaneseq
    %v792 = vshrl.u32 %v791, 7
    %v793 = vsub.s32 0, %v792
    %v794 = vrot.slane %v715, %v793
    %v795 = vlaneseq
    %v796 = vshrl.u32 %v795, 7
    %v797 = vsub.s32 0, %v796
    %v798 = vrot.slane %v717, %v797
    %v799 = vlaneseq
    %v800 = vshrl.u32 %v799, 7
    %v801 = vsub.s32 0, %v800
    %v802 = vrot.slane %v741, %v801
    %v803 = vlaneseq
    %v804 = vshrl.u32 %v803, 7
    %v805 = vsub.s32 0, %v804
    %v806 = vrot.slane %v755, %v805
    %v807 = vlaneseq
    %v808 = vshrl.u32 %v807, 7
    %v809 = vsub.s32 0, %v808
    %v810 = vrot.slane %v763, %v809
    %v811 = vlaneseq
    %v812 = vshrl.u32 %v811, 7
    %v813 = vsub.s32 0, %v812
    %v814 = vrot.slane %v765, %v813
    %v815 = vlaneseq
    %v816 = vshrl.u32 %v815, 7
    %v817 = vsub.s32 0, %v816
    %v818 = vrot.slane %v748, %v817
    %v819 = vlaneseq
    %v820 = vshrl.u32 %v819, 7
    %v821 = vsub.s32 0, %v820
    %v822 = vrot.slane %v762, %v821
    %v823 = vlaneseq
    %v824 = vshrl.u32 %v823, 7
    %v825 = vsub.s32 0, %v824
    %v826 = vrot.slane %v764, %v825
    %v827 = vlaneseq
    %v828 = vshrl.u32 %v827, 7
    %v829 = vsub.s32 0, %v828
    %v830 = vrot.slane %v766, %v829
    %vm847 = vcmask 1040384
    %v848 = vsel %vm847, %v566, %v770
    %v849 = vsel %vm847, %v580, %v774
    %v850 = vsel %vm847, %v588, %v778
    %v851 = vsel %vm847, %v590, %v782
    %v852 = vsel %vm847, %v573, %v786
    %v853 = vsel %vm847, %v587, %v790
    %v854 = vsel %vm847, %v589, %v794
    %v855 = vsel %vm847, %v591, %v798
    %v856 = vsel %vm847, %v615, %v802
    %v857 = vsel %vm847, %v629, %v806
    %v858 = vsel %vm847, %v637, %v810
    %v859 = vsel %vm847, %v639, %v814
    %v860 = vsel %vm847, %v622, %v818
    %v861 = vsel %vm847, %v636, %v822
    %v862 = vsel %vm847, %v638, %v826
    %v863 = vsel %vm847, %v640, %v830
    %v864 = vpack.c.bf16 %v848, %v848
    %v865 = vpack.c.bf16 %v849, %v849
    %v866 = vpack.c.bf16 %v850, %v850
    %v867 = vpack.c.bf16 %v851, %v851
    %v868 = vpack.c.bf16 %v852, %v852
    %v869 = vpack.c.bf16 %v853, %v853
    %v870 = vpack.c.bf16 %v854, %v854
    %v871 = vpack.c.bf16 %v855, %v855
    %v872 = vpack.c.bf16 %v856, %v856
    %v873 = vpack.c.bf16 %v857, %v857
    %v874 = vpack.c.bf16 %v858, %v858
    %v875 = vpack.c.bf16 %v859, %v859
    %v876 = vpack.c.bf16 %v860, %v860
    %v877 = vpack.c.bf16 %v861, %v861
    %v878 = vpack.c.bf16 %v862, %v862
    %v879 = vpack.c.bf16 %v863, %v863
    %v880 = vld [vmem:[#allocation2] sm:$0xf]
    %v881 = vld [vmem:[#allocation2 + $0x4] sm:$0xf]
    %v882 = vld [vmem:[#allocation2 + $0x8] sm:$0xf]
    %v883 = vld [vmem:[#allocation2 + $0xc] sm:$0xf]
    %v884 = vld [vmem:[#allocation2 + $0x10] sm:$0xf]
    %v885 = vld [vmem:[#allocation2 + $0x14] sm:$0xf]
    %v886 = vld [vmem:[#allocation2 + $0x18] sm:$0xf]
    %v887 = vld [vmem:[#allocation2 + $0x1c] sm:$0xf]
    %v888 = vld [vmem:[#allocation2 + $0x20] sm:$0xf]
    %v889 = vld [vmem:[#allocation2 + $0x24] sm:$0xf]
    %v890 = vld [vmem:[#allocation2 + $0x28] sm:$0xf]
    %v891 = vld [vmem:[#allocation2 + $0x2c] sm:$0xf]
    %v892 = vld [vmem:[#allocation2 + $0x30] sm:$0xf]
    %v893 = vld [vmem:[#allocation2 + $0x34] sm:$0xf]
    %v894 = vld [vmem:[#allocation2 + $0x38] sm:$0xf]
    %v895 = vld [vmem:[#allocation2 + $0x3c] sm:$0xf]
    %v896 = vld [vmem:[#allocation2 + $0x40] sm:$0xf]
    %v897 = vld [vmem:[#allocation2 + $0x44] sm:$0xf]
    %v898 = vld [vmem:[#allocation2 + $0x48] sm:$0xf]
    %v899 = vld [vmem:[#allocation2 + $0x4c] sm:$0xf]
    %v900 = vld [vmem:[#allocation2 + $0x50] sm:$0xf]
    %v901 = vld [vmem:[#allocation2 + $0x54] sm:$0xf]
    %v902 = vld [vmem:[#allocation2 + $0x58] sm:$0xf]
    %v903 = vld [vmem:[#allocation2 + $0x5c] sm:$0xf]
    %v904 = vld [vmem:[#allocation2 + $0x60] sm:$0xf]
    %v905 = vld [vmem:[#allocation2 + $0x64] sm:$0xf]
    %v906 = vld [vmem:[#allocation2 + $0x68] sm:$0xf]
    %v907 = vld [vmem:[#allocation2 + $0x6c] sm:$0xf]
    %v908 = vld [vmem:[#allocation2 + $0x70] sm:$0xf]
    %v909 = vld [vmem:[#allocation2 + $0x74] sm:$0xf]
    %v910 = vld [vmem:[#allocation2 + $0x78] sm:$0xf]
    %v911 = vld [vmem:[#allocation2 + $0x7c] sm:$0xf]
    %v912 = vld [vmem:[#allocation2 + $0x80] sm:$0xf]
    %v913 = vld [vmem:[#allocation2 + $0x84] sm:$0xf]
    %v914 = vld [vmem:[#allocation2 + $0x88] sm:$0xf]
    %v915 = vld [vmem:[#allocation2 + $0x8c] sm:$0xf]
    %v916 = vld [vmem:[#allocation2 + $0x90] sm:$0xf]
    %v917 = vld [vmem:[#allocation2 + $0x94] sm:$0xf]
    %v918 = vld [vmem:[#allocation2 + $0x98] sm:$0xf]
    %v919 = vld [vmem:[#allocation2 + $0x9c] sm:$0xf]
    %v920 = vld [vmem:[#allocation2 + $0xa0] sm:$0xf]
    %v921 = vld [vmem:[#allocation2 + $0xa4] sm:$0xf]
    %v922 = vld [vmem:[#allocation2 + $0xa8] sm:$0xf]
    %v923 = vld [vmem:[#allocation2 + $0xac] sm:$0xf]
    %v924 = vld [vmem:[#allocation2 + $0xb0] sm:$0xf]
    %v925 = vld [vmem:[#allocation2 + $0xb4] sm:$0xf]
    %v926 = vld [vmem:[#allocation2 + $0xb8] sm:$0xf]
    %v927 = vld [vmem:[#allocation2 + $0xbc] sm:$0xf]
    %v928 = vld [vmem:[#allocation2 + $0xc0] sm:$0xf]
    %v929 = vld [vmem:[#allocation2 + $0xc4] sm:$0xf]
    %v930 = vld [vmem:[#allocation2 + $0xc8] sm:$0xf]
    %v931 = vld [vmem:[#allocation2 + $0xcc] sm:$0xf]
    %v932 = vld [vmem:[#allocation2 + $0xd0] sm:$0xf]
    %v933 = vld [vmem:[#allocation2 + $0xd4] sm:$0xf]
    %v934 = vld [vmem:[#allocation2 + $0xd8] sm:$0xf]
    %v935 = vld [vmem:[#allocation2 + $0xdc] sm:$0xf]
    %v936 = vld [vmem:[#allocation2 + $0xe0] sm:$0xf]
    %v937 = vld [vmem:[#allocation2 + $0xe4] sm:$0xf]
    %v938 = vld [vmem:[#allocation2 + $0xe8] sm:$0xf]
    %v939 = vld [vmem:[#allocation2 + $0xec] sm:$0xf]
    %v940 = vld [vmem:[#allocation2 + $0xf0] sm:$0xf]
    %v941 = vld [vmem:[#allocation2 + $0xf4] sm:$0xf]
    %v942 = vld [vmem:[#allocation2 + $0xf8] sm:$0xf]
    %v943 = vld [vmem:[#allocation2 + $0xfc] sm:$0xf]
    %v944 = vld [vmem:[#allocation2 + $0x100] sm:$0xf]
    %v945 = vld [vmem:[#allocation2 + $0x104] sm:$0xf]
    %v946 = vld [vmem:[#allocation2 + $0x108] sm:$0xf]
    %v947 = vld [vmem:[#allocation2 + $0x10c] sm:$0xf]
    %v948 = vld [vmem:[#allocation2 + $0x110] sm:$0xf]
    %v949 = vld [vmem:[#allocation2 + $0x114] sm:$0xf]
    %v950 = vld [vmem:[#allocation2 + $0x118] sm:$0xf]
    %v951 = vld [vmem:[#allocation2 + $0x11c] sm:$0xf]
    %v952 = vld [vmem:[#allocation2 + $0x120] sm:$0xf]
    %v953 = vld [vmem:[#allocation2 + $0x124] sm:$0xf]
    %v954 = vld [vmem:[#allocation2 + $0x128] sm:$0xf]
    %v955 = vld [vmem:[#allocation2 + $0x12c] sm:$0xf]
    %v956 = vld [vmem:[#allocation2 + $0x130] sm:$0xf]
    %v957 = vld [vmem:[#allocation2 + $0x134] sm:$0xf]
    %v958 = vld [vmem:[#allocation2 + $0x138] sm:$0xf]
    %v959 = vld [vmem:[#allocation2 + $0x13c] sm:$0xf]
    %v960 = vld [vmem:[#allocation2 + $0x140] sm:$0xf]
    %v961 = vld [vmem:[#allocation2 + $0x144] sm:$0xf]
    %v962 = vld [vmem:[#allocation2 + $0x148] sm:$0xf]
    %v963 = vld [vmem:[#allocation2 + $0x14c] sm:$0xf]
    %v964 = vld [vmem:[#allocation2 + $0x150] sm:$0xf]
    %v965 = vld [vmem:[#allocation2 + $0x154] sm:$0xf]
    %v966 = vld [vmem:[#allocation2 + $0x158] sm:$0xf]
    %v967 = vld [vmem:[#allocation2 + $0x15c] sm:$0xf]
    %v968 = vld [vmem:[#allocation2 + $0x160] sm:$0xf]
    %v969 = vld [vmem:[#allocation2 + $0x164] sm:$0xf]
    %v970 = vld [vmem:[#allocation2 + $0x168] sm:$0xf]
    %v971 = vld [vmem:[#allocation2 + $0x16c] sm:$0xf]
    %v972 = vld [vmem:[#allocation2 + $0x170] sm:$0xf]
    %v973 = vld [vmem:[#allocation2 + $0x174] sm:$0xf]
    %v974 = vld [vmem:[#allocation2 + $0x178] sm:$0xf]
    %v975 = vld [vmem:[#allocation2 + $0x17c] sm:$0xf]
    %v976 = vld [vmem:[#allocation2 + $0x180] sm:$0xf]
    %v977 = vld [vmem:[#allocation2 + $0x184] sm:$0xf]
    %v978 = vld [vmem:[#allocation2 + $0x188] sm:$0xf]
    %v979 = vld [vmem:[#allocation2 + $0x18c] sm:$0xf]
    %v980 = vld [vmem:[#allocation2 + $0x190] sm:$0xf]
    %v981 = vld [vmem:[#allocation2 + $0x194] sm:$0xf]
    %v982 = vld [vmem:[#allocation2 + $0x198] sm:$0xf]
    %v983 = vld [vmem:[#allocation2 + $0x19c] sm:$0xf]
    %v984 = vld [vmem:[#allocation2 + $0x1a0] sm:$0xf]
    %v985 = vld [vmem:[#allocation2 + $0x1a4] sm:$0xf]
    %v986 = vld [vmem:[#allocation2 + $0x1a8] sm:$0xf]
    %v987 = vld [vmem:[#allocation2 + $0x1ac] sm:$0xf]
    %v988 = vld [vmem:[#allocation2 + $0x1b0] sm:$0xf]
    %v989 = vld [vmem:[#allocation2 + $0x1b4] sm:$0xf]
    %v990 = vld [vmem:[#allocation2 + $0x1b8] sm:$0xf]
    %v991 = vld [vmem:[#allocation2 + $0x1bc] sm:$0xf]
    %v992 = vld [vmem:[#allocation2 + $0x1c0] sm:$0xf]
    %v993 = vld [vmem:[#allocation2 + $0x1c4] sm:$0xf]
    %v994 = vld [vmem:[#allocation2 + $0x1c8] sm:$0xf]
    %v995 = vld [vmem:[#allocation2 + $0x1cc] sm:$0xf]
    %v996 = vld [vmem:[#allocation2 + $0x1d0] sm:$0xf]
    %v997 = vld [vmem:[#allocation2 + $0x1d4] sm:$0xf]
    %v998 = vld [vmem:[#allocation2 + $0x1d8] sm:$0xf]
    %v999 = vld [vmem:[#allocation2 + $0x1dc] sm:$0xf]
    %v1000 = vld [vmem:[#allocation2 + $0x1e0] sm:$0xf]
    %v1001 = vld [vmem:[#allocation2 + $0x1e4] sm:$0xf]
    %v1002 = vld [vmem:[#allocation2 + $0x1e8] sm:$0xf]
    %v1003 = vld [vmem:[#allocation2 + $0x1ec] sm:$0xf]
    %v1004 = vld [vmem:[#allocation2 + $0x1f0] sm:$0xf]
    %v1005 = vld [vmem:[#allocation2 + $0x1f4] sm:$0xf]
    %v1006 = vld [vmem:[#allocation2 + $0x1f8] sm:$0xf]
    %v1007 = vld [vmem:[#allocation2 + $0x1fc] sm:$0xf]
    %v1016 = vunpack.c.l.b16 %v880
    %v1017 = vunpack.c.l.b16 %v881
    %v1018 = vunpack.c.l.b16 %v882
    %v1019 = vunpack.c.l.b16 %v883
    %v1020 = vunpack.c.l.b16 %v884
    %v1021 = vunpack.c.l.b16 %v885
    %v1022 = vunpack.c.l.b16 %v886
    %v1023 = vunpack.c.l.b16 %v887
    %v1024 = vpack.c.b16 %v1017, %v1016
    %v1025 = vpack.c.b16 %v1019, %v1018
    %v1026 = vpack.c.b16 %v1021, %v1020
    %v1027 = vpack.c.b16 %v1023, %v1022
    %vm1032 = vcmask 523264
    %v1034 = vsel %vm1032, %v864, 0
    %1036 = vmatprep.subr.bf16.mxu0 0
    %1037 = vmatpush1.bf16.msra.mxu0 %v1024
    %1038 = vmatprep.subr.bf16.mxu0 0
    %1039 = vmatpush1.bf16.msra.mxu0 %v1025
    %1040 = vmatprep.subr.bf16.mxu0 0
    %1041 = vmatpush1.bf16.msra.mxu0 %v1026
    %1042 = vmatprep.subr.bf16.mxu0 0
    %1043 = vmatpush1.bf16.msra.mxu0 %v1027
    %1044 = vmatprep.subr.bf16.mxu0 0
    %1045 = vmatpush1.bf16.msra.mxu0 0
    %1046 = vmatprep.subr.bf16.mxu0 0
    %1047 = vmatpush1.bf16.msra.mxu0 0
    %1048 = vmatprep.subr.bf16.mxu0 0
    %1049 = vmatpush1.bf16.msra.mxu0 0
    %1050 = vmatprep.subr.bf16.mxu0 0
    %1051 = vmatpush1.bf16.msra.mxu0 0
    %1052 = vmatprep.subr.bf16.mxu0 0
    %1053 = vmatpush1.bf16.msra.mxu0 0
    %1054 = vmatprep.subr.bf16.mxu0 0
    %1055 = vmatpush1.bf16.msra.mxu0 0
    %1056 = vmatprep.subr.bf16.mxu0 0
    %1057 = vmatpush1.bf16.msra.mxu0 0
    %1058 = vmatprep.subr.bf16.mxu0 0
    %1059 = vmatpush1.bf16.msra.mxu0 0
    %1060 = vmatprep.subr.bf16.mxu0 0
    %1061 = vmatpush1.bf16.msra.mxu0 0
    %1062 = vmatprep.subr.bf16.mxu0 0
    %1063 = vmatpush1.bf16.msra.mxu0 0
    %1064 = vmatprep.subr.bf16.mxu0 0
    %1065 = vmatpush1.bf16.msra.mxu0 0
    %1066 = vmatprep.subr.bf16.mxu0 0
    %1067 = vmatpush1.bf16.msra.mxu0 0
    %1068 = vmatprep.mubr.bf16.mxu0 0
    %1069 = vmatmul.mubr.bf16.gmra.mrb[0].mxu0 %v1034
    %v1070 = vpop.f32.mrb[0].mxu0
    %v1071 = vadd.f32 0.0, %v1070
    %v1072 = vpop.f32.mrb[0].mxu0
    %v1073 = vpop.f32.mrb[0].mxu0
    %v1074 = vpop.f32.mrb[0].mxu0
    %1075 = vdwg.mxu0
    %v1084 = vunpack.c.l.b16 %v888
    %v1085 = vunpack.c.l.b16 %v889
    %v1086 = vunpack.c.l.b16 %v890
    %v1087 = vunpack.c.l.b16 %v891
    %v1088 = vunpack.c.l.b16 %v892
    %v1089 = vunpack.c.l.b16 %v893
    %v1090 = vunpack.c.l.b16 %v894
    %v1091 = vunpack.c.l.b16 %v895
    %v1092 = vpack.c.b16 %v1085, %v1084
    %v1093 = vpack.c.b16 %v1087, %v1086
    %v1094 = vpack.c.b16 %v1089, %v1088
    %v1095 = vpack.c.b16 %v1091, %v1090
    %v1101 = vsel %vm1032, %v865, 0
    %1103 = vmatprep.subr.bf16.mxu0 0
    %1104 = vmatpush1.bf16.msra.mxu0 %v1092
    %1105 = vmatprep.subr.bf16.mxu0 0
    %1106 = vmatpush1.bf16.msra.mxu0 %v1093
    %1107 = vmatprep.subr.bf16.mxu0 0
    %1108 = vmatpush1.bf16.msra.mxu0 %v1094
    %1109 = vmatprep.subr.bf16.mxu0 0
    %1110 = vmatpush1.bf16.msra.mxu0 %v1095
    %1111 = vmatprep.subr.bf16.mxu0 0
    %1112 = vmatpush1.bf16.msra.mxu0 0
    %1113 = vmatprep.subr.bf16.mxu0 0
    %1114 = vmatpush1.bf16.msra.mxu0 0
    %1115 = vmatprep.subr.bf16.mxu0 0
    %1116 = vmatpush1.bf16.msra.mxu0 0
    %1117 = vmatprep.subr.bf16.mxu0 0
    %1118 = vmatpush1.bf16.msra.mxu0 0
    %1119 = vmatprep.subr.bf16.mxu0 0
    %1120 = vmatpush1.bf16.msra.mxu0 0
    %1121 = vmatprep.subr.bf16.mxu0 0
    %1122 = vmatpush1.bf16.msra.mxu0 0
    %1123 = vmatprep.subr.bf16.mxu0 0
    %1124 = vmatpush1.bf16.msra.mxu0 0
    %1125 = vmatprep.subr.bf16.mxu0 0
    %1126 = vmatpush1.bf16.msra.mxu0 0
    %1127 = vmatprep.subr.bf16.mxu0 0
    %1128 = vmatpush1.bf16.msra.mxu0 0
    %1129 = vmatprep.subr.bf16.mxu0 0
    %1130 = vmatpush1.bf16.msra.mxu0 0
    %1131 = vmatprep.subr.bf16.mxu0 0
    %1132 = vmatpush1.bf16.msra.mxu0 0
    %1133 = vmatprep.subr.bf16.mxu0 0
    %1134 = vmatpush1.bf16.msra.mxu0 0
    %1135 = vmatprep.mubr.bf16.mxu0 0
    %1136 = vmatmul.mubr.bf16.gmra.mrb[0].mxu0 %v1101
    %v1137 = vpop.f32.mrb[0].mxu0
    %v1138 = vadd.f32 0.0, %v1137
    %v1139 = vpop.f32.mrb[0].mxu0
    %v1140 = vpop.f32.mrb[0].mxu0
    %v1141 = vpop.f32.mrb[0].mxu0
    %1142 = vdwg.mxu0
    %v1151 = vunpack.c.l.b16 %v896
    %v1152 = vunpack.c.l.b16 %v897
    %v1153 = vunpack.c.l.b16 %v898
    %v1154 = vunpack.c.l.b16 %v899
    %v1155 = vunpack.c.l.b16 %v900
    %v1156 = vunpack.c.l.b16 %v901
    %v1157 = vunpack.c.l.b16 %v902
    %v1158 = vunpack.c.l.b16 %v903
    %v1159 = vpack.c.b16 %v1152, %v1151
    %v1160 = vpack.c.b16 %v1154, %v1153
    %v1161 = vpack.c.b16 %v1156, %v1155
    %v1162 = vpack.c.b16 %v1158, %v1157
    %v1168 = vsel %vm1032, %v866, 0
    %1170 = vmatprep.subr.bf16.mxu0 0
    %1171 = vmatpush1.bf16.msra.mxu0 %v1159
    %1172 = vmatprep.subr.bf16.mxu0 0
    %1173 = vmatpush1.bf16.msra.mxu0 %v1160
    %1174 = vmatprep.subr.bf16.mxu0 0
    %1175 = vmatpush1.bf16.msra.mxu0 %v1161
    %1176 = vmatprep.subr.bf16.mxu0 0
    %1177 = vmatpush1.bf16.msra.mxu0 %v1162
    %1178 = vmatprep.subr.bf16.mxu0 0
    %1179 = vmatpush1.bf16.msra.mxu0 0
    %1180 = vmatprep.subr.bf16.mxu0 0
    %1181 = vmatpush1.bf16.msra.mxu0 0
    %1182 = vmatprep.subr.bf16.mxu0 0
    %1183 = vmatpush1.bf16.msra.mxu0 0
    %1184 = vmatprep.subr.bf16.mxu0 0
    %1185 = vmatpush1.bf16.msra.mxu0 0
    %1186 = vmatprep.subr.bf16.mxu0 0
    %1187 = vmatpush1.bf16.msra.mxu0 0
    %1188 = vmatprep.subr.bf16.mxu0 0
    %1189 = vmatpush1.bf16.msra.mxu0 0
    %1190 = vmatprep.subr.bf16.mxu0 0
    %1191 = vmatpush1.bf16.msra.mxu0 0
    %1192 = vmatprep.subr.bf16.mxu0 0
    %1193 = vmatpush1.bf16.msra.mxu0 0
    %1194 = vmatprep.subr.bf16.mxu0 0
    %1195 = vmatpush1.bf16.msra.mxu0 0
    %1196 = vmatprep.subr.bf16.mxu0 0
    %1197 = vmatpush1.bf16.msra.mxu0 0
    %1198 = vmatprep.subr.bf16.mxu0 0
    %1199 = vmatpush1.bf16.msra.mxu0 0
    %1200 = vmatprep.subr.bf16.mxu0 0
    %1201 = vmatpush1.bf16.msra.mxu0 0
    %1202 = vmatprep.mubr.bf16.mxu0 0
    %1203 = vmatmul.mubr.bf16.gmra.mrb[0].mxu0 %v1168
    %v1204 = vpop.f32.mrb[0].mxu0
    %v1205 = vadd.f32 0.0, %v1204
    %v1206 = vpop.f32.mrb[0].mxu0
    %v1207 = vpop.f32.mrb[0].mxu0
    %v1208 = vpop.f32.mrb[0].mxu0
    %1209 = vdwg.mxu0
    %v1218 = vunpack.c.l.b16 %v904
    %v1219 = vunpack.c.l.b16 %v905
    %v1220 = vunpack.c.l.b16 %v906
    %v1221 = vunpack.c.l.b16 %v907
    %v1222 = vunpack.c.l.b16 %v908
    %v1223 = vunpack.c.l.b16 %v909
    %v1224 = vunpack.c.l.b16 %v910
    %v1225 = vunpack.c.l.b16 %v911
    %v1226 = vpack.c.b16 %v1219, %v1218
    %v1227 = vpack.c.b16 %v1221, %v1220
    %v1228 = vpack.c.b16 %v1223, %v1222
    %v1229 = vpack.c.b16 %v1225, %v1224
    %v1235 = vsel %vm1032, %v867, 0
    %1237 = vmatprep.subr.bf16.mxu0 0
    %1238 = vmatpush1.bf16.msra.mxu0 %v1226
    %1239 = vmatprep.subr.bf16.mxu0 0
    %1240 = vmatpush1.bf16.msra.mxu0 %v1227
    %1241 = vmatprep.subr.bf16.mxu0 0
    %1242 = vmatpush1.bf16.msra.mxu0 %v1228
    %1243 = vmatprep.subr.bf16.mxu0 0
    %1244 = vmatpush1.bf16.msra.mxu0 %v1229
    %1245 = vmatprep.subr.bf16.mxu0 0
    %1246 = vmatpush1.bf16.msra.mxu0 0
    %1247 = vmatprep.subr.bf16.mxu0 0
    %1248 = vmatpush1.bf16.msra.mxu0 0
    %1249 = vmatprep.subr.bf16.mxu0 0
    %1250 = vmatpush1.bf16.msra.mxu0 0
    %1251 = vmatprep.subr.bf16.mxu0 0
    %1252 = vmatpush1.bf16.msra.mxu0 0
    %1253 = vmatprep.subr.bf16.mxu0 0
    %1254 = vmatpush1.bf16.msra.mxu0 0
    %1255 = vmatprep.subr.bf16.mxu0 0
    %1256 = vmatpush1.bf16.msra.mxu0 0
    %1257 = vmatprep.subr.bf16.mxu0 0
    %1258 = vmatpush1.bf16.msra.mxu0 0
    %1259 = vmatprep.subr.bf16.mxu0 0
    %1260 = vmatpush1.bf16.msra.mxu0 0
    %1261 = vmatprep.subr.bf16.mxu0 0
    %1262 = vmatpush1.bf16.msra.mxu0 0
    %1263 = vmatprep.subr.bf16.mxu0 0
    %1264 = vmatpush1.bf16.msra.mxu0 0
    %1265 = vmatprep.subr.bf16.mxu0 0
    %1266 = vmatpush1.bf16.msra.mxu0 0
    %1267 = vmatprep.subr.bf16.mxu0 0
    %1268 = vmatpush1.bf16.msra.mxu0 0
    %1269 = vmatprep.mubr.bf16.mxu0 0
    %1270 = vmatmul.mubr.bf16.gmra.mrb[0].mxu0 %v1235
    %v1271 = vpop.f32.mrb[0].mxu0
    %v1272 = vadd.f32 0.0, %v1271
    %v1273 = vpop.f32.mrb[0].mxu0
    %v1274 = vpop.f32.mrb[0].mxu0
    %v1275 = vpop.f32.mrb[0].mxu0
    %1276 = vdwg.mxu0
    %v1285 = vunpack.c.l.b16 %v912
    %v1286 = vunpack.c.l.b16 %v913
    %v1287 = vunpack.c.l.b16 %v914
    %v1288 = vunpack.c.l.b16 %v915
    %v1289 = vunpack.c.l.b16 %v916
    %v1290 = vunpack.c.l.b16 %v917
    %v1291 = vunpack.c.l.b16 %v918
    %v1292 = vunpack.c.l.b16 %v919
    %v1293 = vpack.c.b16 %v1286, %v1285
    %v1294 = vpack.c.b16 %v1288, %v1287
    %v1295 = vpack.c.b16 %v1290, %v1289
    %v1296 = vpack.c.b16 %v1292, %v1291
    %v1302 = vsel %vm1032, %v868, 0
    %1304 = vmatprep.subr.bf16.mxu0 0
    %1305 = vmatpush1.bf16.msra.mxu0 %v1293
    %1306 = vmatprep.subr.bf16.mxu0 0
    %1307 = vmatpush1.bf16.msra.mxu0 %v1294
    %1308 = vmatprep.subr.bf16.mxu0 0
    %1309 = vmatpush1.bf16.msra.mxu0 %v1295
    %1310 = vmatprep.subr.bf16.mxu0 0
    %1311 = vmatpush1.bf16.msra.mxu0 %v1296
    %1312 = vmatprep.subr.bf16.mxu0 0
    %1313 = vmatpush1.bf16.msra.mxu0 0
    %1314 = vmatprep.subr.bf16.mxu0 0
    %1315 = vmatpush1.bf16.msra.mxu0 0
    %1316 = vmatprep.subr.bf16.mxu0 0
    %1317 = vmatpush1.bf16.msra.mxu0 0
    %1318 = vmatprep.subr.bf16.mxu0 0
    %1319 = vmatpush1.bf16.msra.mxu0 0
    %1320 = vmatprep.subr.bf16.mxu0 0
    %1321 = vmatpush1.bf16.msra.mxu0 0
    %1322 = vmatprep.subr.bf16.mxu0 0
    %1323 = vmatpush1.bf16.msra.mxu0 0
    %1324 = vmatprep.subr.bf16.mxu0 0
    %1325 = vmatpush1.bf16.msra.mxu0 0
    %1326 = vmatprep.subr.bf16.mxu0 0
    %1327 = vmatpush1.bf16.msra.mxu0 0
    %1328 = vmatprep.subr.bf16.mxu0 0
    %1329 = vmatpush1.bf16.msra.mxu0 0
    %1330 = vmatprep.subr.bf16.mxu0 0
    %1331 = vmatpush1.bf16.msra.mxu0 0
    %1332 = vmatprep.subr.bf16.mxu0 0
    %1333 = vmatpush1.bf16.msra.mxu0 0
    %1334 = vmatprep.subr.bf16.mxu0 0
    %1335 = vmatpush1.bf16.msra.mxu0 0
    %1336 = vmatprep.mubr.bf16.mxu0 0
    %1337 = vmatmul.mubr.bf16.gmra.mrb[0].mxu0 %v1302
    %v1338 = vpop.f32.mrb[0].mxu0
    %v1339 = vadd.f32 0.0, %v1338
    %v1340 = vpop.f32.mrb[0].mxu0
    %v1341 = vpop.f32.mrb[0].mxu0
    %v1342 = vpop.f32.mrb[0].mxu0
    %1343 = vdwg.mxu0
    %v1352 = vunpack.c.l.b16 %v920
    %v1353 = vunpack.c.l.b16 %v921
    %v1354 = vunpack.c.l.b16 %v922
    %v1355 = vunpack.c.l.b16 %v923
    %v1356 = vunpack.c.l.b16 %v924
    %v1357 = vunpack.c.l.b16 %v925
    %v1358 = vunpack.c.l.b16 %v926
    %v1359 = vunpack.c.l.b16 %v927
    %v1360 = vpack.c.b16 %v1353, %v1352
    %v1361 = vpack.c.b16 %v1355, %v1354
    %v1362 = vpack.c.b16 %v1357, %v1356
    %v1363 = vpack.c.b16 %v1359, %v1358
    %v1369 = vsel %vm1032, %v869, 0
    %1371 = vmatprep.subr.bf16.mxu0 0
    %1372 = vmatpush1.bf16.msra.mxu0 %v1360
    %1373 = vmatprep.subr.bf16.mxu0 0
    %1374 = vmatpush1.bf16.msra.mxu0 %v1361
    %1375 = vmatprep.subr.bf16.mxu0 0
    %1376 = vmatpush1.bf16.msra.mxu0 %v1362
    %1377 = vmatprep.subr.bf16.mxu0 0
    %1378 = vmatpush1.bf16.msra.mxu0 %v1363
    %1379 = vmatprep.subr.bf16.mxu0 0
    %1380 = vmatpush1.bf16.msra.mxu0 0
    %1381 = vmatprep.subr.bf16.mxu0 0
    %1382 = vmatpush1.bf16.msra.mxu0 0
    %1383 = vmatprep.subr.bf16.mxu0 0
    %1384 = vmatpush1.bf16.msra.mxu0 0
    %1385 = vmatprep.subr.bf16.mxu0 0
    %1386 = vmatpush1.bf16.msra.mxu0 0
    %1387 = vmatprep.subr.bf16.mxu0 0
    %1388 = vmatpush1.bf16.msra.mxu0 0
    %1389 = vmatprep.subr.bf16.mxu0 0
    %1390 = vmatpush1.bf16.msra.mxu0 0
    %1391 = vmatprep.subr.bf16.mxu0 0
    %1392 = vmatpush1.bf16.msra.mxu0 0
    %1393 = vmatprep.subr.bf16.mxu0 0
    %1394 = vmatpush1.bf16.msra.mxu0 0
    %1395 = vmatprep.subr.bf16.mxu0 0
    %1396 = vmatpush1.bf16.msra.mxu0 0
    %1397 = vmatprep.subr.bf16.mxu0 0
    %1398 = vmatpush1.bf16.msra.mxu0 0
    %1399 = vmatprep.subr.bf16.mxu0 0
    %1400 = vmatpush1.bf16.msra.mxu0 0
    %1401 = vmatprep.subr.bf16.mxu0 0
    %1402 = vmatpush1.bf16.msra.mxu0 0
    %1403 = vmatprep.mubr.bf16.mxu0 0
    %1404 = vmatmul.mubr.bf16.gmra.mrb[0].mxu0 %v1369
    %v1405 = vpop.f32.mrb[0].mxu0
    %v1406 = vadd.f32 0.0, %v1405
    %v1407 = vpop.f32.mrb[0].mxu0
    %v1408 = vpop.f32.mrb[0].mxu0
    %v1409 = vpop.f32.mrb[0].mxu0
    %1410 = vdwg.mxu0
    %v1419 = vunpack.c.l.b16 %v928
    %v1420 = vunpack.c.l.b16 %v929
    %v1421 = vunpack.c.l.b16 %v930
    %v1422 = vunpack.c.l.b16 %v931
    %v1423 = vunpack.c.l.b16 %v932
    %v1424 = vunpack.c.l.b16 %v933
    %v1425 = vunpack.c.l.b16 %v934
    %v1426 = vunpack.c.l.b16 %v935
    %v1427 = vpack.c.b16 %v1420, %v1419
    %v1428 = vpack.c.b16 %v1422, %v1421
    %v1429 = vpack.c.b16 %v1424, %v1423
    %v1430 = vpack.c.b16 %v1426, %v1425
    %v1436 = vsel %vm1032, %v870, 0
    %1438 = vmatprep.subr.bf16.mxu0 0
    %1439 = vmatpush1.bf16.msra.mxu0 %v1427
    %1440 = vmatprep.subr.bf16.mxu0 0
    %1441 = vmatpush1.bf16.msra.mxu0 %v1428
    %1442 = vmatprep.subr.bf16.mxu0 0
    %1443 = vmatpush1.bf16.msra.mxu0 %v1429
    %1444 = vmatprep.subr.bf16.mxu0 0
    %1445 = vmatpush1.bf16.msra.mxu0 %v1430
    %1446 = vmatprep.subr.bf16.mxu0 0
    %1447 = vmatpush1.bf16.msra.mxu0 0
    %1448 = vmatprep.subr.bf16.mxu0 0
    %1449 = vmatpush1.bf16.msra.mxu0 0
    %1450 = vmatprep.subr.bf16.mxu0 0
    %1451 = vmatpush1.bf16.msra.mxu0 0
    %1452 = vmatprep.subr.bf16.mxu0 0
    %1453 = vmatpush1.bf16.msra.mxu0 0
    %1454 = vmatprep.subr.bf16.mxu0 0
    %1455 = vmatpush1.bf16.msra.mxu0 0
    %1456 = vmatprep.subr.bf16.mxu0 0
    %1457 = vmatpush1.bf16.msra.mxu0 0
    %1458 = vmatprep.subr.bf16.mxu0 0
    %1459 = vmatpush1.bf16.msra.mxu0 0
    %1460 = vmatprep.subr.bf16.mxu0 0
    %1461 = vmatpush1.bf16.msra.mxu0 0
    %1462 = vmatprep.subr.bf16.mxu0 0
    %1463 = vmatpush1.bf16.msra.mxu0 0
    %1464 = vmatprep.subr.bf16.mxu0 0
    %1465 = vmatpush1.bf16.msra.mxu0 0
    %1466 = vmatprep.subr.bf16.mxu0 0
    %1467 = vmatpush1.bf16.msra.mxu0 0
    %1468 = vmatprep.subr.bf16.mxu0 0
    %1469 = vmatpush1.bf16.msra.mxu0 0
    %1470 = vmatprep.mubr.bf16.mxu0 0
    %1471 = vmatmul.mubr.bf16.gmra.mrb[0].mxu0 %v1436
    %v1472 = vpop.f32.mrb[0].mxu0
    %v1473 = vadd.f32 0.0, %v1472
    %v1474 = vpop.f32.mrb[0].mxu0
    %v1475 = vpop.f32.mrb[0].mxu0
    %v1476 = vpop.f32.mrb[0].mxu0
    %1477 = vdwg.mxu0
    %v1486 = vunpack.c.l.b16 %v936
    %v1487 = vunpack.c.l.b16 %v937
    %v1488 = vunpack.c.l.b16 %v938
    %v1489 = vunpack.c.l.b16 %v939
    %v1490 = vunpack.c.l.b16 %v940
    %v1491 = vunpack.c.l.b16 %v941
    %v1492 = vunpack.c.l.b16 %v942
    %v1493 = vunpack.c.l.b16 %v943
    %v1494 = vpack.c.b16 %v1487, %v1486
    %v1495 = vpack.c.b16 %v1489, %v1488
    %v1496 = vpack.c.b16 %v1491, %v1490
    %v1497 = vpack.c.b16 %v1493, %v1492
    %v1503 = vsel %vm1032, %v871, 0
    %1505 = vmatprep.subr.bf16.mxu0 0
    %1506 = vmatpush1.bf16.msra.mxu0 %v1494
    %1507 = vmatprep.subr.bf16.mxu0 0
    %1508 = vmatpush1.bf16.msra.mxu0 %v1495
    %1509 = vmatprep.subr.bf16.mxu0 0
    %1510 = vmatpush1.bf16.msra.mxu0 %v1496
    %1511 = vmatprep.subr.bf16.mxu0 0
    %1512 = vmatpush1.bf16.msra.mxu0 %v1497
    %1513 = vmatprep.subr.bf16.mxu0 0
    %1514 = vmatpush1.bf16.msra.mxu0 0
    %1515 = vmatprep.subr.bf16.mxu0 0
    %1516 = vmatpush1.bf16.msra.mxu0 0
    %1517 = vmatprep.subr.bf16.mxu0 0
    %1518 = vmatpush1.bf16.msra.mxu0 0
    %1519 = vmatprep.subr.bf16.mxu0 0
    %1520 = vmatpush1.bf16.msra.mxu0 0
    %1521 = vmatprep.subr.bf16.mxu0 0
    %1522 = vmatpush1.bf16.msra.mxu0 0
    %1523 = vmatprep.subr.bf16.mxu0 0
    %1524 = vmatpush1.bf16.msra.mxu0 0
    %1525 = vmatprep.subr.bf16.mxu0 0
    %1526 = vmatpush1.bf16.msra.mxu0 0
    %1527 = vmatprep.subr.bf16.mxu0 0
    %1528 = vmatpush1.bf16.msra.mxu0 0
    %1529 = vmatprep.subr.bf16.mxu0 0
    %1530 = vmatpush1.bf16.msra.mxu0 0
    %1531 = vmatprep.subr.bf16.mxu0 0
    %1532 = vmatpush1.bf16.msra.mxu0 0
    %1533 = vmatprep.subr.bf16.mxu0 0
    %1534 = vmatpush1.bf16.msra.mxu0 0
    %1535 = vmatprep.subr.bf16.mxu0 0
    %1536 = vmatpush1.bf16.msra.mxu0 0
    %1537 = vmatprep.mubr.bf16.mxu0 0
    %1538 = vmatmul.mubr.bf16.gmra.mrb[0].mxu0 %v1503
    %v1539 = vpop.f32.mrb[0].mxu0
    %v1540 = vadd.f32 0.0, %v1539
    %v1541 = vpop.f32.mrb[0].mxu0
    %v1542 = vpop.f32.mrb[0].mxu0
    %v1543 = vpop.f32.mrb[0].mxu0
    %1544 = vdwg.mxu0
    %v1553 = vunpack.c.l.b16 %v944
    %v1554 = vunpack.c.l.b16 %v945
    %v1555 = vunpack.c.l.b16 %v946
    %v1556 = vunpack.c.l.b16 %v947
    %v1557 = vunpack.c.l.b16 %v948
    %v1558 = vunpack.c.l.b16 %v949
    %v1559 = vunpack.c.l.b16 %v950
    %v1560 = vunpack.c.l.b16 %v951
    %v1561 = vpack.c.b16 %v1554, %v1553
    %v1562 = vpack.c.b16 %v1556, %v1555
    %v1563 = vpack.c.b16 %v1558, %v1557
    %v1564 = vpack.c.b16 %v1560, %v1559
    %v1570 = vsel %vm1032, %v872, 0
    %1572 = vmatprep.subr.bf16.mxu0 0
    %1573 = vmatpush1.bf16.msra.mxu0 %v1561
    %1574 = vmatprep.subr.bf16.mxu0 0
    %1575 = vmatpush1.bf16.msra.mxu0 %v1562
    %1576 = vmatprep.subr.bf16.mxu0 0
    %1577 = vmatpush1.bf16.msra.mxu0 %v1563
    %1578 = vmatprep.subr.bf16.mxu0 0
    %1579 = vmatpush1.bf16.msra.mxu0 %v1564
    %1580 = vmatprep.subr.bf16.mxu0 0
    %1581 = vmatpush1.bf16.msra.mxu0 0
    %1582 = vmatprep.subr.bf16.mxu0 0
    %1583 = vmatpush1.bf16.msra.mxu0 0
    %1584 = vmatprep.subr.bf16.mxu0 0
    %1585 = vmatpush1.bf16.msra.mxu0 0
    %1586 = vmatprep.subr.bf16.mxu0 0
    %1587 = vmatpush1.bf16.msra.mxu0 0
    %1588 = vmatprep.subr.bf16.mxu0 0
    %1589 = vmatpush1.bf16.msra.mxu0 0
    %1590 = vmatprep.subr.bf16.mxu0 0
    %1591 = vmatpush1.bf16.msra.mxu0 0
    %1592 = vmatprep.subr.bf16.mxu0 0
    %1593 = vmatpush1.bf16.msra.mxu0 0
    %1594 = vmatprep.subr.bf16.mxu0 0
    %1595 = vmatpush1.bf16.msra.mxu0 0
    %1596 = vmatprep.subr.bf16.mxu0 0
    %1597 = vmatpush1.bf16.msra.mxu0 0
    %1598 = vmatprep.subr.bf16.mxu0 0
    %1599 = vmatpush1.bf16.msra.mxu0 0
    %1600 = vmatprep.subr.bf16.mxu0 0
    %1601 = vmatpush1.bf16.msra.mxu0 0
    %1602 = vmatprep.subr.bf16.mxu0 0
    %1603 = vmatpush1.bf16.msra.mxu0 0
    %1604 = vmatprep.mubr.bf16.mxu0 0
    %1605 = vmatmul.mubr.bf16.gmra.mrb[0].mxu0 %v1570
    %v1606 = vpop.f32.mrb[0].mxu0
    %v1607 = vadd.f32 0.0, %v1606
    %v1608 = vpop.f32.mrb[0].mxu0
    %v1609 = vpop.f32.mrb[0].mxu0
    %v1610 = vpop.f32.mrb[0].mxu0
    %1611 = vdwg.mxu0
    %v1620 = vunpack.c.l.b16 %v952
    %v1621 = vunpack.c.l.b16 %v953
    %v1622 = vunpack.c.l.b16 %v954
    %v1623 = vunpack.c.l.b16 %v955
    %v1624 = vunpack.c.l.b16 %v956
    %v1625 = vunpack.c.l.b16 %v957
    %v1626 = vunpack.c.l.b16 %v958
    %v1627 = vunpack.c.l.b16 %v959
    %v1628 = vpack.c.b16 %v1621, %v1620
    %v1629 = vpack.c.b16 %v1623, %v1622
    %v1630 = vpack.c.b16 %v1625, %v1624
    %v1631 = vpack.c.b16 %v1627, %v1626
    %v1637 = vsel %vm1032, %v873, 0
    %1639 = vmatprep.subr.bf16.mxu0 0
    %1640 = vmatpush1.bf16.msra.mxu0 %v1628
    %1641 = vmatprep.subr.bf16.mxu0 0
    %1642 = vmatpush1.bf16.msra.mxu0 %v1629
    %1643 = vmatprep.subr.bf16.mxu0 0
    %1644 = vmatpush1.bf16.msra.mxu0 %v1630
    %1645 = vmatprep.subr.bf16.mxu0 0
    %1646 = vmatpush1.bf16.msra.mxu0 %v1631
    %1647 = vmatprep.subr.bf16.mxu0 0
    %1648 = vmatpush1.bf16.msra.mxu0 0
    %1649 = vmatprep.subr.bf16.mxu0 0
    %1650 = vmatpush1.bf16.msra.mxu0 0
    %1651 = vmatprep.subr.bf16.mxu0 0
    %1652 = vmatpush1.bf16.msra.mxu0 0
    %1653 = vmatprep.subr.bf16.mxu0 0
    %1654 = vmatpush1.bf16.msra.mxu0 0
    %1655 = vmatprep.subr.bf16.mxu0 0
    %1656 = vmatpush1.bf16.msra.mxu0 0
    %1657 = vmatprep.subr.bf16.mxu0 0
    %1658 = vmatpush1.bf16.msra.mxu0 0
    %1659 = vmatprep.subr.bf16.mxu0 0
    %1660 = vmatpush1.bf16.msra.mxu0 0
    %1661 = vmatprep.subr.bf16.mxu0 0
    %1662 = vmatpush1.bf16.msra.mxu0 0
    %1663 = vmatprep.subr.bf16.mxu0 0
    %1664 = vmatpush1.bf16.msra.mxu0 0
    %1665 = vmatprep.subr.bf16.mxu0 0
    %1666 = vmatpush1.bf16.msra.mxu0 0
    %1667 = vmatprep.subr.bf16.mxu0 0
    %1668 = vmatpush1.bf16.msra.mxu0 0
    %1669 = vmatprep.subr.bf16.mxu0 0
    %1670 = vmatpush1.bf16.msra.mxu0 0
    %1671 = vmatprep.mubr.bf16.mxu0 0
    %1672 = vmatmul.mubr.bf16.gmra.mrb[0].mxu0 %v1637
    %v1673 = vpop.f32.mrb[0].mxu0
    %v1674 = vadd.f32 0.0, %v1673
    %v1675 = vpop.f32.mrb[0].mxu0
    %v1676 = vpop.f32.mrb[0].mxu0
    %v1677 = vpop.f32.mrb[0].mxu0
    %1678 = vdwg.mxu0
    %v1687 = vunpack.c.l.b16 %v960
    %v1688 = vunpack.c.l.b16 %v961
    %v1689 = vunpack.c.l.b16 %v962
    %v1690 = vunpack.c.l.b16 %v963
    %v1691 = vunpack.c.l.b16 %v964
    %v1692 = vunpack.c.l.b16 %v965
    %v1693 = vunpack.c.l.b16 %v966
    %v1694 = vunpack.c.l.b16 %v967
    %v1695 = vpack.c.b16 %v1688, %v1687
    %v1696 = vpack.c.b16 %v1690, %v1689
    %v1697 = vpack.c.b16 %v1692, %v1691
    %v1698 = vpack.c.b16 %v1694, %v1693
    %v1704 = vsel %vm1032, %v874, 0
    %1706 = vmatprep.subr.bf16.mxu0 0
    %1707 = vmatpush1.bf16.msra.mxu0 %v1695
    %1708 = vmatprep.subr.bf16.mxu0 0
    %1709 = vmatpush1.bf16.msra.mxu0 %v1696
    %1710 = vmatprep.subr.bf16.mxu0 0
    %1711 = vmatpush1.bf16.msra.mxu0 %v1697
    %1712 = vmatprep.subr.bf16.mxu0 0
    %1713 = vmatpush1.bf16.msra.mxu0 %v1698
    %1714 = vmatprep.subr.bf16.mxu0 0
    %1715 = vmatpush1.bf16.msra.mxu0 0
    %1716 = vmatprep.subr.bf16.mxu0 0
    %1717 = vmatpush1.bf16.msra.mxu0 0
    %1718 = vmatprep.subr.bf16.mxu0 0
    %1719 = vmatpush1.bf16.msra.mxu0 0
    %1720 = vmatprep.subr.bf16.mxu0 0
    %1721 = vmatpush1.bf16.msra.mxu0 0
    %1722 = vmatprep.subr.bf16.mxu0 0
    %1723 = vmatpush1.bf16.msra.mxu0 0
    %1724 = vmatprep.subr.bf16.mxu0 0
    %1725 = vmatpush1.bf16.msra.mxu0 0
    %1726 = vmatprep.subr.bf16.mxu0 0
    %1727 = vmatpush1.bf16.msra.mxu0 0
    %1728 = vmatprep.subr.bf16.mxu0 0
    %1729 = vmatpush1.bf16.msra.mxu0 0
    %1730 = vmatprep.subr.bf16.mxu0 0
    %1731 = vmatpush1.bf16.msra.mxu0 0
    %1732 = vmatprep.subr.bf16.mxu0 0
    %1733 = vmatpush1.bf16.msra.mxu0 0
    %1734 = vmatprep.subr.bf16.mxu0 0
    %1735 = vmatpush1.bf16.msra.mxu0 0
    %1736 = vmatprep.subr.bf16.mxu0 0
    %1737 = vmatpush1.bf16.msra.mxu0 0
    %1738 = vmatprep.mubr.bf16.mxu0 0
    %1739 = vmatmul.mubr.bf16.gmra.mrb[0].mxu0 %v1704
    %v1740 = vpop.f32.mrb[0].mxu0
    %v1741 = vadd.f32 0.0, %v1740
    %v1742 = vpop.f32.mrb[0].mxu0
    %v1743 = vpop.f32.mrb[0].mxu0
    %v1744 = vpop.f32.mrb[0].mxu0
    %1745 = vdwg.mxu0
    %v1754 = vunpack.c.l.b16 %v968
    %v1755 = vunpack.c.l.b16 %v969
    %v1756 = vunpack.c.l.b16 %v970
    %v1757 = vunpack.c.l.b16 %v971
    %v1758 = vunpack.c.l.b16 %v972
    %v1759 = vunpack.c.l.b16 %v973
    %v1760 = vunpack.c.l.b16 %v974
    %v1761 = vunpack.c.l.b16 %v975
    %v1762 = vpack.c.b16 %v1755, %v1754
    %v1763 = vpack.c.b16 %v1757, %v1756
    %v1764 = vpack.c.b16 %v1759, %v1758
    %v1765 = vpack.c.b16 %v1761, %v1760
    %v1771 = vsel %vm1032, %v875, 0
    %1773 = vmatprep.subr.bf16.mxu0 0
    %1774 = vmatpush1.bf16.msra.mxu0 %v1762
    %1775 = vmatprep.subr.bf16.mxu0 0
    %1776 = vmatpush1.bf16.msra.mxu0 %v1763
    %1777 = vmatprep.subr.bf16.mxu0 0
    %1778 = vmatpush1.bf16.msra.mxu0 %v1764
    %1779 = vmatprep.subr.bf16.mxu0 0
    %1780 = vmatpush1.bf16.msra.mxu0 %v1765
    %1781 = vmatprep.subr.bf16.mxu0 0
    %1782 = vmatpush1.bf16.msra.mxu0 0
    %1783 = vmatprep.subr.bf16.mxu0 0
    %1784 = vmatpush1.bf16.msra.mxu0 0
    %1785 = vmatprep.subr.bf16.mxu0 0
    %1786 = vmatpush1.bf16.msra.mxu0 0
    %1787 = vmatprep.subr.bf16.mxu0 0
    %1788 = vmatpush1.bf16.msra.mxu0 0
    %1789 = vmatprep.subr.bf16.mxu0 0
    %1790 = vmatpush1.bf16.msra.mxu0 0
    %1791 = vmatprep.subr.bf16.mxu0 0
    %1792 = vmatpush1.bf16.msra.mxu0 0
    %1793 = vmatprep.subr.bf16.mxu0 0
    %1794 = vmatpush1.bf16.msra.mxu0 0
    %1795 = vmatprep.subr.bf16.mxu0 0
    %1796 = vmatpush1.bf16.msra.mxu0 0
    %1797 = vmatprep.subr.bf16.mxu0 0
    %1798 = vmatpush1.bf16.msra.mxu0 0
    %1799 = vmatprep.subr.bf16.mxu0 0
    %1800 = vmatpush1.bf16.msra.mxu0 0
    %1801 = vmatprep.subr.bf16.mxu0 0
    %1802 = vmatpush1.bf16.msra.mxu0 0
    %1803 = vmatprep.subr.bf16.mxu0 0
    %1804 = vmatpush1.bf16.msra.mxu0 0
    %1805 = vmatprep.mubr.bf16.mxu0 0
    %1806 = vmatmul.mubr.bf16.gmra.mrb[0].mxu0 %v1771
    %v1807 = vpop.f32.mrb[0].mxu0
    %v1808 = vadd.f32 0.0, %v1807
    %v1809 = vpop.f32.mrb[0].mxu0
    %v1810 = vpop.f32.mrb[0].mxu0
    %v1811 = vpop.f32.mrb[0].mxu0
    %1812 = vdwg.mxu0
    %v1821 = vunpack.c.l.b16 %v976
    %v1822 = vunpack.c.l.b16 %v977
    %v1823 = vunpack.c.l.b16 %v978
    %v1824 = vunpack.c.l.b16 %v979
    %v1825 = vunpack.c.l.b16 %v980
    %v1826 = vunpack.c.l.b16 %v981
    %v1827 = vunpack.c.l.b16 %v982
    %v1828 = vunpack.c.l.b16 %v983
    %v1829 = vpack.c.b16 %v1822, %v1821
    %v1830 = vpack.c.b16 %v1824, %v1823
    %v1831 = vpack.c.b16 %v1826, %v1825
    %v1832 = vpack.c.b16 %v1828, %v1827
    %v1838 = vsel %vm1032, %v876, 0
    %1840 = vmatprep.subr.bf16.mxu0 0
    %1841 = vmatpush1.bf16.msra.mxu0 %v1829
    %1842 = vmatprep.subr.bf16.mxu0 0
    %1843 = vmatpush1.bf16.msra.mxu0 %v1830
    %1844 = vmatprep.subr.bf16.mxu0 0
    %1845 = vmatpush1.bf16.msra.mxu0 %v1831
    %1846 = vmatprep.subr.bf16.mxu0 0
    %1847 = vmatpush1.bf16.msra.mxu0 %v1832
    %1848 = vmatprep.subr.bf16.mxu0 0
    %1849 = vmatpush1.bf16.msra.mxu0 0
    %1850 = vmatprep.subr.bf16.mxu0 0
    %1851 = vmatpush1.bf16.msra.mxu0 0
    %1852 = vmatprep.subr.bf16.mxu0 0
    %1853 = vmatpush1.bf16.msra.mxu0 0
    %1854 = vmatprep.subr.bf16.mxu0 0
    %1855 = vmatpush1.bf16.msra.mxu0 0
    %1856 = vmatprep.subr.bf16.mxu0 0
    %1857 = vmatpush1.bf16.msra.mxu0 0
    %1858 = vmatprep.subr.bf16.mxu0 0
    %1859 = vmatpush1.bf16.msra.mxu0 0
    %1860 = vmatprep.subr.bf16.mxu0 0
    %1861 = vmatpush1.bf16.msra.mxu0 0
    %1862 = vmatprep.subr.bf16.mxu0 0
    %1863 = vmatpush1.bf16.msra.mxu0 0
    %1864 = vmatprep.subr.bf16.mxu0 0
    %1865 = vmatpush1.bf16.msra.mxu0 0
    %1866 = vmatprep.subr.bf16.mxu0 0
    %1867 = vmatpush1.bf16.msra.mxu0 0
    %1868 = vmatprep.subr.bf16.mxu0 0
    %1869 = vmatpush1.bf16.msra.mxu0 0
    %1870 = vmatprep.subr.bf16.mxu0 0
    %1871 = vmatpush1.bf16.msra.mxu0 0
    %1872 = vmatprep.mubr.bf16.mxu0 0
    %1873 = vmatmul.mubr.bf16.gmra.mrb[0].mxu0 %v1838
    %v1874 = vpop.f32.mrb[0].mxu0
    %v1875 = vadd.f32 0.0, %v1874
    %v1876 = vpop.f32.mrb[0].mxu0
    %v1877 = vpop.f32.mrb[0].mxu0
    %v1878 = vpop.f32.mrb[0].mxu0
    %1879 = vdwg.mxu0
    %v1888 = vunpack.c.l.b16 %v984
    %v1889 = vunpack.c.l.b16 %v985
    %v1890 = vunpack.c.l.b16 %v986
    %v1891 = vunpack.c.l.b16 %v987
    %v1892 = vunpack.c.l.b16 %v988
    %v1893 = vunpack.c.l.b16 %v989
    %v1894 = vunpack.c.l.b16 %v990
    %v1895 = vunpack.c.l.b16 %v991
    %v1896 = vpack.c.b16 %v1889, %v1888
    %v1897 = vpack.c.b16 %v1891, %v1890
    %v1898 = vpack.c.b16 %v1893, %v1892
    %v1899 = vpack.c.b16 %v1895, %v1894
    %v1905 = vsel %vm1032, %v877, 0
    %1907 = vmatprep.subr.bf16.mxu0 0
    %1908 = vmatpush1.bf16.msra.mxu0 %v1896
    %1909 = vmatprep.subr.bf16.mxu0 0
    %1910 = vmatpush1.bf16.msra.mxu0 %v1897
    %1911 = vmatprep.subr.bf16.mxu0 0
    %1912 = vmatpush1.bf16.msra.mxu0 %v1898
    %1913 = vmatprep.subr.bf16.mxu0 0
    %1914 = vmatpush1.bf16.msra.mxu0 %v1899
    %1915 = vmatprep.subr.bf16.mxu0 0
    %1916 = vmatpush1.bf16.msra.mxu0 0
    %1917 = vmatprep.subr.bf16.mxu0 0
    %1918 = vmatpush1.bf16.msra.mxu0 0
    %1919 = vmatprep.subr.bf16.mxu0 0
    %1920 = vmatpush1.bf16.msra.mxu0 0
    %1921 = vmatprep.subr.bf16.mxu0 0
    %1922 = vmatpush1.bf16.msra.mxu0 0
    %1923 = vmatprep.subr.bf16.mxu0 0
    %1924 = vmatpush1.bf16.msra.mxu0 0
    %1925 = vmatprep.subr.bf16.mxu0 0
    %1926 = vmatpush1.bf16.msra.mxu0 0
    %1927 = vmatprep.subr.bf16.mxu0 0
    %1928 = vmatpush1.bf16.msra.mxu0 0
    %1929 = vmatprep.subr.bf16.mxu0 0
    %1930 = vmatpush1.bf16.msra.mxu0 0
    %1931 = vmatprep.subr.bf16.mxu0 0
    %1932 = vmatpush1.bf16.msra.mxu0 0
    %1933 = vmatprep.subr.bf16.mxu0 0
    %1934 = vmatpush1.bf16.msra.mxu0 0
    %1935 = vmatprep.subr.bf16.mxu0 0
    %1936 = vmatpush1.bf16.msra.mxu0 0
    %1937 = vmatprep.subr.bf16.mxu0 0
    %1938 = vmatpush1.bf16.msra.mxu0 0
    %1939 = vmatprep.mubr.bf16.mxu0 0
    %1940 = vmatmul.mubr.bf16.gmra.mrb[0].mxu0 %v1905
    %v1941 = vpop.f32.mrb[0].mxu0
    %v1942 = vadd.f32 0.0, %v1941
    %v1943 = vpop.f32.mrb[0].mxu0
    %v1944 = vpop.f32.mrb[0].mxu0
    %v1945 = vpop.f32.mrb[0].mxu0
    %1946 = vdwg.mxu0
    %v1955 = vunpack.c.l.b16 %v992
    %v1956 = vunpack.c.l.b16 %v993
    %v1957 = vunpack.c.l.b16 %v994
    %v1958 = vunpack.c.l.b16 %v995
    %v1959 = vunpack.c.l.b16 %v996
    %v1960 = vunpack.c.l.b16 %v997
    %v1961 = vunpack.c.l.b16 %v998
    %v1962 = vunpack.c.l.b16 %v999
    %v1963 = vpack.c.b16 %v1956, %v1955
    %v1964 = vpack.c.b16 %v1958, %v1957
    %v1965 = vpack.c.b16 %v1960, %v1959
    %v1966 = vpack.c.b16 %v1962, %v1961
    %v1972 = vsel %vm1032, %v878, 0
    %1974 = vmatprep.subr.bf16.mxu0 0
    %1975 = vmatpush1.bf16.msra.mxu0 %v1963
    %1976 = vmatprep.subr.bf16.mxu0 0
    %1977 = vmatpush1.bf16.msra.mxu0 %v1964
    %1978 = vmatprep.subr.bf16.mxu0 0
    %1979 = vmatpush1.bf16.msra.mxu0 %v1965
    %1980 = vmatprep.subr.bf16.mxu0 0
    %1981 = vmatpush1.bf16.msra.mxu0 %v1966
    %1982 = vmatprep.subr.bf16.mxu0 0
    %1983 = vmatpush1.bf16.msra.mxu0 0
    %1984 = vmatprep.subr.bf16.mxu0 0
    %1985 = vmatpush1.bf16.msra.mxu0 0
    %1986 = vmatprep.subr.bf16.mxu0 0
    %1987 = vmatpush1.bf16.msra.mxu0 0
    %1988 = vmatprep.subr.bf16.mxu0 0
    %1989 = vmatpush1.bf16.msra.mxu0 0
    %1990 = vmatprep.subr.bf16.mxu0 0
    %1991 = vmatpush1.bf16.msra.mxu0 0
    %1992 = vmatprep.subr.bf16.mxu0 0
    %1993 = vmatpush1.bf16.msra.mxu0 0
    %1994 = vmatprep.subr.bf16.mxu0 0
    %1995 = vmatpush1.bf16.msra.mxu0 0
    %1996 = vmatprep.subr.bf16.mxu0 0
    %1997 = vmatpush1.bf16.msra.mxu0 0
    %1998 = vmatprep.subr.bf16.mxu0 0
    %1999 = vmatpush1.bf16.msra.mxu0 0
    %2000 = vmatprep.subr.bf16.mxu0 0
    %2001 = vmatpush1.bf16.msra.mxu0 0
    %2002 = vmatprep.subr.bf16.mxu0 0
    %2003 = vmatpush1.bf16.msra.mxu0 0
    %2004 = vmatprep.subr.bf16.mxu0 0
    %2005 = vmatpush1.bf16.msra.mxu0 0
    %2006 = vmatprep.mubr.bf16.mxu0 0
    %2007 = vmatmul.mubr.bf16.gmra.mrb[0].mxu0 %v1972
    %v2008 = vpop.f32.mrb[0].mxu0
    %v2009 = vadd.f32 0.0, %v2008
    %v2010 = vpop.f32.mrb[0].mxu0
    %v2011 = vpop.f32.mrb[0].mxu0
    %v2012 = vpop.f32.mrb[0].mxu0
    %2013 = vdwg.mxu0
    %v2022 = vunpack.c.l.b16 %v1000
    %v2023 = vunpack.c.l.b16 %v1001
    %v2024 = vunpack.c.l.b16 %v1002
    %v2025 = vunpack.c.l.b16 %v1003
    %v2026 = vunpack.c.l.b16 %v1004
    %v2027 = vunpack.c.l.b16 %v1005
    %v2028 = vunpack.c.l.b16 %v1006
    %v2029 = vunpack.c.l.b16 %v1007
    %v2030 = vpack.c.b16 %v2023, %v2022
    %v2031 = vpack.c.b16 %v2025, %v2024
    %v2032 = vpack.c.b16 %v2027, %v2026
    %v2033 = vpack.c.b16 %v2029, %v2028
    %v2039 = vsel %vm1032, %v879, 0
    %2041 = vmatprep.subr.bf16.mxu0 0
    %2042 = vmatpush1.bf16.msra.mxu0 %v2030
    %2043 = vmatprep.subr.bf16.mxu0 0
    %2044 = vmatpush1.bf16.msra.mxu0 %v2031
    %2045 = vmatprep.subr.bf16.mxu0 0
    %2046 = vmatpush1.bf16.msra.mxu0 %v2032
    %2047 = vmatprep.subr.bf16.mxu0 0
    %2048 = vmatpush1.bf16.msra.mxu0 %v2033
    %2049 = vmatprep.subr.bf16.mxu0 0
    %2050 = vmatpush1.bf16.msra.mxu0 0
    %2051 = vmatprep.subr.bf16.mxu0 0
    %2052 = vmatpush1.bf16.msra.mxu0 0
    %2053 = vmatprep.subr.bf16.mxu0 0
    %2054 = vmatpush1.bf16.msra.mxu0 0
    %2055 = vmatprep.subr.bf16.mxu0 0
    %2056 = vmatpush1.bf16.msra.mxu0 0
    %2057 = vmatprep.subr.bf16.mxu0 0
    %2058 = vmatpush1.bf16.msra.mxu0 0
    %2059 = vmatprep.subr.bf16.mxu0 0
    %2060 = vmatpush1.bf16.msra.mxu0 0
    %2061 = vmatprep.subr.bf16.mxu0 0
    %2062 = vmatpush1.bf16.msra.mxu0 0
    %2063 = vmatprep.subr.bf16.mxu0 0
    %2064 = vmatpush1.bf16.msra.mxu0 0
    %2065 = vmatprep.subr.bf16.mxu0 0
    %2066 = vmatpush1.bf16.msra.mxu0 0
    %2067 = vmatprep.subr.bf16.mxu0 0
    %2068 = vmatpush1.bf16.msra.mxu0 0
    %2069 = vmatprep.subr.bf16.mxu0 0
    %2070 = vmatpush1.bf16.msra.mxu0 0
    %2071 = vmatprep.subr.bf16.mxu0 0
    %2072 = vmatpush1.bf16.msra.mxu0 0
    %2073 = vmatprep.mubr.bf16.mxu0 0
    %2074 = vmatmul.mubr.bf16.gmra.mrb[0].mxu0 %v2039
    %v2075 = vpop.f32.mrb[0].mxu0
    %v2076 = vadd.f32 0.0, %v2075
    %v2077 = vpop.f32.mrb[0].mxu0
    %v2078 = vpop.f32.mrb[0].mxu0
    %v2079 = vpop.f32.mrb[0].mxu0
    %2080 = vdwg.mxu0
    %v2097 = vrot.slane %v1138, 7
    %vm2098 = vcmask 1041409
    %v2099 = vsel %vm2098, %v2097, %v1071
    %v2100 = vrot.slane %v1205, 6
    %vm2101 = vcmask 1042434
    %v2102 = vsel %vm2101, %v2100, %v2099
    %v2103 = vrot.slane %v1272, 5
    %vm2104 = vcmask 1043459
    %v2105 = vsel %vm2104, %v2103, %v2102
    %v2106 = vrot.slane %v1339, 4
    %vm2107 = vcmask 1044484
    %v2108 = vsel %vm2107, %v2106, %v2105
    %v2109 = vrot.slane %v1406, 3
    %vm2110 = vcmask 1045509
    %v2111 = vsel %vm2110, %v2109, %v2108
    %v2112 = vrot.slane %v1473, 2
    %vm2113 = vcmask 1046534
    %v2114 = vsel %vm2113, %v2112, %v2111
    %v2115 = vrot.slane %v1540, 1
    %vm2116 = vcmask 1047559
    %v2117 = vsel %vm2116, %v2115, %v2114
    %v2118 = vrot.slane %v1674, 7
    %v2119 = vsel %vm2098, %v2118, %v1607
    %v2120 = vrot.slane %v1741, 6
    %v2121 = vsel %vm2101, %v2120, %v2119
    %v2122 = vrot.slane %v1808, 5
    %v2123 = vsel %vm2104, %v2122, %v2121
    %v2124 = vrot.slane %v1875, 4
    %v2125 = vsel %vm2107, %v2124, %v2123
    %v2126 = vrot.slane %v1942, 3
    %v2127 = vsel %vm2110, %v2126, %v2125
    %v2128 = vrot.slane %v2009, 2
    %v2129 = vsel %vm2113, %v2128, %v2127
    %v2130 = vrot.slane %v2076, 1
    %v2131 = vsel %vm2116, %v2130, %v2129
    %2134 = vrot.lane.b32.xlu0 %v2117, 96
    %v2135 = vpop.permute.xlu0 %2134
    %2136 = vrot.lane.b32.xlu0 %v2131, 96
    %v2137 = vpop.permute.xlu0 %2136
    %v2140 = vrot.slane %v1071, 1
    %v2141 = vsel %vm2098, %v1138, %v2140
    %v2142 = vrot.slane %v1205, 7
    %v2143 = vsel %vm2101, %v2142, %v2141
    %v2144 = vrot.slane %v1272, 6
    %v2145 = vsel %vm2104, %v2144, %v2143
    %v2146 = vrot.slane %v1339, 5
    %v2147 = vsel %vm2107, %v2146, %v2145
    %v2148 = vrot.slane %v1406, 4
    %v2149 = vsel %vm2110, %v2148, %v2147
    %v2150 = vrot.slane %v1473, 3
    %v2151 = vsel %vm2113, %v2150, %v2149
    %v2152 = vrot.slane %v1540, 2
    %v2153 = vsel %vm2116, %v2152, %v2151
    %v2154 = vrot.slane %v1607, 1
    %v2155 = vsel %vm2098, %v1674, %v2154
    %v2156 = vrot.slane %v1741, 7
    %v2157 = vsel %vm2101, %v2156, %v2155
    %v2158 = vrot.slane %v1808, 6
    %v2159 = vsel %vm2104, %v2158, %v2157
    %v2160 = vrot.slane %v1875, 5
    %v2161 = vsel %vm2107, %v2160, %v2159
    %v2162 = vrot.slane %v1942, 4
    %v2163 = vsel %vm2110, %v2162, %v2161
    %v2164 = vrot.slane %v2009, 3
    %v2165 = vsel %vm2113, %v2164, %v2163
    %v2166 = vrot.slane %v2076, 2
    %v2167 = vsel %vm2116, %v2166, %v2165
    %2168 = vrot.lane.b32.xlu0 %v2153, 96
    %v2169 = vpop.permute.xlu0 %2168
    %2170 = vrot.lane.b32.xlu0 %v2167, 96
    %v2171 = vpop.permute.xlu0 %2170
    %2172 = vrot.lane.b32.xlu0 %v2153, 32
    %v2173 = vpop.permute.xlu0 %2172
    %2174 = vrot.lane.b32.xlu0 %v2167, 32
    %v2175 = vpop.permute.xlu0 %2174
    %2176 = vrot.lane.b32.xlu0 %v2169, 32
    %v2177 = vpop.permute.xlu0 %2176
    %2178 = vrot.lane.b32.xlu0 %v2171, 32
    %v2179 = vpop.permute.xlu0 %2178
    %v2184 = vsel %vm445, %v2117, %v2173
    %v2185 = vsel %vm445, %v2131, %v2175
    %v2186 = vsel %vm445, %v2135, %v2177
    %v2187 = vsel %vm445, %v2137, %v2179
    %v2188 = vpack.c.bf16 %v2185, %v2184
    %v2189 = vpack.c.bf16 %v2187, %v2186
    %v2190 = vld [vmem:[%s6] sm:$0xf]
    %v2191 = vld [vmem:[%s6 + $0x4] sm:$0xf]
    %v2192 = vld [vmem:[%s6 + $0x8] sm:$0xf]
    %v2193 = vld [vmem:[%s6 + $0xc] sm:$0xf]
    %v2194 = vld [vmem:[%s6 + $0x10] sm:$0xf]
    %v2195 = vld [vmem:[%s6 + $0x14] sm:$0xf]
    %v2196 = vld [vmem:[%s6 + $0x18] sm:$0xf]
    %v2197 = vld [vmem:[%s6 + $0x1c] sm:$0xf]
    %v2198 = vld [vmem:[%s7] sm:$0x1]
    %v2200 = vlaneseq
    %v2201 = vshrl.u32 %v2200, 7
    %v2202 = vsub.s32 0, %v2201
    %v2203 = vrot.slane %v2198, %v2202
    %v2213 = vunpack.c.l.b16 %v2190
    %v2214 = vunpack.c.l.b16 %v2191
    %v2215 = vunpack.c.l.b16 %v2192
    %v2216 = vunpack.c.l.b16 %v2193
    %v2217 = vunpack.c.l.b16 %v2194
    %v2218 = vunpack.c.l.b16 %v2195
    %v2219 = vunpack.c.l.b16 %v2196
    %v2220 = vunpack.c.l.b16 %v2197
    %v2221 = vpack.c.b16 %v2214, %v2213
    %v2222 = vpack.c.b16 %v2216, %v2215
    %v2223 = vpack.c.b16 %v2218, %v2217
    %v2224 = vpack.c.b16 %v2220, %v2219
    %v2230 = vsel %vm1032, %v462, 0
    %v2233 = vsel %vm1032, %v463, 0
    %v2236 = vsel %vm1032, %v464, 0
    %v2239 = vsel %vm1032, %v465, 0
    %v2242 = vsel %vm1032, %v466, 0
    %v2245 = vsel %vm1032, %v467, 0
    %v2248 = vsel %vm1032, %v468, 0
    %v2251 = vsel %vm1032, %v469, 0
    %2253 = vmatprep.subr.bf16.mxu0 0
    %2254 = vmatpush1.bf16.msra.mxu0 %v2221
    %2255 = vmatprep.subr.bf16.mxu0 0
    %2256 = vmatpush1.bf16.msra.mxu0 %v2222
    %2257 = vmatprep.subr.bf16.mxu0 0
    %2258 = vmatpush1.bf16.msra.mxu0 %v2223
    %2259 = vmatprep.subr.bf16.mxu0 0
    %2260 = vmatpush1.bf16.msra.mxu0 %v2224
    %2261 = vmatprep.subr.bf16.mxu0 0
    %2262 = vmatpush1.bf16.msra.mxu0 0
    %2263 = vmatprep.subr.bf16.mxu0 0
    %2264 = vmatpush1.bf16.msra.mxu0 0
    %2265 = vmatprep.subr.bf16.mxu0 0
    %2266 = vmatpush1.bf16.msra.mxu0 0
    %2267 = vmatprep.subr.bf16.mxu0 0
    %2268 = vmatpush1.bf16.msra.mxu0 0
    %2269 = vmatprep.subr.bf16.mxu0 0
    %2270 = vmatpush1.bf16.msra.mxu0 0
    %2271 = vmatprep.subr.bf16.mxu0 0
    %2272 = vmatpush1.bf16.msra.mxu0 0
    %2273 = vmatprep.subr.bf16.mxu0 0
    %2274 = vmatpush1.bf16.msra.mxu0 0
    %2275 = vmatprep.subr.bf16.mxu0 0
    %2276 = vmatpush1.bf16.msra.mxu0 0
    %2277 = vmatprep.subr.bf16.mxu0 0
    %2278 = vmatpush1.bf16.msra.mxu0 0
    %2279 = vmatprep.subr.bf16.mxu0 0
    %2280 = vmatpush1.bf16.msra.mxu0 0
    %2281 = vmatprep.subr.bf16.mxu0 0
    %2282 = vmatpush1.bf16.msra.mxu0 0
    %2283 = vmatprep.subr.bf16.mxu0 0
    %2284 = vmatpush1.bf16.msra.mxu0 0
    %2285 = vmatprep.mubr.bf16.mxu0 0
    %2286 = vmatmul.mubr.bf16.gmra.mrb[0].mxu0 %v2230
    %v2287 = vpop.f32.mrb[0].mxu0
    %v2288 = vadd.f32 %v2203, %v2287
    %v2289 = vpop.f32.mrb[0].mxu0
    %v2290 = vpop.f32.mrb[0].mxu0
    %v2291 = vadd.f32 %v2203, %v2290
    %v2292 = vpop.f32.mrb[0].mxu0
    %2293 = vmatprep.mubr.bf16.mxu0 0
    %2294 = vmatmul.mubr.bf16.gmra.mrb[0].mxu0 %v2233
    %v2295 = vpop.f32.mrb[0].mxu0
    %v2296 = vadd.f32 %v2203, %v2295
    %v2297 = vpop.f32.mrb[0].mxu0
    %v2298 = vpop.f32.mrb[0].mxu0
    %v2299 = vadd.f32 %v2203, %v2298
    %v2300 = vpop.f32.mrb[0].mxu0
    %2301 = vmatprep.mubr.bf16.mxu0 0
    %2302 = vmatmul.mubr.bf16.gmra.mrb[0].mxu0 %v2236
    %v2303 = vpop.f32.mrb[0].mxu0
    %v2304 = vadd.f32 %v2203, %v2303
    %v2305 = vpop.f32.mrb[0].mxu0
    %v2306 = vpop.f32.mrb[0].mxu0
    %v2307 = vadd.f32 %v2203, %v2306
    %v2308 = vpop.f32.mrb[0].mxu0
    %2309 = vmatprep.mubr.bf16.mxu0 0
    %2310 = vmatmul.mubr.bf16.gmra.mrb[0].mxu0 %v2239
    %v2311 = vpop.f32.mrb[0].mxu0
    %v2312 = vadd.f32 %v2203, %v2311
    %v2313 = vpop.f32.mrb[0].mxu0
    %v2314 = vpop.f32.mrb[0].mxu0
    %v2315 = vadd.f32 %v2203, %v2314
    %v2316 = vpop.f32.mrb[0].mxu0
    %2317 = vmatprep.mubr.bf16.mxu0 0
    %2318 = vmatmul.mubr.bf16.gmra.mrb[0].mxu0 %v2242
    %v2319 = vpop.f32.mrb[0].mxu0
    %v2320 = vadd.f32 %v2203, %v2319
    %v2321 = vpop.f32.mrb[0].mxu0
    %v2322 = vpop.f32.mrb[0].mxu0
    %v2323 = vadd.f32 %v2203, %v2322
    %v2324 = vpop.f32.mrb[0].mxu0
    %2325 = vmatprep.mubr.bf16.mxu0 0
    %2326 = vmatmul.mubr.bf16.gmra.mrb[0].mxu0 %v2245
    %v2327 = vpop.f32.mrb[0].mxu0
    %v2328 = vadd.f32 %v2203, %v2327
    %v2329 = vpop.f32.mrb[0].mxu0
    %v2330 = vpop.f32.mrb[0].mxu0
    %v2331 = vadd.f32 %v2203, %v2330
    %v2332 = vpop.f32.mrb[0].mxu0
    %2333 = vmatprep.mubr.bf16.mxu0 0
    %2334 = vmatmul.mubr.bf16.gmra.mrb[0].mxu0 %v2248
    %v2335 = vpop.f32.mrb[0].mxu0
    %v2336 = vadd.f32 %v2203, %v2335
    %v2337 = vpop.f32.mrb[0].mxu0
    %v2338 = vpop.f32.mrb[0].mxu0
    %v2339 = vadd.f32 %v2203, %v2338
    %v2340 = vpop.f32.mrb[0].mxu0
    %2341 = vmatprep.mubr.bf16.mxu0 0
    %2342 = vmatmul.mubr.bf16.gmra.mrb[0].mxu0 %v2251
    %v2343 = vpop.f32.mrb[0].mxu0
    %v2344 = vadd.f32 %v2203, %v2343
    %v2345 = vpop.f32.mrb[0].mxu0
    %v2346 = vpop.f32.mrb[0].mxu0
    %v2347 = vadd.f32 %v2203, %v2346
    %v2348 = vpop.f32.mrb[0].mxu0
    %2349 = vdwg.mxu0
    %v2366 = vunpack.c.l.b16 %v54
    %v2367 = vunpack.c.l.b16 %v55
    %v2368 = vunpack.c.l.b16 %v56
    %v2369 = vunpack.c.l.b16 %v57
    %v2370 = vunpack.c.l.b16 %v58
    %v2371 = vunpack.c.l.b16 %v59
    %v2372 = vunpack.c.l.b16 %v60
    %v2373 = vunpack.c.l.b16 %v61
    %v2374 = vunpack.c.l.b16 %v62
    %v2375 = vunpack.c.l.b16 %v63
    %v2376 = vunpack.c.l.b16 %v64
    %v2377 = vunpack.c.l.b16 %v65
    %v2378 = vunpack.c.l.b16 %v66
    %v2379 = vunpack.c.l.b16 %v67
    %v2380 = vunpack.c.l.b16 %v68
    %v2381 = vunpack.c.l.b16 %v69
    %v2382 = vpack.c.b16 %v2367, %v2366
    %v2383 = vpack.c.b16 %v2369, %v2368
    %v2384 = vpack.c.b16 %v2371, %v2370
    %v2385 = vpack.c.b16 %v2373, %v2372
    %v2386 = vpack.c.b16 %v2375, %v2374
    %v2387 = vpack.c.b16 %v2377, %v2376
    %v2388 = vpack.c.b16 %v2379, %v2378
    %v2389 = vpack.c.b16 %v2381, %v2380
    %v2391 = vsel %vm445, %v2382, 0
    %v2394 = vsel %vm445, %v2383, 0
    %v2397 = vsel %vm445, %v2384, 0
    %v2400 = vsel %vm445, %v2385, 0
    %v2403 = vsel %vm445, %v2386, 0
    %v2406 = vsel %vm445, %v2387, 0
    %v2409 = vsel %vm445, %v2388, 0
    %v2412 = vsel %vm445, %v2389, 0
    %2414 = vmatprep.subr.bf16.mxu0 0
    %2415 = vmatpush1.bf16.msra.mxu0 %v2188
    %2416 = vmatprep.subr.bf16.mxu0 0
    %2417 = vmatpush1.bf16.msra.mxu0 %v2189
    %2418 = vmatprep.subr.bf16.mxu0 0
    %2419 = vmatpush1.bf16.msra.mxu0 0
    %2420 = vmatprep.subr.bf16.mxu0 0
    %2421 = vmatpush1.bf16.msra.mxu0 0
    %2422 = vmatprep.subr.bf16.mxu0 0
    %2423 = vmatpush1.bf16.msra.mxu0 0
    %2424 = vmatprep.subr.bf16.mxu0 0
    %2425 = vmatpush1.bf16.msra.mxu0 0
    %2426 = vmatprep.subr.bf16.mxu0 0
    %2427 = vmatpush1.bf16.msra.mxu0 0
    %2428 = vmatprep.subr.bf16.mxu0 0
    %2429 = vmatpush1.bf16.msra.mxu0 0
    %2430 = vmatprep.subr.bf16.mxu0 0
    %2431 = vmatpush1.bf16.msra.mxu0 0
    %2432 = vmatprep.subr.bf16.mxu0 0
    %2433 = vmatpush1.bf16.msra.mxu0 0
    %2434 = vmatprep.subr.bf16.mxu0 0
    %2435 = vmatpush1.bf16.msra.mxu0 0
    %2436 = vmatprep.subr.bf16.mxu0 0
    %2437 = vmatpush1.bf16.msra.mxu0 0
    %2438 = vmatprep.subr.bf16.mxu0 0
    %2439 = vmatpush1.bf16.msra.mxu0 0
    %2440 = vmatprep.subr.bf16.mxu0 0
    %2441 = vmatpush1.bf16.msra.mxu0 0
    %2442 = vmatprep.subr.bf16.mxu0 0
    %2443 = vmatpush1.bf16.msra.mxu0 0
    %2444 = vmatprep.subr.bf16.mxu0 0
    %2445 = vmatpush1.bf16.msra.mxu0 0
    %2446 = vmatprep.mubr.bf16.mxu0 0
    %2447 = vmatmul.mubr.bf16.gmra.mrb[0].mxu0 %v2391
    %v2448 = vpop.f32.mrb[0].mxu0
    %v2449 = vadd.f32 %v2288, %v2448
    %v2450 = vpop.f32.mrb[0].mxu0
    %v2451 = vpop.f32.mrb[0].mxu0
    %v2452 = vadd.f32 %v2291, %v2451
    %v2453 = vpop.f32.mrb[0].mxu0
    %2454 = vmatprep.mubr.bf16.mxu0 0
    %2455 = vmatmul.mubr.bf16.gmra.mrb[0].mxu0 %v2394
    %v2456 = vpop.f32.mrb[0].mxu0
    %v2457 = vadd.f32 %v2296, %v2456
    %v2458 = vpop.f32.mrb[0].mxu0
    %v2459 = vpop.f32.mrb[0].mxu0
    %v2460 = vadd.f32 %v2299, %v2459
    %v2461 = vpop.f32.mrb[0].mxu0
    %2462 = vmatprep.mubr.bf16.mxu0 0
    %2463 = vmatmul.mubr.bf16.gmra.mrb[0].mxu0 %v2397
    %v2464 = vpop.f32.mrb[0].mxu0
    %v2465 = vadd.f32 %v2304, %v2464
    %v2466 = vpop.f32.mrb[0].mxu0
    %v2467 = vpop.f32.mrb[0].mxu0
    %v2468 = vadd.f32 %v2307, %v2467
    %v2469 = vpop.f32.mrb[0].mxu0
    %2470 = vmatprep.mubr.bf16.mxu0 0
    %2471 = vmatmul.mubr.bf16.gmra.mrb[0].mxu0 %v2400
    %v2472 = vpop.f32.mrb[0].mxu0
    %v2473 = vadd.f32 %v2312, %v2472
    %v2474 = vpop.f32.mrb[0].mxu0
    %v2475 = vpop.f32.mrb[0].mxu0
    %v2476 = vadd.f32 %v2315, %v2475
    %v2477 = vpop.f32.mrb[0].mxu0
    %2478 = vmatprep.mubr.bf16.mxu0 0
    %2479 = vmatmul.mubr.bf16.gmra.mrb[0].mxu0 %v2403
    %v2480 = vpop.f32.mrb[0].mxu0
    %v2481 = vadd.f32 %v2320, %v2480
    %v2482 = vpop.f32.mrb[0].mxu0
    %v2483 = vpop.f32.mrb[0].mxu0
    %v2484 = vadd.f32 %v2323, %v2483
    %v2485 = vpop.f32.mrb[0].mxu0
    %2486 = vmatprep.mubr.bf16.mxu0 0
    %2487 = vmatmul.mubr.bf16.gmra.mrb[0].mxu0 %v2406
    %v2488 = vpop.f32.mrb[0].mxu0
    %v2489 = vadd.f32 %v2328, %v2488
    %v2490 = vpop.f32.mrb[0].mxu0
    %v2491 = vpop.f32.mrb[0].mxu0
    %v2492 = vadd.f32 %v2331, %v2491
    %v2493 = vpop.f32.mrb[0].mxu0
    %2494 = vmatprep.mubr.bf16.mxu0 0
    %2495 = vmatmul.mubr.bf16.gmra.mrb[0].mxu0 %v2409
    %v2496 = vpop.f32.mrb[0].mxu0
    %v2497 = vadd.f32 %v2336, %v2496
    %v2498 = vpop.f32.mrb[0].mxu0
    %v2499 = vpop.f32.mrb[0].mxu0
    %v2500 = vadd.f32 %v2339, %v2499
    %v2501 = vpop.f32.mrb[0].mxu0
    %2502 = vmatprep.mubr.bf16.mxu0 0
    %2503 = vmatmul.mubr.bf16.gmra.mrb[0].mxu0 %v2412
    %v2504 = vpop.f32.mrb[0].mxu0
    %v2505 = vadd.f32 %v2344, %v2504
    %v2506 = vpop.f32.mrb[0].mxu0
    %v2507 = vpop.f32.mrb[0].mxu0
    %v2508 = vadd.f32 %v2347, %v2507
    %v2509 = vpop.f32.mrb[0].mxu0
    %2510 = vdwg.mxu0
    %v2511 = vmax.f32 %v2449, 0.0
    %v2512 = vmax.f32 %v2452, 0.0
    %v2513 = vmax.f32 %v2457, 0.0
    %v2514 = vmax.f32 %v2460, 0.0
    %v2515 = vmax.f32 %v2465, 0.0
    %v2516 = vmax.f32 %v2468, 0.0
    %v2517 = vmax.f32 %v2473, 0.0
    %v2518 = vmax.f32 %v2476, 0.0
    %v2519 = vmax.f32 %v2481, 0.0
    %v2520 = vmax.f32 %v2484, 0.0
    %v2521 = vmax.f32 %v2489, 0.0
    %v2522 = vmax.f32 %v2492, 0.0
    %v2523 = vmax.f32 %v2497, 0.0
    %v2524 = vmax.f32 %v2500, 0.0
    %v2525 = vmax.f32 %v2505, 0.0
    %v2526 = vmax.f32 %v2508, 0.0
    %v2527 = vpack.c.bf16 %v2512, %v2511
    %v2528 = vpack.c.bf16 %v2514, %v2513
    %v2529 = vpack.c.bf16 %v2516, %v2515
    %v2530 = vpack.c.bf16 %v2518, %v2517
    %v2531 = vpack.c.bf16 %v2520, %v2519
    %v2532 = vpack.c.bf16 %v2522, %v2521
    %v2533 = vpack.c.bf16 %v2524, %v2523
    %v2534 = vpack.c.bf16 %v2526, %v2525
    %2535 = vmatprep.subr.bf16.mxu0 0
    %2536 = vmatpush1.bf16.msra.mxu0 %v2527
    %2537 = vmatprep.subr.bf16.mxu0 0
    %2538 = vmatpush1.bf16.msra.mxu0 %v2528
    %2539 = vmatprep.subr.bf16.mxu0 0
    %2540 = vmatpush1.bf16.msra.mxu0 %v2529
    %2541 = vmatprep.subr.bf16.mxu0 0
    %2542 = vmatpush1.bf16.msra.mxu0 %v2530
    %2543 = vmatprep.subr.bf16.mxu0 0
    %2544 = vmatpush1.bf16.msra.mxu0 %v2531
    %2545 = vmatprep.subr.bf16.mxu0 0
    %2546 = vmatpush1.bf16.msra.mxu0 %v2532
    %2547 = vmatprep.subr.bf16.mxu0 0
    %2548 = vmatpush1.bf16.msra.mxu0 %v2533
    %2549 = vmatprep.subr.bf16.mxu0 0
    %2550 = vmatpush1.bf16.msra.mxu0 %v2534
    %2551 = vmatprep.subr.bf16.mxu0 0
    %2552 = vmatpush1.bf16.msra.mxu0 0
    %2553 = vmatprep.subr.bf16.mxu0 0
    %2554 = vmatpush1.bf16.msra.mxu0 0
    %2555 = vmatprep.subr.bf16.mxu0 0
    %2556 = vmatpush1.bf16.msra.mxu0 0
    %2557 = vmatprep.subr.bf16.mxu0 0
    %2558 = vmatpush1.bf16.msra.mxu0 0
    %2559 = vmatprep.subr.bf16.mxu0 0
    %2560 = vmatpush1.bf16.msra.mxu0 0
    %2561 = vmatprep.subr.bf16.mxu0 0
    %2562 = vmatpush1.bf16.msra.mxu0 0
    %2563 = vmatprep.subr.bf16.mxu0 0
    %2564 = vmatpush1.bf16.msra.mxu0 0
    %2565 = vmatprep.subr.bf16.mxu0 0
    %2566 = vmatpush1.bf16.msra.mxu0 0
    %2567 = vmatprep.mubr.bf16.mxu0 0
    %2568 = vmatmul.mubr.bf16.gmra.mrb[0].mxu0 %v478
    %v2569 = vpop.f32.mrb[0].mxu0
    %v2570 = vadd.f32 0.0, %v2569
    %v2571 = vpop.f32.mrb[0].mxu0
    %v2572 = vpop.f32.mrb[0].mxu0
    %v2573 = vadd.f32 0.0, %v2572
    %v2574 = vpop.f32.mrb[0].mxu0
    %2575 = vmatprep.mubr.bf16.mxu0 0
    %2576 = vmatmul.mubr.bf16.gmra.mrb[0].mxu0 %v479
    %v2577 = vpop.f32.mrb[0].mxu0
    %v2578 = vadd.f32 0.0, %v2577
    %v2579 = vpop.f32.mrb[0].mxu0
    %v2580 = vpop.f32.mrb[0].mxu0
    %v2581 = vadd.f32 0.0, %v2580
    %v2582 = vpop.f32.mrb[0].mxu0
    %2583 = vdwg.mxu0
    %2586 = vrot.lane.b32.xlu0 %v2578, 32
    %v2587 = vpop.permute.xlu0 %2586
    %2588 = vrot.lane.b32.xlu0 %v2581, 32
    %v2589 = vpop.permute.xlu0 %2588
    %v2592 = vsel %vm445, %v2570, %v2587
    %v2593 = vsel %vm445, %v2573, %v2589
    %v2596 = vcombine.high %v2592, %v2592
    %v2598 = vunpack.c.l.s4 1966171168
    %v2599 = vunpack.c.0.s8 %v2598
    %v2600 = vlaneseq
    %v2601 = vshrl.u32 %v2600, 7
    %v2602 = vsub.s32 %v2599, %v2601
    %v2603 = vrot.slane %v2592, %v2602
    %v2605 = vunpack.c.l.s4 1966171168
    %v2606 = vunpack.c.0.s8 %v2605
    %v2607 = vlaneseq
    %v2608 = vshrl.u32 %v2607, 7
    %v2609 = vsub.s32 %v2606, %v2608
    %v2610 = vrot.slane %v2596, %v2609
    %v2611 = vcombine.high %v2603, %v2603
    %v2612 = vcombine.high %v2610, %v2610
    %v2614 = vunpack.c.l.s4 1966171168
    %v2615 = vunpack.c.0.s8 %v2614
    %v2616 = vlaneseq
    %v2617 = vshrl.u32 %v2616, 7
    %v2618 = vsub.s32 %v2615, %v2617
    %v2619 = vrot.slane %v2603, %v2618
    %v2621 = vunpack.c.l.s4 1966171168
    %v2622 = vunpack.c.0.s8 %v2621
    %v2623 = vlaneseq
    %v2624 = vshrl.u32 %v2623, 7
    %v2625 = vsub.s32 %v2622, %v2624
    %v2626 = vrot.slane %v2610, %v2625
    %v2628 = vunpack.c.l.s4 1966171168
    %v2629 = vunpack.c.0.s8 %v2628
    %v2630 = vlaneseq
    %v2631 = vshrl.u32 %v2630, 7
    %v2632 = vsub.s32 %v2629, %v2631
    %v2633 = vrot.slane %v2611, %v2632
    %v2635 = vunpack.c.l.s4 1966171168
    %v2636 = vunpack.c.0.s8 %v2635
    %v2637 = vlaneseq
    %v2638 = vshrl.u32 %v2637, 7
    %v2639 = vsub.s32 %v2636, %v2638
    %v2640 = vrot.slane %v2612, %v2639
    %v2641 = vcombine.high %v2619, %v2619
    %v2642 = vcombine.high %v2626, %v2626
    %v2643 = vcombine.high %v2633, %v2633
    %v2644 = vcombine.high %v2640, %v2640
    %v2645 = vcombine.high %v2593, %v2593
    %v2647 = vunpack.c.l.s4 1966171168
    %v2648 = vunpack.c.0.s8 %v2647
    %v2649 = vlaneseq
    %v2650 = vshrl.u32 %v2649, 7
    %v2651 = vsub.s32 %v2648, %v2650
    %v2652 = vrot.slane %v2593, %v2651
    %v2654 = vunpack.c.l.s4 1966171168
    %v2655 = vunpack.c.0.s8 %v2654
    %v2656 = vlaneseq
    %v2657 = vshrl.u32 %v2656, 7
    %v2658 = vsub.s32 %v2655, %v2657
    %v2659 = vrot.slane %v2645, %v2658
    %v2660 = vcombine.high %v2652, %v2652
    %v2661 = vcombine.high %v2659, %v2659
    %v2663 = vunpack.c.l.s4 1966171168
    %v2664 = vunpack.c.0.s8 %v2663
    %v2665 = vlaneseq
    %v2666 = vshrl.u32 %v2665, 7
    %v2667 = vsub.s32 %v2664, %v2666
    %v2668 = vrot.slane %v2652, %v2667
    %v2670 = vunpack.c.l.s4 1966171168
    %v2671 = vunpack.c.0.s8 %v2670
    %v2672 = vlaneseq
    %v2673 = vshrl.u32 %v2672, 7
    %v2674 = vsub.s32 %v2671, %v2673
    %v2675 = vrot.slane %v2659, %v2674
    %v2677 = vunpack.c.l.s4 1966171168
    %v2678 = vunpack.c.0.s8 %v2677
    %v2679 = vlaneseq
    %v2680 = vshrl.u32 %v2679, 7
    %v2681 = vsub.s32 %v2678, %v2680
    %v2682 = vrot.slane %v2660, %v2681
    %v2684 = vunpack.c.l.s4 1966171168
    %v2685 = vunpack.c.0.s8 %v2684
    %v2686 = vlaneseq
    %v2687 = vshrl.u32 %v2686, 7
    %v2688 = vsub.s32 %v2685, %v2687
    %v2689 = vrot.slane %v2661, %v2688
    %v2690 = vcombine.high %v2668, %v2668
    %v2691 = vcombine.high %v2675, %v2675
    %v2692 = vcombine.high %v2682, %v2682
    %v2693 = vcombine.high %v2689, %v2689
    %2712 = vrot.lane.b32.xlu0 %v2570, 96
    %v2713 = vpop.permute.xlu0 %2712
    %2714 = vrot.lane.b32.xlu0 %v2573, 96
    %v2715 = vpop.permute.xlu0 %2714
    %v2718 = vsel %vm445, %v2713, %v2578
    %v2719 = vsel %vm445, %v2715, %v2581
    %v2722 = vcombine.high %v2718, %v2718
    %v2724 = vunpack.c.l.s4 1966171168
    %v2725 = vunpack.c.0.s8 %v2724
    %v2726 = vlaneseq
    %v2727 = vshrl.u32 %v2726, 7
    %v2728 = vsub.s32 %v2725, %v2727
    %v2729 = vrot.slane %v2718, %v2728
    %v2731 = vunpack.c.l.s4 1966171168
    %v2732 = vunpack.c.0.s8 %v2731
    %v2733 = vlaneseq
    %v2734 = vshrl.u32 %v2733, 7
    %v2735 = vsub.s32 %v2732, %v2734
    %v2736 = vrot.slane %v2722, %v2735
    %v2737 = vcombine.high %v2729, %v2729
    %v2738 = vcombine.high %v2736, %v2736
    %v2740 = vunpack.c.l.s4 1966171168
    %v2741 = vunpack.c.0.s8 %v2740
    %v2742 = vlaneseq
    %v2743 = vshrl.u32 %v2742, 7
    %v2744 = vsub.s32 %v2741, %v2743
    %v2745 = vrot.slane %v2729, %v2744
    %v2747 = vunpack.c.l.s4 1966171168
    %v2748 = vunpack.c.0.s8 %v2747
    %v2749 = vlaneseq
    %v2750 = vshrl.u32 %v2749, 7
    %v2751 = vsub.s32 %v2748, %v2750
    %v2752 = vrot.slane %v2736, %v2751
    %v2754 = vunpack.c.l.s4 1966171168
    %v2755 = vunpack.c.0.s8 %v2754
    %v2756 = vlaneseq
    %v2757 = vshrl.u32 %v2756, 7
    %v2758 = vsub.s32 %v2755, %v2757
    %v2759 = vrot.slane %v2737, %v2758
    %v2761 = vunpack.c.l.s4 1966171168
    %v2762 = vunpack.c.0.s8 %v2761
    %v2763 = vlaneseq
    %v2764 = vshrl.u32 %v2763, 7
    %v2765 = vsub.s32 %v2762, %v2764
    %v2766 = vrot.slane %v2738, %v2765
    %v2767 = vcombine.high %v2745, %v2745
    %v2768 = vcombine.high %v2752, %v2752
    %v2769 = vcombine.high %v2759, %v2759
    %v2770 = vcombine.high %v2766, %v2766
    %v2771 = vcombine.high %v2719, %v2719
    %v2773 = vunpack.c.l.s4 1966171168
    %v2774 = vunpack.c.0.s8 %v2773
    %v2775 = vlaneseq
    %v2776 = vshrl.u32 %v2775, 7
    %v2777 = vsub.s32 %v2774, %v2776
    %v2778 = vrot.slane %v2719, %v2777
    %v2780 = vunpack.c.l.s4 1966171168
    %v2781 = vunpack.c.0.s8 %v2780
    %v2782 = vlaneseq
    %v2783 = vshrl.u32 %v2782, 7
    %v2784 = vsub.s32 %v2781, %v2783
    %v2785 = vrot.slane %v2771, %v2784
    %v2786 = vcombine.high %v2778, %v2778
    %v2787 = vcombine.high %v2785, %v2785
    %v2789 = vunpack.c.l.s4 1966171168
    %v2790 = vunpack.c.0.s8 %v2789
    %v2791 = vlaneseq
    %v2792 = vshrl.u32 %v2791, 7
    %v2793 = vsub.s32 %v2790, %v2792
    %v2794 = vrot.slane %v2778, %v2793
    %v2796 = vunpack.c.l.s4 1966171168
    %v2797 = vunpack.c.0.s8 %v2796
    %v2798 = vlaneseq
    %v2799 = vshrl.u32 %v2798, 7
    %v2800 = vsub.s32 %v2797, %v2799
    %v2801 = vrot.slane %v2785, %v2800
    %v2803 = vunpack.c.l.s4 1966171168
    %v2804 = vunpack.c.0.s8 %v2803
    %v2805 = vlaneseq
    %v2806 = vshrl.u32 %v2805, 7
    %v2807 = vsub.s32 %v2804, %v2806
    %v2808 = vrot.slane %v2786, %v2807
    %v2810 = vunpack.c.l.s4 1966171168
    %v2811 = vunpack.c.0.s8 %v2810
    %v2812 = vlaneseq
    %v2813 = vshrl.u32 %v2812, 7
    %v2814 = vsub.s32 %v2811, %v2813
    %v2815 = vrot.slane %v2787, %v2814
    %v2816 = vcombine.high %v2794, %v2794
    %v2817 = vcombine.high %v2801, %v2801
    %v2818 = vcombine.high %v2808, %v2808
    %v2819 = vcombine.high %v2815, %v2815
    %v2820 = vlaneseq
    %v2821 = vshrl.u32 %v2820, 7
    %v2822 = vsub.s32 0, %v2821
    %v2823 = vrot.slane %v2745, %v2822
    %v2824 = vlaneseq
    %v2825 = vshrl.u32 %v2824, 7
    %v2826 = vsub.s32 0, %v2825
    %v2827 = vrot.slane %v2759, %v2826
    %v2828 = vlaneseq
    %v2829 = vshrl.u32 %v2828, 7
    %v2830 = vsub.s32 0, %v2829
    %v2831 = vrot.slane %v2767, %v2830
    %v2832 = vlaneseq
    %v2833 = vshrl.u32 %v2832, 7
    %v2834 = vsub.s32 0, %v2833
    %v2835 = vrot.slane %v2769, %v2834
    %v2836 = vlaneseq
    %v2837 = vshrl.u32 %v2836, 7
    %v2838 = vsub.s32 0, %v2837
    %v2839 = vrot.slane %v2752, %v2838
    %v2840 = vlaneseq
    %v2841 = vshrl.u32 %v2840, 7
    %v2842 = vsub.s32 0, %v2841
    %v2843 = vrot.slane %v2766, %v2842
    %v2844 = vlaneseq
    %v2845 = vshrl.u32 %v2844, 7
    %v2846 = vsub.s32 0, %v2845
    %v2847 = vrot.slane %v2768, %v2846
    %v2848 = vlaneseq
    %v2849 = vshrl.u32 %v2848, 7
    %v2850 = vsub.s32 0, %v2849
    %v2851 = vrot.slane %v2770, %v2850
    %v2852 = vlaneseq
    %v2853 = vshrl.u32 %v2852, 7
    %v2854 = vsub.s32 0, %v2853
    %v2855 = vrot.slane %v2794, %v2854
    %v2856 = vlaneseq
    %v2857 = vshrl.u32 %v2856, 7
    %v2858 = vsub.s32 0, %v2857
    %v2859 = vrot.slane %v2808, %v2858
    %v2860 = vlaneseq
    %v2861 = vshrl.u32 %v2860, 7
    %v2862 = vsub.s32 0, %v2861
    %v2863 = vrot.slane %v2816, %v2862
    %v2864 = vlaneseq
    %v2865 = vshrl.u32 %v2864, 7
    %v2866 = vsub.s32 0, %v2865
    %v2867 = vrot.slane %v2818, %v2866
    %v2868 = vlaneseq
    %v2869 = vshrl.u32 %v2868, 7
    %v2870 = vsub.s32 0, %v2869
    %v2871 = vrot.slane %v2801, %v2870
    %v2872 = vlaneseq
    %v2873 = vshrl.u32 %v2872, 7
    %v2874 = vsub.s32 0, %v2873
    %v2875 = vrot.slane %v2815, %v2874
    %v2876 = vlaneseq
    %v2877 = vshrl.u32 %v2876, 7
    %v2878 = vsub.s32 0, %v2877
    %v2879 = vrot.slane %v2817, %v2878
    %v2880 = vlaneseq
    %v2881 = vshrl.u32 %v2880, 7
    %v2882 = vsub.s32 0, %v2881
    %v2883 = vrot.slane %v2819, %v2882
    %v2900 = vsel %vm847, %v2619, %v2823
    %v2901 = vsel %vm847, %v2633, %v2827
    %v2902 = vsel %vm847, %v2641, %v2831
    %v2903 = vsel %vm847, %v2643, %v2835
    %v2904 = vsel %vm847, %v2626, %v2839
    %v2905 = vsel %vm847, %v2640, %v2843
    %v2906 = vsel %vm847, %v2642, %v2847
    %v2907 = vsel %vm847, %v2644, %v2851
    %v2908 = vsel %vm847, %v2668, %v2855
    %v2909 = vsel %vm847, %v2682, %v2859
    %v2910 = vsel %vm847, %v2690, %v2863
    %v2911 = vsel %vm847, %v2692, %v2867
    %v2912 = vsel %vm847, %v2675, %v2871
    %v2913 = vsel %vm847, %v2689, %v2875
    %v2914 = vsel %vm847, %v2691, %v2879
    %v2915 = vsel %vm847, %v2693, %v2883
    %v2916 = vpack.c.bf16 %v2900, %v2900
    %v2917 = vpack.c.bf16 %v2901, %v2901
    %v2918 = vpack.c.bf16 %v2902, %v2902
    %v2919 = vpack.c.bf16 %v2903, %v2903
    %v2920 = vpack.c.bf16 %v2904, %v2904
    %v2921 = vpack.c.bf16 %v2905, %v2905
    %v2922 = vpack.c.bf16 %v2906, %v2906
    %v2923 = vpack.c.bf16 %v2907, %v2907
    %v2924 = vpack.c.bf16 %v2908, %v2908
    %v2925 = vpack.c.bf16 %v2909, %v2909
    %v2926 = vpack.c.bf16 %v2910, %v2910
    %v2927 = vpack.c.bf16 %v2911, %v2911
    %v2928 = vpack.c.bf16 %v2912, %v2912
    %v2929 = vpack.c.bf16 %v2913, %v2913
    %v2930 = vpack.c.bf16 %v2914, %v2914
    %v2931 = vpack.c.bf16 %v2915, %v2915
    %s2932 = scalar_lea.vmem [#allocation2], 512
    %v2933 = vld [vmem:[%s2932] sm:$0xf]
    %v2934 = vld [vmem:[%s2932 + $0x4] sm:$0xf]
    %v2935 = vld [vmem:[%s2932 + $0x8] sm:$0xf]
    %v2936 = vld [vmem:[%s2932 + $0xc] sm:$0xf]
    %v2937 = vld [vmem:[%s2932 + $0x10] sm:$0xf]
    %v2938 = vld [vmem:[%s2932 + $0x14] sm:$0xf]
    %v2939 = vld [vmem:[%s2932 + $0x18] sm:$0xf]
    %v2940 = vld [vmem:[%s2932 + $0x1c] sm:$0xf]
    %v2941 = vld [vmem:[%s2932 + $0x20] sm:$0xf]
    %v2942 = vld [vmem:[%s2932 + $0x24] sm:$0xf]
    %v2943 = vld [vmem:[%s2932 + $0x28] sm:$0xf]
    %v2944 = vld [vmem:[%s2932 + $0x2c] sm:$0xf]
    %v2945 = vld [vmem:[%s2932 + $0x30] sm:$0xf]
    %v2946 = vld [vmem:[%s2932 + $0x34] sm:$0xf]
    %v2947 = vld [vmem:[%s2932 + $0x38] sm:$0xf]
    %v2948 = vld [vmem:[%s2932 + $0x3c] sm:$0xf]
    %v2949 = vld [vmem:[%s2932 + $0x40] sm:$0xf]
    %v2950 = vld [vmem:[%s2932 + $0x44] sm:$0xf]
    %v2951 = vld [vmem:[%s2932 + $0x48] sm:$0xf]
    %v2952 = vld [vmem:[%s2932 + $0x4c] sm:$0xf]
    %v2953 = vld [vmem:[%s2932 + $0x50] sm:$0xf]
    %v2954 = vld [vmem:[%s2932 + $0x54] sm:$0xf]
    %v2955 = vld [vmem:[%s2932 + $0x58] sm:$0xf]
    %v2956 = vld [vmem:[%s2932 + $0x5c] sm:$0xf]
    %v2957 = vld [vmem:[%s2932 + $0x60] sm:$0xf]
    %v2958 = vld [vmem:[%s2932 + $0x64] sm:$0xf]
    %v2959 = vld [vmem:[%s2932 + $0x68] sm:$0xf]
    %v2960 = vld [vmem:[%s2932 + $0x6c] sm:$0xf]
    %v2961 = vld [vmem:[%s2932 + $0x70] sm:$0xf]
    %v2962 = vld [vmem:[%s2932 + $0x74] sm:$0xf]
    %v2963 = vld [vmem:[%s2932 + $0x78] sm:$0xf]
    %v2964 = vld [vmem:[%s2932 + $0x7c] sm:$0xf]
    %v2965 = vld [vmem:[%s2932 + $0x80] sm:$0xf]
    %v2966 = vld [vmem:[%s2932 + $0x84] sm:$0xf]
    %v2967 = vld [vmem:[%s2932 + $0x88] sm:$0xf]
    %v2968 = vld [vmem:[%s2932 + $0x8c] sm:$0xf]
    %v2969 = vld [vmem:[%s2932 + $0x90] sm:$0xf]
    %v2970 = vld [vmem:[%s2932 + $0x94] sm:$0xf]
    %v2971 = vld [vmem:[%s2932 + $0x98] sm:$0xf]
    %v2972 = vld [vmem:[%s2932 + $0x9c] sm:$0xf]
    %v2973 = vld [vmem:[%s2932 + $0xa0] sm:$0xf]
    %v2974 = vld [vmem:[%s2932 + $0xa4] sm:$0xf]
    %v2975 = vld [vmem:[%s2932 + $0xa8] sm:$0xf]
    %v2976 = vld [vmem:[%s2932 + $0xac] sm:$0xf]
    %v2977 = vld [vmem:[%s2932 + $0xb0] sm:$0xf]
    %v2978 = vld [vmem:[%s2932 + $0xb4] sm:$0xf]
    %v2979 = vld [vmem:[%s2932 + $0xb8] sm:$0xf]
    %v2980 = vld [vmem:[%s2932 + $0xbc] sm:$0xf]
    %v2981 = vld [vmem:[%s2932 + $0xc0] sm:$0xf]
    %v2982 = vld [vmem:[%s2932 + $0xc4] sm:$0xf]
    %v2983 = vld [vmem:[%s2932 + $0xc8] sm:$0xf]
    %v2984 = vld [vmem:[%s2932 + $0xcc] sm:$0xf]
    %v2985 = vld [vmem:[%s2932 + $0xd0] sm:$0xf]
    %v2986 = vld [vmem:[%s2932 + $0xd4] sm:$0xf]
    %v2987 = vld [vmem:[%s2932 + $0xd8] sm:$0xf]
    %v2988 = vld [vmem:[%s2932 + $0xdc] sm:$0xf]
    %v2989 = vld [vmem:[%s2932 + $0xe0] sm:$0xf]
    %v2990 = vld [vmem:[%s2932 + $0xe4] sm:$0xf]
    %v2991 = vld [vmem:[%s2932 + $0xe8] sm:$0xf]
    %v2992 = vld [vmem:[%s2932 + $0xec] sm:$0xf]
    %v2993 = vld [vmem:[%s2932 + $0xf0] sm:$0xf]
    %v2994 = vld [vmem:[%s2932 + $0xf4] sm:$0xf]
    %v2995 = vld [vmem:[%s2932 + $0xf8] sm:$0xf]
    %v2996 = vld [vmem:[%s2932 + $0xfc] sm:$0xf]
    %v2997 = vld [vmem:[%s2932 + $0x100] sm:$0xf]
    %v2998 = vld [vmem:[%s2932 + $0x104] sm:$0xf]
    %v2999 = vld [vmem:[%s2932 + $0x108] sm:$0xf]
    %v3000 = vld [vmem:[%s2932 + $0x10c] sm:$0xf]
    %v3001 = vld [vmem:[%s2932 + $0x110] sm:$0xf]
    %v3002 = vld [vmem:[%s2932 + $0x114] sm:$0xf]
    %v3003 = vld [vmem:[%s2932 + $0x118] sm:$0xf]
    %v3004 = vld [vmem:[%s2932 + $0x11c] sm:$0xf]
    %v3005 = vld [vmem:[%s2932 + $0x120] sm:$0xf]
    %v3006 = vld [vmem:[%s2932 + $0x124] sm:$0xf]
    %v3007 = vld [vmem:[%s2932 + $0x128] sm:$0xf]
    %v3008 = vld [vmem:[%s2932 + $0x12c] sm:$0xf]
    %v3009 = vld [vmem:[%s2932 + $0x130] sm:$0xf]
    %v3010 = vld [vmem:[%s2932 + $0x134] sm:$0xf]
    %v3011 = vld [vmem:[%s2932 + $0x138] sm:$0xf]
    %v3012 = vld [vmem:[%s2932 + $0x13c] sm:$0xf]
    %v3013 = vld [vmem:[%s2932 + $0x140] sm:$0xf]
    %v3014 = vld [vmem:[%s2932 + $0x144] sm:$0xf]
    %v3015 = vld [vmem:[%s2932 + $0x148] sm:$0xf]
    %v3016 = vld [vmem:[%s2932 + $0x14c] sm:$0xf]
    %v3017 = vld [vmem:[%s2932 + $0x150] sm:$0xf]
    %v3018 = vld [vmem:[%s2932 + $0x154] sm:$0xf]
    %v3019 = vld [vmem:[%s2932 + $0x158] sm:$0xf]
    %v3020 = vld [vmem:[%s2932 + $0x15c] sm:$0xf]
    %v3021 = vld [vmem:[%s2932 + $0x160] sm:$0xf]
    %v3022 = vld [vmem:[%s2932 + $0x164] sm:$0xf]
    %v3023 = vld [vmem:[%s2932 + $0x168] sm:$0xf]
    %v3024 = vld [vmem:[%s2932 + $0x16c] sm:$0xf]
    %v3025 = vld [vmem:[%s2932 + $0x170] sm:$0xf]
    %v3026 = vld [vmem:[%s2932 + $0x174] sm:$0xf]
    %v3027 = vld [vmem:[%s2932 + $0x178] sm:$0xf]
    %v3028 = vld [vmem:[%s2932 + $0x17c] sm:$0xf]
    %v3029 = vld [vmem:[%s2932 + $0x180] sm:$0xf]
    %v3030 = vld [vmem:[%s2932 + $0x184] sm:$0xf]
    %v3031 = vld [vmem:[%s2932 + $0x188] sm:$0xf]
    %v3032 = vld [vmem:[%s2932 + $0x18c] sm:$0xf]
    %v3033 = vld [vmem:[%s2932 + $0x190] sm:$0xf]
    %v3034 = vld [vmem:[%s2932 + $0x194] sm:$0xf]
    %v3035 = vld [vmem:[%s2932 + $0x198] sm:$0xf]
    %v3036 = vld [vmem:[%s2932 + $0x19c] sm:$0xf]
    %v3037 = vld [vmem:[%s2932 + $0x1a0] sm:$0xf]
    %v3038 = vld [vmem:[%s2932 + $0x1a4] sm:$0xf]
    %v3039 = vld [vmem:[%s2932 + $0x1a8] sm:$0xf]
    %v3040 = vld [vmem:[%s2932 + $0x1ac] sm:$0xf]
    %v3041 = vld [vmem:[%s2932 + $0x1b0] sm:$0xf]
    %v3042 = vld [vmem:[%s2932 + $0x1b4] sm:$0xf]
    %v3043 = vld [vmem:[%s2932 + $0x1b8] sm:$0xf]
    %v3044 = vld [vmem:[%s2932 + $0x1bc] sm:$0xf]
    %v3045 = vld [vmem:[%s2932 + $0x1c0] sm:$0xf]
    %v3046 = vld [vmem:[%s2932 + $0x1c4] sm:$0xf]
    %v3047 = vld [vmem:[%s2932 + $0x1c8] sm:$0xf]
    %v3048 = vld [vmem:[%s2932 + $0x1cc] sm:$0xf]
    %v3049 = vld [vmem:[%s2932 + $0x1d0] sm:$0xf]
    %v3050 = vld [vmem:[%s2932 + $0x1d4] sm:$0xf]
    %v3051 = vld [vmem:[%s2932 + $0x1d8] sm:$0xf]
    %v3052 = vld [vmem:[%s2932 + $0x1dc] sm:$0xf]
    %v3053 = vld [vmem:[%s2932 + $0x1e0] sm:$0xf]
    %v3054 = vld [vmem:[%s2932 + $0x1e4] sm:$0xf]
    %v3055 = vld [vmem:[%s2932 + $0x1e8] sm:$0xf]
    %v3056 = vld [vmem:[%s2932 + $0x1ec] sm:$0xf]
    %v3057 = vld [vmem:[%s2932 + $0x1f0] sm:$0xf]
    %v3058 = vld [vmem:[%s2932 + $0x1f4] sm:$0xf]
    %v3059 = vld [vmem:[%s2932 + $0x1f8] sm:$0xf]
    %v3060 = vld [vmem:[%s2932 + $0x1fc] sm:$0xf]
    %v3069 = vunpack.c.l.b16 %v2933
    %v3070 = vunpack.c.l.b16 %v2934
    %v3071 = vunpack.c.l.b16 %v2935
    %v3072 = vunpack.c.l.b16 %v2936
    %v3073 = vunpack.c.l.b16 %v2937
    %v3074 = vunpack.c.l.b16 %v2938
    %v3075 = vunpack.c.l.b16 %v2939
    %v3076 = vunpack.c.l.b16 %v2940
    %v3077 = vpack.c.b16 %v3070, %v3069
    %v3078 = vpack.c.b16 %v3072, %v3071
    %v3079 = vpack.c.b16 %v3074, %v3073
    %v3080 = vpack.c.b16 %v3076, %v3075
    %v3086 = vsel %vm1032, %v2916, 0
    %3088 = vmatprep.subr.bf16.mxu0 0
    %3089 = vmatpush1.bf16.msra.mxu0 %v3077
    %3090 = vmatprep.subr.bf16.mxu0 0
    %3091 = vmatpush1.bf16.msra.mxu0 %v3078
    %3092 = vmatprep.subr.bf16.mxu0 0
    %3093 = vmatpush1.bf16.msra.mxu0 %v3079
    %3094 = vmatprep.subr.bf16.mxu0 0
    %3095 = vmatpush1.bf16.msra.mxu0 %v3080
    %3096 = vmatprep.subr.bf16.mxu0 0
    %3097 = vmatpush1.bf16.msra.mxu0 0
    %3098 = vmatprep.subr.bf16.mxu0 0
    %3099 = vmatpush1.bf16.msra.mxu0 0
    %3100 = vmatprep.subr.bf16.mxu0 0
    %3101 = vmatpush1.bf16.msra.mxu0 0
    %3102 = vmatprep.subr.bf16.mxu0 0
    %3103 = vmatpush1.bf16.msra.mxu0 0
    %3104 = vmatprep.subr.bf16.mxu0 0
    %3105 = vmatpush1.bf16.msra.mxu0 0
    %3106 = vmatprep.subr.bf16.mxu0 0
    %3107 = vmatpush1.bf16.msra.mxu0 0
    %3108 = vmatprep.subr.bf16.mxu0 0
    %3109 = vmatpush1.bf16.msra.mxu0 0
    %3110 = vmatprep.subr.bf16.mxu0 0
    %3111 = vmatpush1.bf16.msra.mxu0 0
    %3112 = vmatprep.subr.bf16.mxu0 0
    %3113 = vmatpush1.bf16.msra.mxu0 0
    %3114 = vmatprep.subr.bf16.mxu0 0
    %3115 = vmatpush1.bf16.msra.mxu0 0
    %3116 = vmatprep.subr.bf16.mxu0 0
    %3117 = vmatpush1.bf16.msra.mxu0 0
    %3118 = vmatprep.subr.bf16.mxu0 0
    %3119 = vmatpush1.bf16.msra.mxu0 0
    %3120 = vmatprep.mubr.bf16.mxu0 0
    %3121 = vmatmul.mubr.bf16.gmra.mrb[0].mxu0 %v3086
    %v3122 = vpop.f32.mrb[0].mxu0
    %v3123 = vadd.f32 0.0, %v3122
    %v3124 = vpop.f32.mrb[0].mxu0
    %v3125 = vpop.f32.mrb[0].mxu0
    %v3126 = vpop.f32.mrb[0].mxu0
    %3127 = vdwg.mxu0
    %v3136 = vunpack.c.l.b16 %v2941
    %v3137 = vunpack.c.l.b16 %v2942
    %v3138 = vunpack.c.l.b16 %v2943
    %v3139 = vunpack.c.l.b16 %v2944
    %v3140 = vunpack.c.l.b16 %v2945
    %v3141 = vunpack.c.l.b16 %v2946
    %v3142 = vunpack.c.l.b16 %v2947
    %v3143 = vunpack.c.l.b16 %v2948
    %v3144 = vpack.c.b16 %v3137, %v3136
    %v3145 = vpack.c.b16 %v3139, %v3138
    %v3146 = vpack.c.b16 %v3141, %v3140
    %v3147 = vpack.c.b16 %v3143, %v3142
    %v3153 = vsel %vm1032, %v2917, 0
    %3155 = vmatprep.subr.bf16.mxu0 0
    %3156 = vmatpush1.bf16.msra.mxu0 %v3144
    %3157 = vmatprep.subr.bf16.mxu0 0
    %3158 = vmatpush1.bf16.msra.mxu0 %v3145
    %3159 = vmatprep.subr.bf16.mxu0 0
    %3160 = vmatpush1.bf16.msra.mxu0 %v3146
    %3161 = vmatprep.subr.bf16.mxu0 0
    %3162 = vmatpush1.bf16.msra.mxu0 %v3147
    %3163 = vmatprep.subr.bf16.mxu0 0
    %3164 = vmatpush1.bf16.msra.mxu0 0
    %3165 = vmatprep.subr.bf16.mxu0 0
    %3166 = vmatpush1.bf16.msra.mxu0 0
    %3167 = vmatprep.subr.bf16.mxu0 0
    %3168 = vmatpush1.bf16.msra.mxu0 0
    %3169 = vmatprep.subr.bf16.mxu0 0
    %3170 = vmatpush1.bf16.msra.mxu0 0
    %3171 = vmatprep.subr.bf16.mxu0 0
    %3172 = vmatpush1.bf16.msra.mxu0 0
    %3173 = vmatprep.subr.bf16.mxu0 0
    %3174 = vmatpush1.bf16.msra.mxu0 0
    %3175 = vmatprep.subr.bf16.mxu0 0
    %3176 = vmatpush1.bf16.msra.mxu0 0
    %3177 = vmatprep.subr.bf16.mxu0 0
    %3178 = vmatpush1.bf16.msra.mxu0 0
    %3179 = vmatprep.subr.bf16.mxu0 0
    %3180 = vmatpush1.bf16.msra.mxu0 0
    %3181 = vmatprep.subr.bf16.mxu0 0
    %3182 = vmatpush1.bf16.msra.mxu0 0
    %3183 = vmatprep.subr.bf16.mxu0 0
    %3184 = vmatpush1.bf16.msra.mxu0 0
    %3185 = vmatprep.subr.bf16.mxu0 0
    %3186 = vmatpush1.bf16.msra.mxu0 0
    %3187 = vmatprep.mubr.bf16.mxu0 0
    %3188 = vmatmul.mubr.bf16.gmra.mrb[0].mxu0 %v3153
    %v3189 = vpop.f32.mrb[0].mxu0
    %v3190 = vadd.f32 0.0, %v3189
    %v3191 = vpop.f32.mrb[0].mxu0
    %v3192 = vpop.f32.mrb[0].mxu0
    %v3193 = vpop.f32.mrb[0].mxu0
    %3194 = vdwg.mxu0
    %v3203 = vunpack.c.l.b16 %v2949
    %v3204 = vunpack.c.l.b16 %v2950
    %v3205 = vunpack.c.l.b16 %v2951
    %v3206 = vunpack.c.l.b16 %v2952
    %v3207 = vunpack.c.l.b16 %v2953
    %v3208 = vunpack.c.l.b16 %v2954
    %v3209 = vunpack.c.l.b16 %v2955
    %v3210 = vunpack.c.l.b16 %v2956
    %v3211 = vpack.c.b16 %v3204, %v3203
    %v3212 = vpack.c.b16 %v3206, %v3205
    %v3213 = vpack.c.b16 %v3208, %v3207
    %v3214 = vpack.c.b16 %v3210, %v3209
    %v3220 = vsel %vm1032, %v2918, 0
    %3222 = vmatprep.subr.bf16.mxu0 0
    %3223 = vmatpush1.bf16.msra.mxu0 %v3211
    %3224 = vmatprep.subr.bf16.mxu0 0
    %3225 = vmatpush1.bf16.msra.mxu0 %v3212
    %3226 = vmatprep.subr.bf16.mxu0 0
    %3227 = vmatpush1.bf16.msra.mxu0 %v3213
    %3228 = vmatprep.subr.bf16.mxu0 0
    %3229 = vmatpush1.bf16.msra.mxu0 %v3214
    %3230 = vmatprep.subr.bf16.mxu0 0
    %3231 = vmatpush1.bf16.msra.mxu0 0
    %3232 = vmatprep.subr.bf16.mxu0 0
    %3233 = vmatpush1.bf16.msra.mxu0 0
    %3234 = vmatprep.subr.bf16.mxu0 0
    %3235 = vmatpush1.bf16.msra.mxu0 0
    %3236 = vmatprep.subr.bf16.mxu0 0
    %3237 = vmatpush1.bf16.msra.mxu0 0
    %3238 = vmatprep.subr.bf16.mxu0 0
    %3239 = vmatpush1.bf16.msra.mxu0 0
    %3240 = vmatprep.subr.bf16.mxu0 0
    %3241 = vmatpush1.bf16.msra.mxu0 0
    %3242 = vmatprep.subr.bf16.mxu0 0
    %3243 = vmatpush1.bf16.msra.mxu0 0
    %3244 = vmatprep.subr.bf16.mxu0 0
    %3245 = vmatpush1.bf16.msra.mxu0 0
    %3246 = vmatprep.subr.bf16.mxu0 0
    %3247 = vmatpush1.bf16.msra.mxu0 0
    %3248 = vmatprep.subr.bf16.mxu0 0
    %3249 = vmatpush1.bf16.msra.mxu0 0
    %3250 = vmatprep.subr.bf16.mxu0 0
    %3251 = vmatpush1.bf16.msra.mxu0 0
    %3252 = vmatprep.subr.bf16.mxu0 0
    %3253 = vmatpush1.bf16.msra.mxu0 0
    %3254 = vmatprep.mubr.bf16.mxu0 0
    %3255 = vmatmul.mubr.bf16.gmra.mrb[0].mxu0 %v3220
    %v3256 = vpop.f32.mrb[0].mxu0
    %v3257 = vadd.f32 0.0, %v3256
    %v3258 = vpop.f32.mrb[0].mxu0
    %v3259 = vpop.f32.mrb[0].mxu0
    %v3260 = vpop.f32.mrb[0].mxu0
    %3261 = vdwg.mxu0
    %v3270 = vunpack.c.l.b16 %v2957
    %v3271 = vunpack.c.l.b16 %v2958
    %v3272 = vunpack.c.l.b16 %v2959
    %v3273 = vunpack.c.l.b16 %v2960
    %v3274 = vunpack.c.l.b16 %v2961
    %v3275 = vunpack.c.l.b16 %v2962
    %v3276 = vunpack.c.l.b16 %v2963
    %v3277 = vunpack.c.l.b16 %v2964
    %v3278 = vpack.c.b16 %v3271, %v3270
    %v3279 = vpack.c.b16 %v3273, %v3272
    %v3280 = vpack.c.b16 %v3275, %v3274
    %v3281 = vpack.c.b16 %v3277, %v3276
    %v3287 = vsel %vm1032, %v2919, 0
    %3289 = vmatprep.subr.bf16.mxu0 0
    %3290 = vmatpush1.bf16.msra.mxu0 %v3278
    %3291 = vmatprep.subr.bf16.mxu0 0
    %3292 = vmatpush1.bf16.msra.mxu0 %v3279
    %3293 = vmatprep.subr.bf16.mxu0 0
    %3294 = vmatpush1.bf16.msra.mxu0 %v3280
    %3295 = vmatprep.subr.bf16.mxu0 0
    %3296 = vmatpush1.bf16.msra.mxu0 %v3281
    %3297 = vmatprep.subr.bf16.mxu0 0
    %3298 = vmatpush1.bf16.msra.mxu0 0
    %3299 = vmatprep.subr.bf16.mxu0 0
    %3300 = vmatpush1.bf16.msra.mxu0 0
    %3301 = vmatprep.subr.bf16.mxu0 0
    %3302 = vmatpush1.bf16.msra.mxu0 0
    %3303 = vmatprep.subr.bf16.mxu0 0
    %3304 = vmatpush1.bf16.msra.mxu0 0
    %3305 = vmatprep.subr.bf16.mxu0 0
    %3306 = vmatpush1.bf16.msra.mxu0 0
    %3307 = vmatprep.subr.bf16.mxu0 0
    %3308 = vmatpush1.bf16.msra.mxu0 0
    %3309 = vmatprep.subr.bf16.mxu0 0
    %3310 = vmatpush1.bf16.msra.mxu0 0
    %3311 = vmatprep.subr.bf16.mxu0 0
    %3312 = vmatpush1.bf16.msra.mxu0 0
    %3313 = vmatprep.subr.bf16.mxu0 0
    %3314 = vmatpush1.bf16.msra.mxu0 0
    %3315 = vmatprep.subr.bf16.mxu0 0
    %3316 = vmatpush1.bf16.msra.mxu0 0
    %3317 = vmatprep.subr.bf16.mxu0 0
    %3318 = vmatpush1.bf16.msra.mxu0 0
    %3319 = vmatprep.subr.bf16.mxu0 0
    %3320 = vmatpush1.bf16.msra.mxu0 0
    %3321 = vmatprep.mubr.bf16.mxu0 0
    %3322 = vmatmul.mubr.bf16.gmra.mrb[0].mxu0 %v3287
    %v3323 = vpop.f32.mrb[0].mxu0
    %v3324 = vadd.f32 0.0, %v3323
    %v3325 = vpop.f32.mrb[0].mxu0
    %v3326 = vpop.f32.mrb[0].mxu0
    %v3327 = vpop.f32.mrb[0].mxu0
    %3328 = vdwg.mxu0
    %v3337 = vunpack.c.l.b16 %v2965
    %v3338 = vunpack.c.l.b16 %v2966
    %v3339 = vunpack.c.l.b16 %v2967
    %v3340 = vunpack.c.l.b16 %v2968
    %v3341 = vunpack.c.l.b16 %v2969
    %v3342 = vunpack.c.l.b16 %v2970
    %v3343 = vunpack.c.l.b16 %v2971
    %v3344 = vunpack.c.l.b16 %v2972
    %v3345 = vpack.c.b16 %v3338, %v3337
    %v3346 = vpack.c.b16 %v3340, %v3339
    %v3347 = vpack.c.b16 %v3342, %v3341
    %v3348 = vpack.c.b16 %v3344, %v3343
    %v3354 = vsel %vm1032, %v2920, 0
    %3356 = vmatprep.subr.bf16.mxu0 0
    %3357 = vmatpush1.bf16.msra.mxu0 %v3345
    %3358 = vmatprep.subr.bf16.mxu0 0
    %3359 = vmatpush1.bf16.msra.mxu0 %v3346
    %3360 = vmatprep.subr.bf16.mxu0 0
    %3361 = vmatpush1.bf16.msra.mxu0 %v3347
    %3362 = vmatprep.subr.bf16.mxu0 0
    %3363 = vmatpush1.bf16.msra.mxu0 %v3348
    %3364 = vmatprep.subr.bf16.mxu0 0
    %3365 = vmatpush1.bf16.msra.mxu0 0
    %3366 = vmatprep.subr.bf16.mxu0 0
    %3367 = vmatpush1.bf16.msra.mxu0 0
    %3368 = vmatprep.subr.bf16.mxu0 0
    %3369 = vmatpush1.bf16.msra.mxu0 0
    %3370 = vmatprep.subr.bf16.mxu0 0
    %3371 = vmatpush1.bf16.msra.mxu0 0
    %3372 = vmatprep.subr.bf16.mxu0 0
    %3373 = vmatpush1.bf16.msra.mxu0 0
    %3374 = vmatprep.subr.bf16.mxu0 0
    %3375 = vmatpush1.bf16.msra.mxu0 0
    %3376 = vmatprep.subr.bf16.mxu0 0
    %3377 = vmatpush1.bf16.msra.mxu0 0
    %3378 = vmatprep.subr.bf16.mxu0 0
    %3379 = vmatpush1.bf16.msra.mxu0 0
    %3380 = vmatprep.subr.bf16.mxu0 0
    %3381 = vmatpush1.bf16.msra.mxu0 0
    %3382 = vmatprep.subr.bf16.mxu0 0
    %3383 = vmatpush1.bf16.msra.mxu0 0
    %3384 = vmatprep.subr.bf16.mxu0 0
    %3385 = vmatpush1.bf16.msra.mxu0 0
    %3386 = vmatprep.subr.bf16.mxu0 0
    %3387 = vmatpush1.bf16.msra.mxu0 0
    %3388 = vmatprep.mubr.bf16.mxu0 0
    %3389 = vmatmul.mubr.bf16.gmra.mrb[0].mxu0 %v3354
    %v3390 = vpop.f32.mrb[0].mxu0
    %v3391 = vadd.f32 0.0, %v3390
    %v3392 = vpop.f32.mrb[0].mxu0
    %v3393 = vpop.f32.mrb[0].mxu0
    %v3394 = vpop.f32.mrb[0].mxu0
    %3395 = vdwg.mxu0
    %v3404 = vunpack.c.l.b16 %v2973
    %v3405 = vunpack.c.l.b16 %v2974
    %v3406 = vunpack.c.l.b16 %v2975
    %v3407 = vunpack.c.l.b16 %v2976
    %v3408 = vunpack.c.l.b16 %v2977
    %v3409 = vunpack.c.l.b16 %v2978
    %v3410 = vunpack.c.l.b16 %v2979
    %v3411 = vunpack.c.l.b16 %v2980
    %v3412 = vpack.c.b16 %v3405, %v3404
    %v3413 = vpack.c.b16 %v3407, %v3406
    %v3414 = vpack.c.b16 %v3409, %v3408
    %v3415 = vpack.c.b16 %v3411, %v3410
    %v3421 = vsel %vm1032, %v2921, 0
    %3423 = vmatprep.subr.bf16.mxu0 0
    %3424 = vmatpush1.bf16.msra.mxu0 %v3412
    %3425 = vmatprep.subr.bf16.mxu0 0
    %3426 = vmatpush1.bf16.msra.mxu0 %v3413
    %3427 = vmatprep.subr.bf16.mxu0 0
    %3428 = vmatpush1.bf16.msra.mxu0 %v3414
    %3429 = vmatprep.subr.bf16.mxu0 0
    %3430 = vmatpush1.bf16.msra.mxu0 %v3415
    %3431 = vmatprep.subr.bf16.mxu0 0
    %3432 = vmatpush1.bf16.msra.mxu0 0
    %3433 = vmatprep.subr.bf16.mxu0 0
    %3434 = vmatpush1.bf16.msra.mxu0 0
    %3435 = vmatprep.subr.bf16.mxu0 0
    %3436 = vmatpush1.bf16.msra.mxu0 0
    %3437 = vmatprep.subr.bf16.mxu0 0
    %3438 = vmatpush1.bf16.msra.mxu0 0
    %3439 = vmatprep.subr.bf16.mxu0 0
    %3440 = vmatpush1.bf16.msra.mxu0 0
    %3441 = vmatprep.subr.bf16.mxu0 0
    %3442 = vmatpush1.bf16.msra.mxu0 0
    %3443 = vmatprep.subr.bf16.mxu0 0
    %3444 = vmatpush1.bf16.msra.mxu0 0
    %3445 = vmatprep.subr.bf16.mxu0 0
    %3446 = vmatpush1.bf16.msra.mxu0 0
    %3447 = vmatprep.subr.bf16.mxu0 0
    %3448 = vmatpush1.bf16.msra.mxu0 0
    %3449 = vmatprep.subr.bf16.mxu0 0
    %3450 = vmatpush1.bf16.msra.mxu0 0
    %3451 = vmatprep.subr.bf16.mxu0 0
    %3452 = vmatpush1.bf16.msra.mxu0 0
    %3453 = vmatprep.subr.bf16.mxu0 0
    %3454 = vmatpush1.bf16.msra.mxu0 0
    %3455 = vmatprep.mubr.bf16.mxu0 0
    %3456 = vmatmul.mubr.bf16.gmra.mrb[0].mxu0 %v3421
    %v3457 = vpop.f32.mrb[0].mxu0
    %v3458 = vadd.f32 0.0, %v3457
    %v3459 = vpop.f32.mrb[0].mxu0
    %v3460 = vpop.f32.mrb[0].mxu0
    %v3461 = vpop.f32.mrb[0].mxu0
    %3462 = vdwg.mxu0
    %v3471 = vunpack.c.l.b16 %v2981
    %v3472 = vunpack.c.l.b16 %v2982
    %v3473 = vunpack.c.l.b16 %v2983
    %v3474 = vunpack.c.l.b16 %v2984
    %v3475 = vunpack.c.l.b16 %v2985
    %v3476 = vunpack.c.l.b16 %v2986
    %v3477 = vunpack.c.l.b16 %v2987
    %v3478 = vunpack.c.l.b16 %v2988
    %v3479 = vpack.c.b16 %v3472, %v3471
    %v3480 = vpack.c.b16 %v3474, %v3473
    %v3481 = vpack.c.b16 %v3476, %v3475
    %v3482 = vpack.c.b16 %v3478, %v3477
    %v3488 = vsel %vm1032, %v2922, 0
    %3490 = vmatprep.subr.bf16.mxu0 0
    %3491 = vmatpush1.bf16.msra.mxu0 %v3479
    %3492 = vmatprep.subr.bf16.mxu0 0
    %3493 = vmatpush1.bf16.msra.mxu0 %v3480
    %3494 = vmatprep.subr.bf16.mxu0 0
    %3495 = vmatpush1.bf16.msra.mxu0 %v3481
    %3496 = vmatprep.subr.bf16.mxu0 0
    %3497 = vmatpush1.bf16.msra.mxu0 %v3482
    %3498 = vmatprep.subr.bf16.mxu0 0
    %3499 = vmatpush1.bf16.msra.mxu0 0
    %3500 = vmatprep.subr.bf16.mxu0 0
    %3501 = vmatpush1.bf16.msra.mxu0 0
    %3502 = vmatprep.subr.bf16.mxu0 0
    %3503 = vmatpush1.bf16.msra.mxu0 0
    %3504 = vmatprep.subr.bf16.mxu0 0
    %3505 = vmatpush1.bf16.msra.mxu0 0
    %3506 = vmatprep.subr.bf16.mxu0 0
    %3507 = vmatpush1.bf16.msra.mxu0 0
    %3508 = vmatprep.subr.bf16.mxu0 0
    %3509 = vmatpush1.bf16.msra.mxu0 0
    %3510 = vmatprep.subr.bf16.mxu0 0
    %3511 = vmatpush1.bf16.msra.mxu0 0
    %3512 = vmatprep.subr.bf16.mxu0 0
    %3513 = vmatpush1.bf16.msra.mxu0 0
    %3514 = vmatprep.subr.bf16.mxu0 0
    %3515 = vmatpush1.bf16.msra.mxu0 0
    %3516 = vmatprep.subr.bf16.mxu0 0
    %3517 = vmatpush1.bf16.msra.mxu0 0
    %3518 = vmatprep.subr.bf16.mxu0 0
    %3519 = vmatpush1.bf16.msra.mxu0 0
    %3520 = vmatprep.subr.bf16.mxu0 0
    %3521 = vmatpush1.bf16.msra.mxu0 0
    %3522 = vmatprep.mubr.bf16.mxu0 0
    %3523 = vmatmul.mubr.bf16.gmra.mrb[0].mxu0 %v3488
    %v3524 = vpop.f32.mrb[0].mxu0
    %v3525 = vadd.f32 0.0, %v3524
    %v3526 = vpop.f32.mrb[0].mxu0
    %v3527 = vpop.f32.mrb[0].mxu0
    %v3528 = vpop.f32.mrb[0].mxu0
    %3529 = vdwg.mxu0
    %v3538 = vunpack.c.l.b16 %v2989
    %v3539 = vunpack.c.l.b16 %v2990
    %v3540 = vunpack.c.l.b16 %v2991
    %v3541 = vunpack.c.l.b16 %v2992
    %v3542 = vunpack.c.l.b16 %v2993
    %v3543 = vunpack.c.l.b16 %v2994
    %v3544 = vunpack.c.l.b16 %v2995
    %v3545 = vunpack.c.l.b16 %v2996
    %v3546 = vpack.c.b16 %v3539, %v3538
    %v3547 = vpack.c.b16 %v3541, %v3540
    %v3548 = vpack.c.b16 %v3543, %v3542
    %v3549 = vpack.c.b16 %v3545, %v3544
    %v3555 = vsel %vm1032, %v2923, 0
    %3557 = vmatprep.subr.bf16.mxu0 0
    %3558 = vmatpush1.bf16.msra.mxu0 %v3546
    %3559 = vmatprep.subr.bf16.mxu0 0
    %3560 = vmatpush1.bf16.msra.mxu0 %v3547
    %3561 = vmatprep.subr.bf16.mxu0 0
    %3562 = vmatpush1.bf16.msra.mxu0 %v3548
    %3563 = vmatprep.subr.bf16.mxu0 0
    %3564 = vmatpush1.bf16.msra.mxu0 %v3549
    %3565 = vmatprep.subr.bf16.mxu0 0
    %3566 = vmatpush1.bf16.msra.mxu0 0
    %3567 = vmatprep.subr.bf16.mxu0 0
    %3568 = vmatpush1.bf16.msra.mxu0 0
    %3569 = vmatprep.subr.bf16.mxu0 0
    %3570 = vmatpush1.bf16.msra.mxu0 0
    %3571 = vmatprep.subr.bf16.mxu0 0
    %3572 = vmatpush1.bf16.msra.mxu0 0
    %3573 = vmatprep.subr.bf16.mxu0 0
    %3574 = vmatpush1.bf16.msra.mxu0 0
    %3575 = vmatprep.subr.bf16.mxu0 0
    %3576 = vmatpush1.bf16.msra.mxu0 0
    %3577 = vmatprep.subr.bf16.mxu0 0
    %3578 = vmatpush1.bf16.msra.mxu0 0
    %3579 = vmatprep.subr.bf16.mxu0 0
    %3580 = vmatpush1.bf16.msra.mxu0 0
    %3581 = vmatprep.subr.bf16.mxu0 0
    %3582 = vmatpush1.bf16.msra.mxu0 0
    %3583 = vmatprep.subr.bf16.mxu0 0
    %3584 = vmatpush1.bf16.msra.mxu0 0
    %3585 = vmatprep.subr.bf16.mxu0 0
    %3586 = vmatpush1.bf16.msra.mxu0 0
    %3587 = vmatprep.subr.bf16.mxu0 0
    %3588 = vmatpush1.bf16.msra.mxu0 0
    %3589 = vmatprep.mubr.bf16.mxu0 0
    %3590 = vmatmul.mubr.bf16.gmra.mrb[0].mxu0 %v3555
    %v3591 = vpop.f32.mrb[0].mxu0
    %v3592 = vadd.f32 0.0, %v3591
    %v3593 = vpop.f32.mrb[0].mxu0
    %v3594 = vpop.f32.mrb[0].mxu0
    %v3595 = vpop.f32.mrb[0].mxu0
    %3596 = vdwg.mxu0
    %v3605 = vunpack.c.l.b16 %v2997
    %v3606 = vunpack.c.l.b16 %v2998
    %v3607 = vunpack.c.l.b16 %v2999
    %v3608 = vunpack.c.l.b16 %v3000
    %v3609 = vunpack.c.l.b16 %v3001
    %v3610 = vunpack.c.l.b16 %v3002
    %v3611 = vunpack.c.l.b16 %v3003
    %v3612 = vunpack.c.l.b16 %v3004
    %v3613 = vpack.c.b16 %v3606, %v3605
    %v3614 = vpack.c.b16 %v3608, %v3607
    %v3615 = vpack.c.b16 %v3610, %v3609
    %v3616 = vpack.c.b16 %v3612, %v3611
    %v3622 = vsel %vm1032, %v2924, 0
    %3624 = vmatprep.subr.bf16.mxu0 0
    %3625 = vmatpush1.bf16.msra.mxu0 %v3613
    %3626 = vmatprep.subr.bf16.mxu0 0
    %3627 = vmatpush1.bf16.msra.mxu0 %v3614
    %3628 = vmatprep.subr.bf16.mxu0 0
    %3629 = vmatpush1.bf16.msra.mxu0 %v3615
    %3630 = vmatprep.subr.bf16.mxu0 0
    %3631 = vmatpush1.bf16.msra.mxu0 %v3616
    %3632 = vmatprep.subr.bf16.mxu0 0
    %3633 = vmatpush1.bf16.msra.mxu0 0
    %3634 = vmatprep.subr.bf16.mxu0 0
    %3635 = vmatpush1.bf16.msra.mxu0 0
    %3636 = vmatprep.subr.bf16.mxu0 0
    %3637 = vmatpush1.bf16.msra.mxu0 0
    %3638 = vmatprep.subr.bf16.mxu0 0
    %3639 = vmatpush1.bf16.msra.mxu0 0
    %3640 = vmatprep.subr.bf16.mxu0 0
    %3641 = vmatpush1.bf16.msra.mxu0 0
    %3642 = vmatprep.subr.bf16.mxu0 0
    %3643 = vmatpush1.bf16.msra.mxu0 0
    %3644 = vmatprep.subr.bf16.mxu0 0
    %3645 = vmatpush1.bf16.msra.mxu0 0
    %3646 = vmatprep.subr.bf16.mxu0 0
    %3647 = vmatpush1.bf16.msra.mxu0 0
    %3648 = vmatprep.subr.bf16.mxu0 0
    %3649 = vmatpush1.bf16.msra.mxu0 0
    %3650 = vmatprep.subr.bf16.mxu0 0
    %3651 = vmatpush1.bf16.msra.mxu0 0
    %3652 = vmatprep.subr.bf16.mxu0 0
    %3653 = vmatpush1.bf16.msra.mxu0 0
    %3654 = vmatprep.subr.bf16.mxu0 0
    %3655 = vmatpush1.bf16.msra.mxu0 0
    %3656 = vmatprep.mubr.bf16.mxu0 0
    %3657 = vmatmul.mubr.bf16.gmra.mrb[0].mxu0 %v3622
    %v3658 = vpop.f32.mrb[0].mxu0
    %v3659 = vadd.f32 0.0, %v3658
    %v3660 = vpop.f32.mrb[0].mxu0
    %v3661 = vpop.f32.mrb[0].mxu0
    %v3662 = vpop.f32.mrb[0].mxu0
    %3663 = vdwg.mxu0
    %v3672 = vunpack.c.l.b16 %v3005
    %v3673 = vunpack.c.l.b16 %v3006
    %v3674 = vunpack.c.l.b16 %v3007
    %v3675 = vunpack.c.l.b16 %v3008
    %v3676 = vunpack.c.l.b16 %v3009
    %v3677 = vunpack.c.l.b16 %v3010
    %v3678 = vunpack.c.l.b16 %v3011
    %v3679 = vunpack.c.l.b16 %v3012
    %v3680 = vpack.c.b16 %v3673, %v3672
    %v3681 = vpack.c.b16 %v3675, %v3674
    %v3682 = vpack.c.b16 %v3677, %v3676
    %v3683 = vpack.c.b16 %v3679, %v3678
    %v3689 = vsel %vm1032, %v2925, 0
    %3691 = vmatprep.subr.bf16.mxu0 0
    %3692 = vmatpush1.bf16.msra.mxu0 %v3680
    %3693 = vmatprep.subr.bf16.mxu0 0
    %3694 = vmatpush1.bf16.msra.mxu0 %v3681
    %3695 = vmatprep.subr.bf16.mxu0 0
    %3696 = vmatpush1.bf16.msra.mxu0 %v3682
    %3697 = vmatprep.subr.bf16.mxu0 0
    %3698 = vmatpush1.bf16.msra.mxu0 %v3683
    %3699 = vmatprep.subr.bf16.mxu0 0
    %3700 = vmatpush1.bf16.msra.mxu0 0
    %3701 = vmatprep.subr.bf16.mxu0 0
    %3702 = vmatpush1.bf16.msra.mxu0 0
    %3703 = vmatprep.subr.bf16.mxu0 0
    %3704 = vmatpush1.bf16.msra.mxu0 0
    %3705 = vmatprep.subr.bf16.mxu0 0
    %3706 = vmatpush1.bf16.msra.mxu0 0
    %3707 = vmatprep.subr.bf16.mxu0 0
    %3708 = vmatpush1.bf16.msra.mxu0 0
    %3709 = vmatprep.subr.bf16.mxu0 0
    %3710 = vmatpush1.bf16.msra.mxu0 0
    %3711 = vmatprep.subr.bf16.mxu0 0
    %3712 = vmatpush1.bf16.msra.mxu0 0
    %3713 = vmatprep.subr.bf16.mxu0 0
    %3714 = vmatpush1.bf16.msra.mxu0 0
    %3715 = vmatprep.subr.bf16.mxu0 0
    %3716 = vmatpush1.bf16.msra.mxu0 0
    %3717 = vmatprep.subr.bf16.mxu0 0
    %3718 = vmatpush1.bf16.msra.mxu0 0
    %3719 = vmatprep.subr.bf16.mxu0 0
    %3720 = vmatpush1.bf16.msra.mxu0 0
    %3721 = vmatprep.subr.bf16.mxu0 0
    %3722 = vmatpush1.bf16.msra.mxu0 0
    %3723 = vmatprep.mubr.bf16.mxu0 0
    %3724 = vmatmul.mubr.bf16.gmra.mrb[0].mxu0 %v3689
    %v3725 = vpop.f32.mrb[0].mxu0
    %v3726 = vadd.f32 0.0, %v3725
    %v3727 = vpop.f32.mrb[0].mxu0
    %v3728 = vpop.f32.mrb[0].mxu0
    %v3729 = vpop.f32.mrb[0].mxu0
    %3730 = vdwg.mxu0
    %v3739 = vunpack.c.l.b16 %v3013
    %v3740 = vunpack.c.l.b16 %v3014
    %v3741 = vunpack.c.l.b16 %v3015
    %v3742 = vunpack.c.l.b16 %v3016
    %v3743 = vunpack.c.l.b16 %v3017
    %v3744 = vunpack.c.l.b16 %v3018
    %v3745 = vunpack.c.l.b16 %v3019
    %v3746 = vunpack.c.l.b16 %v3020
    %v3747 = vpack.c.b16 %v3740, %v3739
    %v3748 = vpack.c.b16 %v3742, %v3741
    %v3749 = vpack.c.b16 %v3744, %v3743
    %v3750 = vpack.c.b16 %v3746, %v3745
    %v3756 = vsel %vm1032, %v2926, 0
    %3758 = vmatprep.subr.bf16.mxu0 0
    %3759 = vmatpush1.bf16.msra.mxu0 %v3747
    %3760 = vmatprep.subr.bf16.mxu0 0
    %3761 = vmatpush1.bf16.msra.mxu0 %v3748
    %3762 = vmatprep.subr.bf16.mxu0 0
    %3763 = vmatpush1.bf16.msra.mxu0 %v3749
    %3764 = vmatprep.subr.bf16.mxu0 0
    %3765 = vmatpush1.bf16.msra.mxu0 %v3750
    %3766 = vmatprep.subr.bf16.mxu0 0
    %3767 = vmatpush1.bf16.msra.mxu0 0
    %3768 = vmatprep.subr.bf16.mxu0 0
    %3769 = vmatpush1.bf16.msra.mxu0 0
    %3770 = vmatprep.subr.bf16.mxu0 0
    %3771 = vmatpush1.bf16.msra.mxu0 0
    %3772 = vmatprep.subr.bf16.mxu0 0
    %3773 = vmatpush1.bf16.msra.mxu0 0
    %3774 = vmatprep.subr.bf16.mxu0 0
    %3775 = vmatpush1.bf16.msra.mxu0 0
    %3776 = vmatprep.subr.bf16.mxu0 0
    %3777 = vmatpush1.bf16.msra.mxu0 0
    %3778 = vmatprep.subr.bf16.mxu0 0
    %3779 = vmatpush1.bf16.msra.mxu0 0
    %3780 = vmatprep.subr.bf16.mxu0 0
    %3781 = vmatpush1.bf16.msra.mxu0 0
    %3782 = vmatprep.subr.bf16.mxu0 0
    %3783 = vmatpush1.bf16.msra.mxu0 0
    %3784 = vmatprep.subr.bf16.mxu0 0
    %3785 = vmatpush1.bf16.msra.mxu0 0
    %3786 = vmatprep.subr.bf16.mxu0 0
    %3787 = vmatpush1.bf16.msra.mxu0 0
    %3788 = vmatprep.subr.bf16.mxu0 0
    %3789 = vmatpush1.bf16.msra.mxu0 0
    %3790 = vmatprep.mubr.bf16.mxu0 0
    %3791 = vmatmul.mubr.bf16.gmra.mrb[0].mxu0 %v3756
    %v3792 = vpop.f32.mrb[0].mxu0
    %v3793 = vadd.f32 0.0, %v3792
    %v3794 = vpop.f32.mrb[0].mxu0
    %v3795 = vpop.f32.mrb[0].mxu0
    %v3796 = vpop.f32.mrb[0].mxu0
    %3797 = vdwg.mxu0
    %v3806 = vunpack.c.l.b16 %v3021
    %v3807 = vunpack.c.l.b16 %v3022
    %v3808 = vunpack.c.l.b16 %v3023
    %v3809 = vunpack.c.l.b16 %v3024
    %v3810 = vunpack.c.l.b16 %v3025
    %v3811 = vunpack.c.l.b16 %v3026
    %v3812 = vunpack.c.l.b16 %v3027
    %v3813 = vunpack.c.l.b16 %v3028
    %v3814 = vpack.c.b16 %v3807, %v3806
    %v3815 = vpack.c.b16 %v3809, %v3808
    %v3816 = vpack.c.b16 %v3811, %v3810
    %v3817 = vpack.c.b16 %v3813, %v3812
    %v3823 = vsel %vm1032, %v2927, 0
    %3825 = vmatprep.subr.bf16.mxu0 0
    %3826 = vmatpush1.bf16.msra.mxu0 %v3814
    %3827 = vmatprep.subr.bf16.mxu0 0
    %3828 = vmatpush1.bf16.msra.mxu0 %v3815
    %3829 = vmatprep.subr.bf16.mxu0 0
    %3830 = vmatpush1.bf16.msra.mxu0 %v3816
    %3831 = vmatprep.subr.bf16.mxu0 0
    %3832 = vmatpush1.bf16.msra.mxu0 %v3817
    %3833 = vmatprep.subr.bf16.mxu0 0
    %3834 = vmatpush1.bf16.msra.mxu0 0
    %3835 = vmatprep.subr.bf16.mxu0 0
    %3836 = vmatpush1.bf16.msra.mxu0 0
    %3837 = vmatprep.subr.bf16.mxu0 0
    %3838 = vmatpush1.bf16.msra.mxu0 0
    %3839 = vmatprep.subr.bf16.mxu0 0
    %3840 = vmatpush1.bf16.msra.mxu0 0
    %3841 = vmatprep.subr.bf16.mxu0 0
    %3842 = vmatpush1.bf16.msra.mxu0 0
    %3843 = vmatprep.subr.bf16.mxu0 0
    %3844 = vmatpush1.bf16.msra.mxu0 0
    %3845 = vmatprep.subr.bf16.mxu0 0
    %3846 = vmatpush1.bf16.msra.mxu0 0
    %3847 = vmatprep.subr.bf16.mxu0 0
    %3848 = vmatpush1.bf16.msra.mxu0 0
    %3849 = vmatprep.subr.bf16.mxu0 0
    %3850 = vmatpush1.bf16.msra.mxu0 0
    %3851 = vmatprep.subr.bf16.mxu0 0
    %3852 = vmatpush1.bf16.msra.mxu0 0
    %3853 = vmatprep.subr.bf16.mxu0 0
    %3854 = vmatpush1.bf16.msra.mxu0 0
    %3855 = vmatprep.subr.bf16.mxu0 0
    %3856 = vmatpush1.bf16.msra.mxu0 0
    %3857 = vmatprep.mubr.bf16.mxu0 0
    %3858 = vmatmul.mubr.bf16.gmra.mrb[0].mxu0 %v3823
    %v3859 = vpop.f32.mrb[0].mxu0
    %v3860 = vadd.f32 0.0, %v3859
    %v3861 = vpop.f32.mrb[0].mxu0
    %v3862 = vpop.f32.mrb[0].mxu0
    %v3863 = vpop.f32.mrb[0].mxu0
    %3864 = vdwg.mxu0
    %v3873 = vunpack.c.l.b16 %v3029
    %v3874 = vunpack.c.l.b16 %v3030
    %v3875 = vunpack.c.l.b16 %v3031
    %v3876 = vunpack.c.l.b16 %v3032
    %v3877 = vunpack.c.l.b16 %v3033
    %v3878 = vunpack.c.l.b16 %v3034
    %v3879 = vunpack.c.l.b16 %v3035
    %v3880 = vunpack.c.l.b16 %v3036
    %v3881 = vpack.c.b16 %v3874, %v3873
    %v3882 = vpack.c.b16 %v3876, %v3875
    %v3883 = vpack.c.b16 %v3878, %v3877
    %v3884 = vpack.c.b16 %v3880, %v3879
    %v3890 = vsel %vm1032, %v2928, 0
    %3892 = vmatprep.subr.bf16.mxu0 0
    %3893 = vmatpush1.bf16.msra.mxu0 %v3881
    %3894 = vmatprep.subr.bf16.mxu0 0
    %3895 = vmatpush1.bf16.msra.mxu0 %v3882
    %3896 = vmatprep.subr.bf16.mxu0 0
    %3897 = vmatpush1.bf16.msra.mxu0 %v3883
    %3898 = vmatprep.subr.bf16.mxu0 0
    %3899 = vmatpush1.bf16.msra.mxu0 %v3884
    %3900 = vmatprep.subr.bf16.mxu0 0
    %3901 = vmatpush1.bf16.msra.mxu0 0
    %3902 = vmatprep.subr.bf16.mxu0 0
    %3903 = vmatpush1.bf16.msra.mxu0 0
    %3904 = vmatprep.subr.bf16.mxu0 0
    %3905 = vmatpush1.bf16.msra.mxu0 0
    %3906 = vmatprep.subr.bf16.mxu0 0
    %3907 = vmatpush1.bf16.msra.mxu0 0
    %3908 = vmatprep.subr.bf16.mxu0 0
    %3909 = vmatpush1.bf16.msra.mxu0 0
    %3910 = vmatprep.subr.bf16.mxu0 0
    %3911 = vmatpush1.bf16.msra.mxu0 0
    %3912 = vmatprep.subr.bf16.mxu0 0
    %3913 = vmatpush1.bf16.msra.mxu0 0
    %3914 = vmatprep.subr.bf16.mxu0 0
    %3915 = vmatpush1.bf16.msra.mxu0 0
    %3916 = vmatprep.subr.bf16.mxu0 0
    %3917 = vmatpush1.bf16.msra.mxu0 0
    %3918 = vmatprep.subr.bf16.mxu0 0
    %3919 = vmatpush1.bf16.msra.mxu0 0
    %3920 = vmatprep.subr.bf16.mxu0 0
    %3921 = vmatpush1.bf16.msra.mxu0 0
    %3922 = vmatprep.subr.bf16.mxu0 0
    %3923 = vmatpush1.bf16.msra.mxu0 0
    %3924 = vmatprep.mubr.bf16.mxu0 0
    %3925 = vmatmul.mubr.bf16.gmra.mrb[0].mxu0 %v3890
    %v3926 = vpop.f32.mrb[0].mxu0
    %v3927 = vadd.f32 0.0, %v3926
    %v3928 = vpop.f32.mrb[0].mxu0
    %v3929 = vpop.f32.mrb[0].mxu0
    %v3930 = vpop.f32.mrb[0].mxu0
    %3931 = vdwg.mxu0
    %v3940 = vunpack.c.l.b16 %v3037
    %v3941 = vunpack.c.l.b16 %v3038
    %v3942 = vunpack.c.l.b16 %v3039
    %v3943 = vunpack.c.l.b16 %v3040
    %v3944 = vunpack.c.l.b16 %v3041
    %v3945 = vunpack.c.l.b16 %v3042
    %v3946 = vunpack.c.l.b16 %v3043
    %v3947 = vunpack.c.l.b16 %v3044
    %v3948 = vpack.c.b16 %v3941, %v3940
    %v3949 = vpack.c.b16 %v3943, %v3942
    %v3950 = vpack.c.b16 %v3945, %v3944
    %v3951 = vpack.c.b16 %v3947, %v3946
    %v3957 = vsel %vm1032, %v2929, 0
    %3959 = vmatprep.subr.bf16.mxu0 0
    %3960 = vmatpush1.bf16.msra.mxu0 %v3948
    %3961 = vmatprep.subr.bf16.mxu0 0
    %3962 = vmatpush1.bf16.msra.mxu0 %v3949
    %3963 = vmatprep.subr.bf16.mxu0 0
    %3964 = vmatpush1.bf16.msra.mxu0 %v3950
    %3965 = vmatprep.subr.bf16.mxu0 0
    %3966 = vmatpush1.bf16.msra.mxu0 %v3951
    %3967 = vmatprep.subr.bf16.mxu0 0
    %3968 = vmatpush1.bf16.msra.mxu0 0
    %3969 = vmatprep.subr.bf16.mxu0 0
    %3970 = vmatpush1.bf16.msra.mxu0 0
    %3971 = vmatprep.subr.bf16.mxu0 0
    %3972 = vmatpush1.bf16.msra.mxu0 0
    %3973 = vmatprep.subr.bf16.mxu0 0
    %3974 = vmatpush1.bf16.msra.mxu0 0
    %3975 = vmatprep.subr.bf16.mxu0 0
    %3976 = vmatpush1.bf16.msra.mxu0 0
    %3977 = vmatprep.subr.bf16.mxu0 0
    %3978 = vmatpush1.bf16.msra.mxu0 0
    %3979 = vmatprep.subr.bf16.mxu0 0
    %3980 = vmatpush1.bf16.msra.mxu0 0
    %3981 = vmatprep.subr.bf16.mxu0 0
    %3982 = vmatpush1.bf16.msra.mxu0 0
    %3983 = vmatprep.subr.bf16.mxu0 0
    %3984 = vmatpush1.bf16.msra.mxu0 0
    %3985 = vmatprep.subr.bf16.mxu0 0
    %3986 = vmatpush1.bf16.msra.mxu0 0
    %3987 = vmatprep.subr.bf16.mxu0 0
    %3988 = vmatpush1.bf16.msra.mxu0 0
    %3989 = vmatprep.subr.bf16.mxu0 0
    %3990 = vmatpush1.bf16.msra.mxu0 0
    %3991 = vmatprep.mubr.bf16.mxu0 0
    %3992 = vmatmul.mubr.bf16.gmra.mrb[0].mxu0 %v3957
    %v3993 = vpop.f32.mrb[0].mxu0
    %v3994 = vadd.f32 0.0, %v3993
    %v3995 = vpop.f32.mrb[0].mxu0
    %v3996 = vpop.f32.mrb[0].mxu0
    %v3997 = vpop.f32.mrb[0].mxu0
    %3998 = vdwg.mxu0
    %v4007 = vunpack.c.l.b16 %v3045
    %v4008 = vunpack.c.l.b16 %v3046
    %v4009 = vunpack.c.l.b16 %v3047
    %v4010 = vunpack.c.l.b16 %v3048
    %v4011 = vunpack.c.l.b16 %v3049
    %v4012 = vunpack.c.l.b16 %v3050
    %v4013 = vunpack.c.l.b16 %v3051
    %v4014 = vunpack.c.l.b16 %v3052
    %v4015 = vpack.c.b16 %v4008, %v4007
    %v4016 = vpack.c.b16 %v4010, %v4009
    %v4017 = vpack.c.b16 %v4012, %v4011
    %v4018 = vpack.c.b16 %v4014, %v4013
    %v4024 = vsel %vm1032, %v2930, 0
    %4026 = vmatprep.subr.bf16.mxu0 0
    %4027 = vmatpush1.bf16.msra.mxu0 %v4015
    %4028 = vmatprep.subr.bf16.mxu0 0
    %4029 = vmatpush1.bf16.msra.mxu0 %v4016
    %4030 = vmatprep.subr.bf16.mxu0 0
    %4031 = vmatpush1.bf16.msra.mxu0 %v4017
    %4032 = vmatprep.subr.bf16.mxu0 0
    %4033 = vmatpush1.bf16.msra.mxu0 %v4018
    %4034 = vmatprep.subr.bf16.mxu0 0
    %4035 = vmatpush1.bf16.msra.mxu0 0
    %4036 = vmatprep.subr.bf16.mxu0 0
    %4037 = vmatpush1.bf16.msra.mxu0 0
    %4038 = vmatprep.subr.bf16.mxu0 0
    %4039 = vmatpush1.bf16.msra.mxu0 0
    %4040 = vmatprep.subr.bf16.mxu0 0
    %4041 = vmatpush1.bf16.msra.mxu0 0
    %4042 = vmatprep.subr.bf16.mxu0 0
    %4043 = vmatpush1.bf16.msra.mxu0 0
    %4044 = vmatprep.subr.bf16.mxu0 0
    %4045 = vmatpush1.bf16.msra.mxu0 0
    %4046 = vmatprep.subr.bf16.mxu0 0
    %4047 = vmatpush1.bf16.msra.mxu0 0
    %4048 = vmatprep.subr.bf16.mxu0 0
    %4049 = vmatpush1.bf16.msra.mxu0 0
    %4050 = vmatprep.subr.bf16.mxu0 0
    %4051 = vmatpush1.bf16.msra.mxu0 0
    %4052 = vmatprep.subr.bf16.mxu0 0
    %4053 = vmatpush1.bf16.msra.mxu0 0
    %4054 = vmatprep.subr.bf16.mxu0 0
    %4055 = vmatpush1.bf16.msra.mxu0 0
    %4056 = vmatprep.subr.bf16.mxu0 0
    %4057 = vmatpush1.bf16.msra.mxu0 0
    %4058 = vmatprep.mubr.bf16.mxu0 0
    %4059 = vmatmul.mubr.bf16.gmra.mrb[0].mxu0 %v4024
    %v4060 = vpop.f32.mrb[0].mxu0
    %v4061 = vadd.f32 0.0, %v4060
    %v4062 = vpop.f32.mrb[0].mxu0
    %v4063 = vpop.f32.mrb[0].mxu0
    %v4064 = vpop.f32.mrb[0].mxu0
    %4065 = vdwg.mxu0
    %v4074 = vunpack.c.l.b16 %v3053
    %v4075 = vunpack.c.l.b16 %v3054
    %v4076 = vunpack.c.l.b16 %v3055
    %v4077 = vunpack.c.l.b16 %v3056
    %v4078 = vunpack.c.l.b16 %v3057
    %v4079 = vunpack.c.l.b16 %v3058
    %v4080 = vunpack.c.l.b16 %v3059
    %v4081 = vunpack.c.l.b16 %v3060
    %v4082 = vpack.c.b16 %v4075, %v4074
    %v4083 = vpack.c.b16 %v4077, %v4076
    %v4084 = vpack.c.b16 %v4079, %v4078
    %v4085 = vpack.c.b16 %v4081, %v4080
    %v4091 = vsel %vm1032, %v2931, 0
    %4093 = vmatprep.subr.bf16.mxu0 0
    %4094 = vmatpush1.bf16.msra.mxu0 %v4082
    %4095 = vmatprep.subr.bf16.mxu0 0
    %4096 = vmatpush1.bf16.msra.mxu0 %v4083
    %4097 = vmatprep.subr.bf16.mxu0 0
    %4098 = vmatpush1.bf16.msra.mxu0 %v4084
    %4099 = vmatprep.subr.bf16.mxu0 0
    %4100 = vmatpush1.bf16.msra.mxu0 %v4085
    %4101 = vmatprep.subr.bf16.mxu0 0
    %4102 = vmatpush1.bf16.msra.mxu0 0
    %4103 = vmatprep.subr.bf16.mxu0 0
    %4104 = vmatpush1.bf16.msra.mxu0 0
    %4105 = vmatprep.subr.bf16.mxu0 0
    %4106 = vmatpush1.bf16.msra.mxu0 0
    %4107 = vmatprep.subr.bf16.mxu0 0
    %4108 = vmatpush1.bf16.msra.mxu0 0
    %4109 = vmatprep.subr.bf16.mxu0 0
    %4110 = vmatpush1.bf16.msra.mxu0 0
    %4111 = vmatprep.subr.bf16.mxu0 0
    %4112 = vmatpush1.bf16.msra.mxu0 0
    %4113 = vmatprep.subr.bf16.mxu0 0
    %4114 = vmatpush1.bf16.msra.mxu0 0
    %4115 = vmatprep.subr.bf16.mxu0 0
    %4116 = vmatpush1.bf16.msra.mxu0 0
    %4117 = vmatprep.subr.bf16.mxu0 0
    %4118 = vmatpush1.bf16.msra.mxu0 0
    %4119 = vmatprep.subr.bf16.mxu0 0
    %4120 = vmatpush1.bf16.msra.mxu0 0
    %4121 = vmatprep.subr.bf16.mxu0 0
    %4122 = vmatpush1.bf16.msra.mxu0 0
    %4123 = vmatprep.subr.bf16.mxu0 0
    %4124 = vmatpush1.bf16.msra.mxu0 0
    %4125 = vmatprep.mubr.bf16.mxu0 0
    %4126 = vmatmul.mubr.bf16.gmra.mrb[0].mxu0 %v4091
    %v4127 = vpop.f32.mrb[0].mxu0
    %v4128 = vadd.f32 0.0, %v4127
    %v4129 = vpop.f32.mrb[0].mxu0
    %v4130 = vpop.f32.mrb[0].mxu0
    %v4131 = vpop.f32.mrb[0].mxu0
    %4132 = vdwg.mxu0
    %v4149 = vrot.slane %v3190, 7
    %v4150 = vsel %vm2098, %v4149, %v3123
    %v4151 = vrot.slane %v3257, 6
    %v4152 = vsel %vm2101, %v4151, %v4150
    %v4153 = vrot.slane %v3324, 5
    %v4154 = vsel %vm2104, %v4153, %v4152
    %v4155 = vrot.slane %v3391, 4
    %v4156 = vsel %vm2107, %v4155, %v4154
    %v4157 = vrot.slane %v3458, 3
    %v4158 = vsel %vm2110, %v4157, %v4156
    %v4159 = vrot.slane %v3525, 2
    %v4160 = vsel %vm2113, %v4159, %v4158
    %v4161 = vrot.slane %v3592, 1
    %v4162 = vsel %vm2116, %v4161, %v4160
    %v4163 = vrot.slane %v3726, 7
    %v4164 = vsel %vm2098, %v4163, %v3659
    %v4165 = vrot.slane %v3793, 6
    %v4166 = vsel %vm2101, %v4165, %v4164
    %v4167 = vrot.slane %v3860, 5
    %v4168 = vsel %vm2104, %v4167, %v4166
    %v4169 = vrot.slane %v3927, 4
    %v4170 = vsel %vm2107, %v4169, %v4168
    %v4171 = vrot.slane %v3994, 3
    %v4172 = vsel %vm2110, %v4171, %v4170
    %v4173 = vrot.slane %v4061, 2
    %v4174 = vsel %vm2113, %v4173, %v4172
    %v4175 = vrot.slane %v4128, 1
    %v4176 = vsel %vm2116, %v4175, %v4174
    %4179 = vrot.lane.b32.xlu0 %v4162, 96
    %v4180 = vpop.permute.xlu0 %4179
    %4181 = vrot.lane.b32.xlu0 %v4176, 96
    %v4182 = vpop.permute.xlu0 %4181
    %v4185 = vrot.slane %v3123, 1
    %v4186 = vsel %vm2098, %v3190, %v4185
    %v4187 = vrot.slane %v3257, 7
    %v4188 = vsel %vm2101, %v4187, %v4186
    %v4189 = vrot.slane %v3324, 6
    %v4190 = vsel %vm2104, %v4189, %v4188
    %v4191 = vrot.slane %v3391, 5
    %v4192 = vsel %vm2107, %v4191, %v4190
    %v4193 = vrot.slane %v3458, 4
    %v4194 = vsel %vm2110, %v4193, %v4192
    %v4195 = vrot.slane %v3525, 3
    %v4196 = vsel %vm2113, %v4195, %v4194
    %v4197 = vrot.slane %v3592, 2
    %v4198 = vsel %vm2116, %v4197, %v4196
    %v4199 = vrot.slane %v3659, 1
    %v4200 = vsel %vm2098, %v3726, %v4199
    %v4201 = vrot.slane %v3793, 7
    %v4202 = vsel %vm2101, %v4201, %v4200
    %v4203 = vrot.slane %v3860, 6
    %v4204 = vsel %vm2104, %v4203, %v4202
    %v4205 = vrot.slane %v3927, 5
    %v4206 = vsel %vm2107, %v4205, %v4204
    %v4207 = vrot.slane %v3994, 4
    %v4208 = vsel %vm2110, %v4207, %v4206
    %v4209 = vrot.slane %v4061, 3
    %v4210 = vsel %vm2113, %v4209, %v4208
    %v4211 = vrot.slane %v4128, 2
    %v4212 = vsel %vm2116, %v4211, %v4210
    %4213 = vrot.lane.b32.xlu0 %v4198, 96
    %v4214 = vpop.permute.xlu0 %4213
    %4215 = vrot.lane.b32.xlu0 %v4212, 96
    %v4216 = vpop.permute.xlu0 %4215
    %4217 = vrot.lane.b32.xlu0 %v4198, 32
    %v4218 = vpop.permute.xlu0 %4217
    %4219 = vrot.lane.b32.xlu0 %v4212, 32
    %v4220 = vpop.permute.xlu0 %4219
    %4221 = vrot.lane.b32.xlu0 %v4214, 32
    %v4222 = vpop.permute.xlu0 %4221
    %4223 = vrot.lane.b32.xlu0 %v4216, 32
    %v4224 = vpop.permute.xlu0 %4223
    %v4229 = vsel %vm445, %v4162, %v4218
    %v4230 = vsel %vm445, %v4176, %v4220
    %v4231 = vsel %vm445, %v4180, %v4222
    %v4232 = vsel %vm445, %v4182, %v4224
    %v4233 = vpack.c.bf16 %v4230, %v4229
    %v4234 = vpack.c.bf16 %v4232, %v4231
    %s4235 = scalar_lea.vmem %s6, 32
    %v4236 = vld [vmem:[%s4235] sm:$0xf]
    %v4237 = vld [vmem:[%s4235 + $0x4] sm:$0xf]
    %v4238 = vld [vmem:[%s4235 + $0x8] sm:$0xf]
    %v4239 = vld [vmem:[%s4235 + $0xc] sm:$0xf]
    %v4240 = vld [vmem:[%s4235 + $0x10] sm:$0xf]
    %v4241 = vld [vmem:[%s4235 + $0x14] sm:$0xf]
    %v4242 = vld [vmem:[%s4235 + $0x18] sm:$0xf]
    %v4243 = vld [vmem:[%s4235 + $0x1c] sm:$0xf]
    %s4244 = scalar_lea.vmem %s7, 1
    %v4245 = vld [vmem:[%s4244] sm:$0x1]
    %v4247 = vlaneseq
    %v4248 = vshrl.u32 %v4247, 7
    %v4249 = vsub.s32 0, %v4248
    %v4250 = vrot.slane %v4245, %v4249
    %v4260 = vunpack.c.l.b16 %v4236
    %v4261 = vunpack.c.l.b16 %v4237
    %v4262 = vunpack.c.l.b16 %v4238
    %v4263 = vunpack.c.l.b16 %v4239
    %v4264 = vunpack.c.l.b16 %v4240
    %v4265 = vunpack.c.l.b16 %v4241
    %v4266 = vunpack.c.l.b16 %v4242
    %v4267 = vunpack.c.l.b16 %v4243
    %v4268 = vpack.c.b16 %v4261, %v4260
    %v4269 = vpack.c.b16 %v4263, %v4262
    %v4270 = vpack.c.b16 %v4265, %v4264
    %v4271 = vpack.c.b16 %v4267, %v4266
    %v4277 = vsel %vm1032, %v2527, 0
    %v4280 = vsel %vm1032, %v2528, 0
    %v4283 = vsel %vm1032, %v2529, 0
    %v4286 = vsel %vm1032, %v2530, 0
    %v4289 = vsel %vm1032, %v2531, 0
    %v4292 = vsel %vm1032, %v2532, 0
    %v4295 = vsel %vm1032, %v2533, 0
    %v4298 = vsel %vm1032, %v2534, 0
    %4300 = vmatprep.subr.bf16.mxu0 0
    %4301 = vmatpush1.bf16.msra.mxu0 %v4268
    %4302 = vmatprep.subr.bf16.mxu0 0
    %4303 = vmatpush1.bf16.msra.mxu0 %v4269
    %4304 = vmatprep.subr.bf16.mxu0 0
    %4305 = vmatpush1.bf16.msra.mxu0 %v4270
    %4306 = vmatprep.subr.bf16.mxu0 0
    %4307 = vmatpush1.bf16.msra.mxu0 %v4271
    %4308 = vmatprep.subr.bf16.mxu0 0
    %4309 = vmatpush1.bf16.msra.mxu0 0
    %4310 = vmatprep.subr.bf16.mxu0 0
    %4311 = vmatpush1.bf16.msra.mxu0 0
    %4312 = vmatprep.subr.bf16.mxu0 0
    %4313 = vmatpush1.bf16.msra.mxu0 0
    %4314 = vmatprep.subr.bf16.mxu0 0
    %4315 = vmatpush1.bf16.msra.mxu0 0
    %4316 = vmatprep.subr.bf16.mxu0 0
    %4317 = vmatpush1.bf16.msra.mxu0 0
    %4318 = vmatprep.subr.bf16.mxu0 0
    %4319 = vmatpush1.bf16.msra.mxu0 0
    %4320 = vmatprep.subr.bf16.mxu0 0
    %4321 = vmatpush1.bf16.msra.mxu0 0
    %4322 = vmatprep.subr.bf16.mxu0 0
    %4323 = vmatpush1.bf16.msra.mxu0 0
    %4324 = vmatprep.subr.bf16.mxu0 0
    %4325 = vmatpush1.bf16.msra.mxu0 0
    %4326 = vmatprep.subr.bf16.mxu0 0
    %4327 = vmatpush1.bf16.msra.mxu0 0
    %4328 = vmatprep.subr.bf16.mxu0 0
    %4329 = vmatpush1.bf16.msra.mxu0 0
    %4330 = vmatprep.subr.bf16.mxu0 0
    %4331 = vmatpush1.bf16.msra.mxu0 0
    %4332 = vmatprep.mubr.bf16.mxu0 0
    %4333 = vmatmul.mubr.bf16.gmra.mrb[0].mxu0 %v4277
    %v4334 = vpop.f32.mrb[0].mxu0
    %v4335 = vadd.f32 %v4250, %v4334
    %v4336 = vpop.f32.mrb[0].mxu0
    %v4337 = vpop.f32.mrb[0].mxu0
    %v4338 = vadd.f32 %v4250, %v4337
    %v4339 = vpop.f32.mrb[0].mxu0
    %4340 = vmatprep.mubr.bf16.mxu0 0
    %4341 = vmatmul.mubr.bf16.gmra.mrb[0].mxu0 %v4280
    %v4342 = vpop.f32.mrb[0].mxu0
    %v4343 = vadd.f32 %v4250, %v4342
    %v4344 = vpop.f32.mrb[0].mxu0
    %v4345 = vpop.f32.mrb[0].mxu0
    %v4346 = vadd.f32 %v4250, %v4345
    %v4347 = vpop.f32.mrb[0].mxu0
    %4348 = vmatprep.mubr.bf16.mxu0 0
    %4349 = vmatmul.mubr.bf16.gmra.mrb[0].mxu0 %v4283
    %v4350 = vpop.f32.mrb[0].mxu0
    %v4351 = vadd.f32 %v4250, %v4350
    %v4352 = vpop.f32.mrb[0].mxu0
    %v4353 = vpop.f32.mrb[0].mxu0
    %v4354 = vadd.f32 %v4250, %v4353
    %v4355 = vpop.f32.mrb[0].mxu0
    %4356 = vmatprep.mubr.bf16.mxu0 0
    %4357 = vmatmul.mubr.bf16.gmra.mrb[0].mxu0 %v4286
    %v4358 = vpop.f32.mrb[0].mxu0
    %v4359 = vadd.f32 %v4250, %v4358
    %v4360 = vpop.f32.mrb[0].mxu0
    %v4361 = vpop.f32.mrb[0].mxu0
    %v4362 = vadd.f32 %v4250, %v4361
    %v4363 = vpop.f32.mrb[0].mxu0
    %4364 = vmatprep.mubr.bf16.mxu0 0
    %4365 = vmatmul.mubr.bf16.gmra.mrb[0].mxu0 %v4289
    %v4366 = vpop.f32.mrb[0].mxu0
    %v4367 = vadd.f32 %v4250, %v4366
    %v4368 = vpop.f32.mrb[0].mxu0
    %v4369 = vpop.f32.mrb[0].mxu0
    %v4370 = vadd.f32 %v4250, %v4369
    %v4371 = vpop.f32.mrb[0].mxu0
    %4372 = vmatprep.mubr.bf16.mxu0 0
    %4373 = vmatmul.mubr.bf16.gmra.mrb[0].mxu0 %v4292
    %v4374 = vpop.f32.mrb[0].mxu0
    %v4375 = vadd.f32 %v4250, %v4374
    %v4376 = vpop.f32.mrb[0].mxu0
    %v4377 = vpop.f32.mrb[0].mxu0
    %v4378 = vadd.f32 %v4250, %v4377
    %v4379 = vpop.f32.mrb[0].mxu0
    %4380 = vmatprep.mubr.bf16.mxu0 0
    %4381 = vmatmul.mubr.bf16.gmra.mrb[0].mxu0 %v4295
    %v4382 = vpop.f32.mrb[0].mxu0
    %v4383 = vadd.f32 %v4250, %v4382
    %v4384 = vpop.f32.mrb[0].mxu0
    %v4385 = vpop.f32.mrb[0].mxu0
    %v4386 = vadd.f32 %v4250, %v4385
    %v4387 = vpop.f32.mrb[0].mxu0
    %4388 = vmatprep.mubr.bf16.mxu0 0
    %4389 = vmatmul.mubr.bf16.gmra.mrb[0].mxu0 %v4298
    %v4390 = vpop.f32.mrb[0].mxu0
    %v4391 = vadd.f32 %v4250, %v4390
    %v4392 = vpop.f32.mrb[0].mxu0
    %v4393 = vpop.f32.mrb[0].mxu0
    %v4394 = vadd.f32 %v4250, %v4393
    %v4395 = vpop.f32.mrb[0].mxu0
    %4396 = vdwg.mxu0
    %4397 = vmatprep.subr.bf16.mxu0 0
    %4398 = vmatpush1.bf16.msra.mxu0 %v4233
    %4399 = vmatprep.subr.bf16.mxu0 0
    %4400 = vmatpush1.bf16.msra.mxu0 %v4234
    %4401 = vmatprep.subr.bf16.mxu0 0
    %4402 = vmatpush1.bf16.msra.mxu0 0
    %4403 = vmatprep.subr.bf16.mxu0 0
    %4404 = vmatpush1.bf16.msra.mxu0 0
    %4405 = vmatprep.subr.bf16.mxu0 0
    %4406 = vmatpush1.bf16.msra.mxu0 0
    %4407 = vmatprep.subr.bf16.mxu0 0
    %4408 = vmatpush1.bf16.msra.mxu0 0
    %4409 = vmatprep.subr.bf16.mxu0 0
    %4410 = vmatpush1.bf16.msra.mxu0 0
    %4411 = vmatprep.subr.bf16.mxu0 0
    %4412 = vmatpush1.bf16.msra.mxu0 0
    %4413 = vmatprep.subr.bf16.mxu0 0
    %4414 = vmatpush1.bf16.msra.mxu0 0
    %4415 = vmatprep.subr.bf16.mxu0 0
    %4416 = vmatpush1.bf16.msra.mxu0 0
    %4417 = vmatprep.subr.bf16.mxu0 0
    %4418 = vmatpush1.bf16.msra.mxu0 0
    %4419 = vmatprep.subr.bf16.mxu0 0
    %4420 = vmatpush1.bf16.msra.mxu0 0
    %4421 = vmatprep.subr.bf16.mxu0 0
    %4422 = vmatpush1.bf16.msra.mxu0 0
    %4423 = vmatprep.subr.bf16.mxu0 0
    %4424 = vmatpush1.bf16.msra.mxu0 0
    %4425 = vmatprep.subr.bf16.mxu0 0
    %4426 = vmatpush1.bf16.msra.mxu0 0
    %4427 = vmatprep.subr.bf16.mxu0 0
    %4428 = vmatpush1.bf16.msra.mxu0 0
    %4429 = vmatprep.mubr.bf16.mxu0 0
    %4430 = vmatmul.mubr.bf16.gmra.mrb[0].mxu0 %v2391
    %v4431 = vpop.f32.mrb[0].mxu0
    %v4432 = vadd.f32 %v4335, %v4431
    %v4433 = vpop.f32.mrb[0].mxu0
    %v4434 = vpop.f32.mrb[0].mxu0
    %v4435 = vadd.f32 %v4338, %v4434
    %v4436 = vpop.f32.mrb[0].mxu0
    %4437 = vmatprep.mubr.bf16.mxu0 0
    %4438 = vmatmul.mubr.bf16.gmra.mrb[0].mxu0 %v2394
    %v4439 = vpop.f32.mrb[0].mxu0
    %v4440 = vadd.f32 %v4343, %v4439
    %v4441 = vpop.f32.mrb[0].mxu0
    %v4442 = vpop.f32.mrb[0].mxu0
    %v4443 = vadd.f32 %v4346, %v4442
    %v4444 = vpop.f32.mrb[0].mxu0
    %4445 = vmatprep.mubr.bf16.mxu0 0
    %4446 = vmatmul.mubr.bf16.gmra.mrb[0].mxu0 %v2397
    %v4447 = vpop.f32.mrb[0].mxu0
    %v4448 = vadd.f32 %v4351, %v4447
    %v4449 = vpop.f32.mrb[0].mxu0
    %v4450 = vpop.f32.mrb[0].mxu0
    %v4451 = vadd.f32 %v4354, %v4450
    %v4452 = vpop.f32.mrb[0].mxu0
    %4453 = vmatprep.mubr.bf16.mxu0 0
    %4454 = vmatmul.mubr.bf16.gmra.mrb[0].mxu0 %v2400
    %v4455 = vpop.f32.mrb[0].mxu0
    %v4456 = vadd.f32 %v4359, %v4455
    %v4457 = vpop.f32.mrb[0].mxu0
    %v4458 = vpop.f32.mrb[0].mxu0
    %v4459 = vadd.f32 %v4362, %v4458
    %v4460 = vpop.f32.mrb[0].mxu0
    %4461 = vmatprep.mubr.bf16.mxu0 0
    %4462 = vmatmul.mubr.bf16.gmra.mrb[0].mxu0 %v2403
    %v4463 = vpop.f32.mrb[0].mxu0
    %v4464 = vadd.f32 %v4367, %v4463
    %v4465 = vpop.f32.mrb[0].mxu0
    %v4466 = vpop.f32.mrb[0].mxu0
    %v4467 = vadd.f32 %v4370, %v4466
    %v4468 = vpop.f32.mrb[0].mxu0
    %4469 = vmatprep.mubr.bf16.mxu0 0
    %4470 = vmatmul.mubr.bf16.gmra.mrb[0].mxu0 %v2406
    %v4471 = vpop.f32.mrb[0].mxu0
    %v4472 = vadd.f32 %v4375, %v4471
    %v4473 = vpop.f32.mrb[0].mxu0
    %v4474 = vpop.f32.mrb[0].mxu0
    %v4475 = vadd.f32 %v4378, %v4474
    %v4476 = vpop.f32.mrb[0].mxu0
    %4477 = vmatprep.mubr.bf16.mxu0 0
    %4478 = vmatmul.mubr.bf16.gmra.mrb[0].mxu0 %v2409
    %v4479 = vpop.f32.mrb[0].mxu0
    %v4480 = vadd.f32 %v4383, %v4479
    %v4481 = vpop.f32.mrb[0].mxu0
    %v4482 = vpop.f32.mrb[0].mxu0
    %v4483 = vadd.f32 %v4386, %v4482
    %v4484 = vpop.f32.mrb[0].mxu0
    %4485 = vmatprep.mubr.bf16.mxu0 0
    %4486 = vmatmul.mubr.bf16.gmra.mrb[0].mxu0 %v2412
    %v4487 = vpop.f32.mrb[0].mxu0
    %v4488 = vadd.f32 %v4391, %v4487
    %v4489 = vpop.f32.mrb[0].mxu0
    %v4490 = vpop.f32.mrb[0].mxu0
    %v4491 = vadd.f32 %v4394, %v4490
    %v4492 = vpop.f32.mrb[0].mxu0
    %4493 = vdwg.mxu0
    %v4494 = vld [vmem:[%s8] sm:$0xff]
    %v4495 = vld [vmem:[%s8 + $0x8] sm:$0xff]
    %v4496 = vld [vmem:[%s8 + $0x10] sm:$0xff]
    %v4497 = vld [vmem:[%s8 + $0x18] sm:$0xff]
    %v4498 = vld [vmem:[%s8 + $0x20] sm:$0xff]
    %v4499 = vld [vmem:[%s8 + $0x28] sm:$0xff]
    %v4500 = vld [vmem:[%s8 + $0x30] sm:$0xff]
    %v4501 = vld [vmem:[%s8 + $0x38] sm:$0xff]
    %v4502 = vld [vmem:[%s9] sm:$0x1]
    %v4504 = vlaneseq
    %v4505 = vshrl.u32 %v4504, 7
    %v4506 = vsub.s32 0, %v4505
    %v4507 = vrot.slane %v4502, %v4506
    %v4510 = vsel %vm1032, %v4432, 0
    %v4513 = vsel %vm1032, %v4435, 0
    %v4516 = vsel %vm1032, %v4440, 0
    %v4519 = vsel %vm1032, %v4443, 0
    %v4522 = vsel %vm1032, %v4448, 0
    %v4525 = vsel %vm1032, %v4451, 0
    %v4528 = vsel %vm1032, %v4456, 0
    %v4531 = vsel %vm1032, %v4459, 0
    %v4534 = vsel %vm1032, %v4464, 0
    %v4537 = vsel %vm1032, %v4467, 0
    %v4540 = vsel %vm1032, %v4472, 0
    %v4543 = vsel %vm1032, %v4475, 0
    %v4546 = vsel %vm1032, %v4480, 0
    %v4549 = vsel %vm1032, %v4483, 0
    %v4552 = vsel %vm1032, %v4488, 0
    %v4555 = vsel %vm1032, %v4491, 0
    %4557 = vmatprep.subr.mxu0 0.0
    %4558 = vmatpush1.msra.mxu0 %v4494
    %4559 = vmatprep.subr.mxu0 0.0
    %4560 = vmatpush1.msra.mxu0 %v4495
    %4561 = vmatprep.subr.mxu0 0.0
    %4562 = vmatpush1.msra.mxu0 %v4496
    %4563 = vmatprep.subr.mxu0 0.0
    %4564 = vmatpush1.msra.mxu0 %v4497
    %4565 = vmatprep.subr.mxu0 0.0
    %4566 = vmatpush1.msra.mxu0 %v4498
    %4567 = vmatprep.subr.mxu0 0.0
    %4568 = vmatpush1.msra.mxu0 %v4499
    %4569 = vmatprep.subr.mxu0 0.0
    %4570 = vmatpush1.msra.mxu0 %v4500
    %4571 = vmatprep.subr.mxu0 0.0
    %4572 = vmatpush1.msra.mxu0 %v4501
    %4573 = vmatprep.subr.mxu0 0.0
    %4574 = vmatpush1.msra.mxu0 0.0
    %4575 = vmatprep.subr.mxu0 0.0
    %4576 = vmatpush1.msra.mxu0 0.0
    %4577 = vmatprep.subr.mxu0 0.0
    %4578 = vmatpush1.msra.mxu0 0.0
    %4579 = vmatprep.subr.mxu0 0.0
    %4580 = vmatpush1.msra.mxu0 0.0
    %4581 = vmatprep.subr.mxu0 0.0
    %4582 = vmatpush1.msra.mxu0 0.0
    %4583 = vmatprep.subr.mxu0 0.0
    %4584 = vmatpush1.msra.mxu0 0.0
    %4585 = vmatprep.subr.mxu0 0.0
    %4586 = vmatpush1.msra.mxu0 0.0
    %4587 = vmatprep.subr.mxu0 0.0
    %4588 = vmatpush1.msra.mxu0 0.0
    %4589 = vmatprep.subr.mxu0 0.0
    %4590 = vmatpush1.msra.mxu0 0.0
    %4591 = vmatprep.subr.mxu0 0.0
    %4592 = vmatpush1.msra.mxu0 0.0
    %4593 = vmatprep.subr.mxu0 0.0
    %4594 = vmatpush1.msra.mxu0 0.0
    %4595 = vmatprep.subr.mxu0 0.0
    %4596 = vmatpush1.msra.mxu0 0.0
    %4597 = vmatprep.subr.mxu0 0.0
    %4598 = vmatpush1.msra.mxu0 0.0
    %4599 = vmatprep.subr.mxu0 0.0
    %4600 = vmatpush1.msra.mxu0 0.0
    %4601 = vmatprep.subr.mxu0 0.0
    %4602 = vmatpush1.msra.mxu0 0.0
    %4603 = vmatprep.subr.mxu0 0.0
    %4604 = vmatpush1.msra.mxu0 0.0
    %4605 = vmatprep.subr.mxu0 0.0
    %4606 = vmatpush1.msra.mxu0 0.0
    %4607 = vmatprep.subr.mxu0 0.0
    %4608 = vmatpush1.msra.mxu0 0.0
    %4609 = vmatprep.subr.mxu0 0.0
    %4610 = vmatpush1.msra.mxu0 0.0
    %4611 = vmatprep.subr.mxu0 0.0
    %4612 = vmatpush1.msra.mxu0 0.0
    %4613 = vmatprep.subr.mxu0 0.0
    %4614 = vmatpush1.msra.mxu0 0.0
    %4615 = vmatprep.subr.mxu0 0.0
    %4616 = vmatpush1.msra.mxu0 0.0
    %4617 = vmatprep.subr.mxu0 0.0
    %4618 = vmatpush1.msra.mxu0 0.0
    %4619 = vmatprep.subr.mxu0 0.0
    %4620 = vmatpush1.msra.mxu0 0.0
    %4621 = vmatprep.mubr.f32.mxu0 0.0
    %4622 = vmatmul.mubr.f32.gmra.mrb[0].mxu0 %v4510
    %v4623 = vpop.f32.mrb[0].mxu0
    %v4624 = vadd.f32 %v4507, %v4623
    %v4625 = vpop.f32.mrb[0].mxu0
    %4626 = vmatprep.mubr.f32.mxu0 0.0
    %4627 = vmatmul.mubr.f32.gmra.mrb[0].mxu0 %v4513
    %v4628 = vpop.f32.mrb[0].mxu0
    %v4629 = vadd.f32 %v4507, %v4628
    %v4630 = vpop.f32.mrb[0].mxu0
    %4631 = vmatprep.mubr.f32.mxu0 0.0
    %4632 = vmatmul.mubr.f32.gmra.mrb[0].mxu0 %v4516
    %v4633 = vpop.f32.mrb[0].mxu0
    %v4634 = vadd.f32 %v4507, %v4633
    %v4635 = vpop.f32.mrb[0].mxu0
    %4636 = vmatprep.mubr.f32.mxu0 0.0
    %4637 = vmatmul.mubr.f32.gmra.mrb[0].mxu0 %v4519
    %v4638 = vpop.f32.mrb[0].mxu0
    %v4639 = vadd.f32 %v4507, %v4638
    %v4640 = vpop.f32.mrb[0].mxu0
    %4641 = vmatprep.mubr.f32.mxu0 0.0
    %4642 = vmatmul.mubr.f32.gmra.mrb[0].mxu0 %v4522
    %v4643 = vpop.f32.mrb[0].mxu0
    %v4644 = vadd.f32 %v4507, %v4643
    %v4645 = vpop.f32.mrb[0].mxu0
    %4646 = vmatprep.mubr.f32.mxu0 0.0
    %4647 = vmatmul.mubr.f32.gmra.mrb[0].mxu0 %v4525
    %v4648 = vpop.f32.mrb[0].mxu0
    %v4649 = vadd.f32 %v4507, %v4648
    %v4650 = vpop.f32.mrb[0].mxu0
    %4651 = vmatprep.mubr.f32.mxu0 0.0
    %4652 = vmatmul.mubr.f32.gmra.mrb[0].mxu0 %v4528
    %v4653 = vpop.f32.mrb[0].mxu0
    %v4654 = vadd.f32 %v4507, %v4653
    %v4655 = vpop.f32.mrb[0].mxu0
    %4656 = vmatprep.mubr.f32.mxu0 0.0
    %4657 = vmatmul.mubr.f32.gmra.mrb[0].mxu0 %v4531
    %v4658 = vpop.f32.mrb[0].mxu0
    %v4659 = vadd.f32 %v4507, %v4658
    %v4660 = vpop.f32.mrb[0].mxu0
    %4661 = vmatprep.mubr.f32.mxu0 0.0
    %4662 = vmatmul.mubr.f32.gmra.mrb[0].mxu0 %v4534
    %v4663 = vpop.f32.mrb[0].mxu0
    %v4664 = vadd.f32 %v4507, %v4663
    %v4665 = vpop.f32.mrb[0].mxu0
    %4666 = vmatprep.mubr.f32.mxu0 0.0
    %4667 = vmatmul.mubr.f32.gmra.mrb[0].mxu0 %v4537
    %v4668 = vpop.f32.mrb[0].mxu0
    %v4669 = vadd.f32 %v4507, %v4668
    %v4670 = vpop.f32.mrb[0].mxu0
    %4671 = vmatprep.mubr.f32.mxu0 0.0
    %4672 = vmatmul.mubr.f32.gmra.mrb[0].mxu0 %v4540
    %v4673 = vpop.f32.mrb[0].mxu0
    %v4674 = vadd.f32 %v4507, %v4673
    %v4675 = vpop.f32.mrb[0].mxu0
    %4676 = vmatprep.mubr.f32.mxu0 0.0
    %4677 = vmatmul.mubr.f32.gmra.mrb[0].mxu0 %v4543
    %v4678 = vpop.f32.mrb[0].mxu0
    %v4679 = vadd.f32 %v4507, %v4678
    %v4680 = vpop.f32.mrb[0].mxu0
    %4681 = vmatprep.mubr.f32.mxu0 0.0
    %4682 = vmatmul.mubr.f32.gmra.mrb[0].mxu0 %v4546
    %v4683 = vpop.f32.mrb[0].mxu0
    %v4684 = vadd.f32 %v4507, %v4683
    %v4685 = vpop.f32.mrb[0].mxu0
    %4686 = vmatprep.mubr.f32.mxu0 0.0
    %4687 = vmatmul.mubr.f32.gmra.mrb[0].mxu0 %v4549
    %v4688 = vpop.f32.mrb[0].mxu0
    %v4689 = vadd.f32 %v4507, %v4688
    %v4690 = vpop.f32.mrb[0].mxu0
    %4691 = vmatprep.mubr.f32.mxu0 0.0
    %4692 = vmatmul.mubr.f32.gmra.mrb[0].mxu0 %v4552
    %v4693 = vpop.f32.mrb[0].mxu0
    %v4694 = vadd.f32 %v4507, %v4693
    %v4695 = vpop.f32.mrb[0].mxu0
    %4696 = vmatprep.mubr.f32.mxu0 0.0
    %4697 = vmatmul.mubr.f32.gmra.mrb[0].mxu0 %v4555
    %v4698 = vpop.f32.mrb[0].mxu0
    %v4699 = vadd.f32 %v4507, %v4698
    %v4700 = vpop.f32.mrb[0].mxu0
    %4701 = vdwg.mxu0
    %vm4702 = vcmask 15360
    %4703 = vst.msk [vmem:[%s10] sm:$0xff] %vm4702, %v4624
    %4704 = vst.msk [vmem:[%s10 + $0x8] sm:$0xff] %vm4702, %v4629
    %4705 = vst.msk [vmem:[%s10 + $0x10] sm:$0xff] %vm4702, %v4634
    %4706 = vst.msk [vmem:[%s10 + $0x18] sm:$0xff] %vm4702, %v4639
    %4707 = vst.msk [vmem:[%s10 + $0x20] sm:$0xff] %vm4702, %v4644
    %4708 = vst.msk [vmem:[%s10 + $0x28] sm:$0xff] %vm4702, %v4649
    %4709 = vst.msk [vmem:[%s10 + $0x30] sm:$0xff] %vm4702, %v4654
    %4710 = vst.msk [vmem:[%s10 + $0x38] sm:$0xff] %vm4702, %v4659
    %4711 = vst.msk [vmem:[%s10 + $0x40] sm:$0xff] %vm4702, %v4664
    %4712 = vst.msk [vmem:[%s10 + $0x48] sm:$0xff] %vm4702, %v4669
    %4713 = vst.msk [vmem:[%s10 + $0x50] sm:$0xff] %vm4702, %v4674
    %4714 = vst.msk [vmem:[%s10 + $0x58] sm:$0xff] %vm4702, %v4679
    %4715 = vst.msk [vmem:[%s10 + $0x60] sm:$0xff] %vm4702, %v4684
    %4716 = vst.msk [vmem:[%s10 + $0x68] sm:$0xff] %vm4702, %v4689
    %4717 = vst.msk [vmem:[%s10 + $0x70] sm:$0xff] %vm4702, %v4694
    %4718 = vst.msk [vmem:[%s10 + $0x78] sm:$0xff] %vm4702, %v4699
    // Predicated region
    $region46: #{tpu_custom_call.1} parent=1 // pred_check
      _
    $region47: #{tpu_custom_call.1} parent=1 // pred_check_branch
      %4720 = sbr.rel (0) target = $region49
    $region48: #{tpu_custom_call.1} parent=1 // pred_region
      _
    $region49: #{tpu_custom_call.1} parent=1 // pred_fallthru
      _
    // Predicated region
    $region50: #{tpu_custom_call.1} parent=1 // pred_check
      _
    $region51: #{tpu_custom_call.1} parent=1 // pred_check_branch
      %4722 = sbr.rel (0) target = $region53
    $region52: #{tpu_custom_call.1} parent=1 // pred_region
      _
    $region53: #{tpu_custom_call.1} parent=1 // pred_fallthru
      _
    %4723 = vsyncpa [#allocation3], 1

</llo_original>
